<compile_context>
chip_gen: v7x
topology: tpu7x:2x2x1
jax: 0.10.0
libtpu: 0.0.40
codegen_flags: <defaults>
</compile_context>

<pallas_src>
import numpy as np
import jax
import jax.numpy as jnp
from jax.experimental import pallas as pl
from jax.experimental.pallas import tpu as pltpu


# ---------------------------------------------------------------------------
# Kernel: one batch block, everything fused.
# ---------------------------------------------------------------------------
def senet_kernel(x_ref, cw_ref, cb_ref, w1_ref, b1_ref, w2_ref, b2_ref,
                 wf_ref, bf_ref, out_ref):
    """x_ref  : (block_b, Cin*H*W) f32 raw flattened images
       cw_ref : (Cin*H*W, C)       f32 pooled-conv effective weight
       out_ref: (block_b, 128)     f32 lane-dense logits slab."""
    # Conv2d + AdaptiveAvgPool2d(1) collapsed into one matmul (exact; see
    # module comment (2)).
    pooled = jnp.dot(x_ref[...], cw_ref[...],
                     preferred_element_type=jnp.float32) + cb_ref[...]

    # SE gate: Linear -> ReLU -> Linear -> Sigmoid (f32 VPU/EUP work).
    h = jnp.dot(pooled, w1_ref[...],
                preferred_element_type=jnp.float32) + b1_ref[...]
    h = jnp.maximum(h, 0.0)
    gate = jax.nn.sigmoid(
        jnp.dot(h, w2_ref[...], preferred_element_type=jnp.float32) + b2_ref[...])

    # SE scaling + second global pool collapsed: mean_hw(conv*gate) == pooled*gate.
    pooled = pooled * gate

    # Final classifier; lane-dense store (num_classes padded to 128 lanes).
    out_ref[...] = jnp.dot(pooled, wf_ref[...],
                           preferred_element_type=jnp.float32) + bf_ref[...]


# ---------------------------------------------------------------------------
# Wrapper-side weight folding (pure preprocessing of the conv weight).
# ---------------------------------------------------------------------------
def _axis_fold(n_pad, k, stride, n_out):
    """A[i, ki] = 1 iff an output position oh exists with i == ki + stride*oh."""
    i = np.arange(n_pad)[:, None]
    ki = np.arange(k)[None, :]
    d = i - ki
    valid = (d >= 0) & (d % stride == 0) & (d // stride < n_out)
    return valid.astype(np.float32)


def pooled_conv_weight(conv_w, H, W, stride, pad):
    """Fold Conv2d(k, stride, pad) followed by a global average pool into one
    (Cin*H*W, C) matrix.  Exact: mean over output pixels commutes with the
    convolution; padded input pixels are zero so only interior taps are kept."""
    C, Cin, KH, KW = conv_w.shape
    Ho = (H + 2 * pad - KH) // stride + 1
    Wo = (W + 2 * pad - KW) // stride + 1
    Ah = jnp.asarray(_axis_fold(H + 2 * pad, KH, stride, Ho))   # (Hp, KH)
    Aw = jnp.asarray(_axis_fold(W + 2 * pad, KW, stride, Wo))   # (Wp, KW)
    w_eff = jnp.einsum('hk,wl,ockl->ochw', Ah, Aw, conv_w,
                       precision=jax.lax.Precision.HIGHEST)     # (C,Cin,Hp,Wp)
    w_eff = w_eff[:, :, pad:pad + H, pad:pad + W] / float(Ho * Wo)
    return w_eff.reshape(C, Cin * H * W).T                      # (Cin*H*W, C)


# ---------------------------------------------------------------------------
# Block sizing / VMEM budgeting.
# ---------------------------------------------------------------------------
def _round_up(x, m):
    return -(-x // m) * m


def _vmem_budget_bytes():
    # ~40% of per-core VMEM: ~25 MiB on v7x (64 MiB), ~51 MiB on v5e/v6e (128 MiB).
    try:
        cap = int(pltpu.get_tpu_info().vmem_capacity_bytes)
        if cap > 0:
            return int(cap * 0.4)
    except Exception:
        pass
    return 24 << 20  # conservative fallback


def _pick_block_b(B, d_in, c, r, nc_pad, vmem_budget, target_block=1024):
    """One image = one MXU row, so block_b is directly the per-step DMA
    (block_b * d_in * 4 B) and the MXU M.  Footprint accounts for lane/sublane
    padding of the f32 tiles and for the pipeline's double buffers."""
    def footprint(bb):
        bb8 = _round_up(bb, 8)
        d_in_l = _round_up(d_in, 128)
        x_bytes = 2 * bb8 * d_in_l * 4                 # double-buffered input block
        out_bytes = 2 * bb8 * nc_pad * 4               # double-buffered output block
        interm = 4 * bb8 * 128 * 4                     # pooled/h/gate/out, lane-padded
        w_bytes = 2 * 4 * (d_in_l * c + c * nc_pad
                           + 2 * c * _round_up(r, 128) # fc1/fc2, lane-padded
                           + 4 * 8 * 128)              # biases (sublane/lane padded)
        return x_bytes + out_bytes + interm + w_bytes

    bb = min(target_block, B)
    if B >= 16:
        bb = min(bb, -(-B // 2))       # keep >= 2 grid steps for v7x's two TCs
    if bb < B:
        bb = _round_up(bb, 8)          # split batch -> block_b must be 8-aligned
    while bb > 8 and footprint(bb) > vmem_budget:
        bb = max(8, _round_up(bb // 2, 8))
    return bb


# ---------------------------------------------------------------------------
# Forward wrapper.
# ---------------------------------------------------------------------------
def senet_forward(x, params, num_classes=10, block_b=None):
    B, Cin, H, W = x.shape
    C = params['conv_w'].shape[0]                   # 64
    R = params['fc1_w'].shape[0]                    # 64 // 16 = 4
    d_in = Cin * H * W
    nc_pad = max(128, _round_up(num_classes, 128))  # lane-dense output slab

    vmem_budget = _vmem_budget_bytes()
    if block_b is None:
        block_b = _pick_block_b(B, d_in, C, R, nc_pad, vmem_budget)
    n_blocks = -(-B // block_b)
    Bpad = n_blocks * block_b

    x_flat = x.reshape(B, d_in).astype(jnp.float32)
    if Bpad != B:
        x_flat = jnp.pad(x_flat, ((0, Bpad - B), (0, 0)))

    conv_w_eff = pooled_conv_weight(params['conv_w'], H, W, stride=2, pad=3)
    conv_b = params['conv_b'].reshape(1, C).astype(jnp.float32)
    fc1_w = params['fc1_w'].T.astype(jnp.float32)                     # (C, R)
    fc1_b = params['fc1_b'].reshape(1, R).astype(jnp.float32)
    fc2_w = params['fc2_w'].T.astype(jnp.float32)                     # (R, C)
    fc2_b = params['fc2_b'].reshape(1, C).astype(jnp.float32)
    fc_w = jnp.zeros((C, nc_pad), jnp.float32).at[:, :num_classes].set(
        params['fc_w'].T.astype(jnp.float32))                         # (C, 128)
    fc_b = jnp.zeros((1, nc_pad), jnp.float32).at[:, :num_classes].set(
        params['fc_b'].reshape(1, num_classes).astype(jnp.float32))

    out = pl.pallas_call(
        senet_kernel,
        out_shape=jax.ShapeDtypeStruct((Bpad, nc_pad), jnp.float32),
        grid_spec=pltpu.PrefetchScalarGridSpec(
            num_scalar_prefetch=0,
            grid=(n_blocks,),
            in_specs=[
                pl.BlockSpec((block_b, d_in), lambda b: (b, 0)),
                # Weights / biases: constant index maps -> DMA'd only once.
                pl.BlockSpec((d_in, C), lambda b: (0, 0)),
                pl.BlockSpec((1, C), lambda b: (0, 0)),
                pl.BlockSpec((C, R), lambda b: (0, 0)),
                pl.BlockSpec((1, R), lambda b: (0, 0)),
                pl.BlockSpec((R, C), lambda b: (0, 0)),
                pl.BlockSpec((1, C), lambda b: (0, 0)),
                pl.BlockSpec((C, nc_pad), lambda b: (0, 0)),
                pl.BlockSpec((1, nc_pad), lambda b: (0, 0)),
            ],
            out_specs=pl.BlockSpec((block_b, nc_pad), lambda b: (b, 0)),
        ),
        compiler_params=pltpu.CompilerParams(
            dimension_semantics=("parallel",),
            # Explicit scoped-VMEM limit (25% headroom above the budget the
            # picker used); avoids v5e's 16 MiB default, safe on v7x's 64 MiB.
            vmem_limit_bytes=int(vmem_budget * 1.25),
        ),
    )(x_flat, conv_w_eff, conv_b, fc1_w, fc1_b, fc2_w, fc2_b, fc_w, fc_b)

    return out[:B, :num_classes]


# ---------------------------------------------------------------------------
# Pure-JAX f32 reference mirroring the PyTorch forward (NCHW).
# ---------------------------------------------------------------------------
def ref_forward(x, p):
    conv = jax.lax.conv_general_dilated(
        x, p['conv_w'], window_strides=(2, 2), padding=((3, 3), (3, 3)),
        dimension_numbers=('NCHW', 'OIHW', 'NCHW'),
        precision=jax.lax.Precision.HIGHEST)
    conv = conv + p['conv_b'][None, :, None, None]
    y = conv.mean(axis=(2, 3))                                   # (B, C)
    h = jnp.maximum(y @ p['fc1_w'].T + p['fc1_b'], 0.0)
    g = jax.nn.sigmoid(h @ p['fc2_w'].T + p['fc2_b'])
    scaled = conv * g[:, :, None, None]
    pooled = scaled.mean(axis=(2, 3))
    return pooled @ p['fc_w'].T + p['fc_b']


def init_params(key, num_classes=10):
    ks = jax.random.split(key, 8)
    C, Cin, K, R = 64, 3, 7, 64 // 16
    return {
        'conv_w': 0.05 * jax.random.normal(ks[0], (C, Cin, K, K), jnp.float32),
        'conv_b': 0.01 * jax.random.normal(ks[1], (C,), jnp.float32),
        'fc1_w': 0.10 * jax.random.normal(ks[2], (R, C), jnp.float32),
        'fc1_b': 0.01 * jax.random.normal(ks[3], (R,), jnp.float32),
        'fc2_w': 0.10 * jax.random.normal(ks[4], (C, R), jnp.float32),
        'fc2_b': 0.01 * jax.random.normal(ks[5], (C,), jnp.float32),
        'fc_w': 0.10 * jax.random.normal(ks[6], (num_classes, C), jnp.float32),
        'fc_b': 0.01 * jax.random.normal(ks[7], (num_classes,), jnp.float32),
    }


if __name__ == "__main__":
    key = jax.random.PRNGKey(0)
    kx, kp = jax.random.split(key)
    x = jax.random.normal(kx, (2, 3, 16, 16), jnp.float32)   # NCHW, like PyTorch
    params = init_params(kp, num_classes=10)

    # Run reference / wrapper matmuls at full f32 precision so the comparison
    # is against an exact f32 baseline.
    with jax.default_matmul_precision('highest'):
        out = senet_forward(x, params, num_classes=10)
        out = jax.block_until_ready(out)
        ref = ref_forward(x, params)

    assert out.shape == (2, 10)
    err = float(jnp.max(jnp.abs(out - ref)))
    # Kernel is f32 end-to-end; expected error ~1e-5 (summation reordering).
    # The slack only covers MXU-internal accumulation-order differences.
    assert err < 2e-2, f"max err {err}"
    print("KERNEL_OK")
</pallas_src>

<mosaic_0001>
module attributes {stable_mosaic.version = 11 : i64} {
  func.func @senet_kernel(%arg0: i32, %arg1: memref<2x768xf32, #tpu.memory_space<vmem>>, %arg2: memref<768x64xf32, #tpu.memory_space<vmem>>, %arg3: memref<1x64xf32, #tpu.memory_space<vmem>>, %arg4: memref<64x4xf32, #tpu.memory_space<vmem>>, %arg5: memref<1x4xf32, #tpu.memory_space<vmem>>, %arg6: memref<4x64xf32, #tpu.memory_space<vmem>>, %arg7: memref<1x64xf32, #tpu.memory_space<vmem>>, %arg8: memref<64x128xf32, #tpu.memory_space<vmem>>, %arg9: memref<1x128xf32, #tpu.memory_space<vmem>>, %arg10: memref<2x128xf32, #tpu.memory_space<vmem>>) attributes {dimension_semantics = [#tpu.dimension_semantics<parallel>], iteration_bounds = array<i64: 1>, scalar_prefetch = 0 : i64, scratch_operands = 0 : i64, tpu.core_type = #tpu.core_type<tc>, window_params = [{transform_indices = @transform_0, window_bounds = array<i64: 2, 768>}, {pipeline_mode = #tpu.pipeline_mode<synchronous>, transform_indices = @transform_1, window_bounds = array<i64: 768, 64>}, {pipeline_mode = #tpu.pipeline_mode<synchronous>, transform_indices = @transform_2, window_bounds = array<i64: 1, 64>}, {pipeline_mode = #tpu.pipeline_mode<synchronous>, transform_indices = @transform_3, window_bounds = array<i64: 64, 4>}, {pipeline_mode = #tpu.pipeline_mode<synchronous>, transform_indices = @transform_4, window_bounds = array<i64: 1, 4>}, {pipeline_mode = #tpu.pipeline_mode<synchronous>, transform_indices = @transform_5, window_bounds = array<i64: 4, 64>}, {pipeline_mode = #tpu.pipeline_mode<synchronous>, transform_indices = @transform_6, window_bounds = array<i64: 1, 64>}, {pipeline_mode = #tpu.pipeline_mode<synchronous>, transform_indices = @transform_7, window_bounds = array<i64: 64, 128>}, {pipeline_mode = #tpu.pipeline_mode<synchronous>, transform_indices = @transform_8, window_bounds = array<i64: 1, 128>}, {transform_indices = @transform_9, window_bounds = array<i64: 2, 128>}]} {
    %c0 = arith.constant 0 : index
    %c0_0 = arith.constant 0 : index
    %0 = vector.load %arg1[%c0, %c0_0] : memref<2x768xf32, #tpu.memory_space<vmem>>, vector<2x768xf32>
    %c0_1 = arith.constant 0 : index
    %c0_2 = arith.constant 0 : index
    %1 = vector.load %arg2[%c0_1, %c0_2] : memref<768x64xf32, #tpu.memory_space<vmem>>, vector<768x64xf32>
    %cst = arith.constant dense<0.000000e+00> : vector<2x64xf32>
    %2 = tpu.matmul %0, %1, %cst {dimension_numbers = #tpu.dot_dimension_numbers<[1], [0], [0], [1], [0, 0, 1, 1], [], []>, precision = #tpu.contract_precision<fp32>} : vector<2x768xf32>, vector<768x64xf32>, vector<2x64xf32> -> vector<2x64xf32>
    %c0_3 = arith.constant 0 : index
    %c0_4 = arith.constant 0 : index
    %3 = vector.load %arg3[%c0_3, %c0_4] : memref<1x64xf32, #tpu.memory_space<vmem>>, vector<1x64xf32>
    %4 = vector.broadcast %3 : vector<1x64xf32> to vector<2x64xf32>
    %5 = arith.addf %2, %4 : vector<2x64xf32>
    %c0_5 = arith.constant 0 : index
    %c0_6 = arith.constant 0 : index
    %6 = vector.load %arg4[%c0_5, %c0_6] : memref<64x4xf32, #tpu.memory_space<vmem>>, vector<64x4xf32>
    %cst_7 = arith.constant dense<0.000000e+00> : vector<2x4xf32>
    %7 = tpu.matmul %5, %6, %cst_7 {dimension_numbers = #tpu.dot_dimension_numbers<[1], [0], [0], [1], [0, 0, 1, 1], [], []>, precision = #tpu.contract_precision<fp32>} : vector<2x64xf32>, vector<64x4xf32>, vector<2x4xf32> -> vector<2x4xf32>
    %c0_8 = arith.constant 0 : index
    %c0_9 = arith.constant 0 : index
    %8 = vector.load %arg5[%c0_8, %c0_9] : memref<1x4xf32, #tpu.memory_space<vmem>>, vector<1x4xf32>
    %9 = vector.broadcast %8 : vector<1x4xf32> to vector<2x4xf32>
    %10 = arith.addf %7, %9 : vector<2x4xf32>
    %cst_10 = arith.constant 0.000000e+00 : f32
    %11 = vector.broadcast %cst_10 : f32 to vector<2x4xf32>
    %12 = arith.maximumf %10, %11 : vector<2x4xf32>
    %c0_11 = arith.constant 0 : index
    %c0_12 = arith.constant 0 : index
    %13 = vector.load %arg6[%c0_11, %c0_12] : memref<4x64xf32, #tpu.memory_space<vmem>>, vector<4x64xf32>
    %cst_13 = arith.constant dense<0.000000e+00> : vector<2x64xf32>
    %14 = tpu.matmul %12, %13, %cst_13 {dimension_numbers = #tpu.dot_dimension_numbers<[1], [0], [0], [1], [0, 0, 1, 1], [], []>, precision = #tpu.contract_precision<fp32>} : vector<2x4xf32>, vector<4x64xf32>, vector<2x64xf32> -> vector<2x64xf32>
    %c0_14 = arith.constant 0 : index
    %c0_15 = arith.constant 0 : index
    %15 = vector.load %arg7[%c0_14, %c0_15] : memref<1x64xf32, #tpu.memory_space<vmem>>, vector<1x64xf32>
    %16 = vector.broadcast %15 : vector<1x64xf32> to vector<2x64xf32>
    %17 = arith.addf %14, %16 : vector<2x64xf32>
    %18 = arith.negf %17 : vector<2x64xf32>
    %19 = math.exp %18 : vector<2x64xf32>
    %cst_16 = arith.constant 1.000000e+00 : f32
    %20 = vector.broadcast %cst_16 : f32 to vector<2x64xf32>
    %21 = arith.addf %20, %19 : vector<2x64xf32>
    %22 = arith.divf %20, %21 : vector<2x64xf32>
    %23 = arith.mulf %5, %22 : vector<2x64xf32>
    %c0_17 = arith.constant 0 : index
    %c0_18 = arith.constant 0 : index
    %24 = vector.load %arg8[%c0_17, %c0_18] : memref<64x128xf32, #tpu.memory_space<vmem>>, vector<64x128xf32>
    %cst_19 = arith.constant dense<0.000000e+00> : vector<2x128xf32>
    %25 = tpu.matmul %23, %24, %cst_19 {dimension_numbers = #tpu.dot_dimension_numbers<[1], [0], [0], [1], [0, 0, 1, 1], [], []>, precision = #tpu.contract_precision<fp32>} : vector<2x64xf32>, vector<64x128xf32>, vector<2x128xf32> -> vector<2x128xf32>
    %c0_20 = arith.constant 0 : index
    %c0_21 = arith.constant 0 : index
    %26 = vector.load %arg9[%c0_20, %c0_21] : memref<1x128xf32, #tpu.memory_space<vmem>>, vector<1x128xf32>
    %27 = vector.broadcast %26 : vector<1x128xf32> to vector<2x128xf32>
    %28 = arith.addf %25, %27 : vector<2x128xf32>
    %c0_22 = arith.constant 0 : index
    %c0_23 = arith.constant 0 : index
    %29 = vector.load %arg10[%c0_22, %c0_23] : memref<2x128xf32, #tpu.memory_space<vmem>>, vector<2x128xf32>
    tpu.vector_store %arg10[%c0_22, %c0_23], %28 {strides = array<i32>} : memref<2x128xf32, #tpu.memory_space<vmem>>, vector<2x128xf32>,
    return
  }
  func.func @transform_0(%arg0: i32) -> (i32, i32) {
    %c0_i32 = arith.constant 0 : i32
    %c0_i32_0 = arith.constant 0 : i32
    return %arg0, %c0_i32 : i32, i32
  }
  func.func @transform_1(%arg0: i32) -> (i32, i32) {
    %c0_i32 = arith.constant 0 : i32
    %c0_i32_0 = arith.constant 0 : i32
    %c0_i32_1 = arith.constant 0 : i32
    return %c0_i32, %c0_i32_0 : i32, i32
  }
  func.func @transform_2(%arg0: i32) -> (i32, i32) {
    %c0_i32 = arith.constant 0 : i32
    %c0_i32_0 = arith.constant 0 : i32
    %c0_i32_1 = arith.constant 0 : i32
    return %c0_i32, %c0_i32_0 : i32, i32
  }
  func.func @transform_3(%arg0: i32) -> (i32, i32) {
    %c0_i32 = arith.constant 0 : i32
    %c0_i32_0 = arith.constant 0 : i32
    %c0_i32_1 = arith.constant 0 : i32
    return %c0_i32, %c0_i32_0 : i32, i32
  }
  func.func @transform_4(%arg0: i32) -> (i32, i32) {
    %c0_i32 = arith.constant 0 : i32
    %c0_i32_0 = arith.constant 0 : i32
    %c0_i32_1 = arith.constant 0 : i32
    return %c0_i32, %c0_i32_0 : i32, i32
  }
  func.func @transform_5(%arg0: i32) -> (i32, i32) {
    %c0_i32 = arith.constant 0 : i32
    %c0_i32_0 = arith.constant 0 : i32
    %c0_i32_1 = arith.constant 0 : i32
    return %c0_i32, %c0_i32_0 : i32, i32
  }
  func.func @transform_6(%arg0: i32) -> (i32, i32) {
    %c0_i32 = arith.constant 0 : i32
    %c0_i32_0 = arith.constant 0 : i32
    %c0_i32_1 = arith.constant 0 : i32
    return %c0_i32, %c0_i32_0 : i32, i32
  }
  func.func @transform_7(%arg0: i32) -> (i32, i32) {
    %c0_i32 = arith.constant 0 : i32
    %c0_i32_0 = arith.constant 0 : i32
    %c0_i32_1 = arith.constant 0 : i32
    return %c0_i32, %c0_i32_0 : i32, i32
  }
  func.func @transform_8(%arg0: i32) -> (i32, i32) {
    %c0_i32 = arith.constant 0 : i32
    %c0_i32_0 = arith.constant 0 : i32
    %c0_i32_1 = arith.constant 0 : i32
    return %c0_i32, %c0_i32_0 : i32, i32
  }
  func.func @transform_9(%arg0: i32) -> (i32, i32) {
    %c0_i32 = arith.constant 0 : i32
    %c0_i32_0 = arith.constant 0 : i32
    return %arg0, %c0_i32 : i32, i32
  }
}

</mosaic_0001>

<llo_original>
// kernel: tpu_custom_call.1
$region0: #{tpu_custom_call.1}
  #allocation0 [shape = 'u32[]', space=smem, size = 0x4, offset = 0x4, fixed_abs, tag = 'smem constant byte address 0x4 - core index']
  #allocation1 [shape = 'u32[144,128]{1,0:T(1,128)}', space=vmem, size = 0x12000, scoped, tag = 'internal scratch']
  %s0 = inlined_call_operand.vmem [shape: f32[2,768], index: 0, kind: input, shape index: {}]
  %s1 = inlined_call_operand.vmem [shape: f32[768,64], index: 1, kind: input, shape index: {}]
  %s2 = inlined_call_operand.vmem [shape: f32[1,64], index: 2, kind: input, shape index: {}]
  %s3 = inlined_call_operand.vmem [shape: f32[64,4], index: 3, kind: input, shape index: {}]
  %s4 = inlined_call_operand.vmem [shape: f32[1,4], index: 4, kind: input, shape index: {}]
  %s5 = inlined_call_operand.vmem [shape: f32[4,64], index: 5, kind: input, shape index: {}]
  %s6 = inlined_call_operand.vmem [shape: f32[1,64], index: 6, kind: input, shape index: {}]
  %s7 = inlined_call_operand.vmem [shape: f32[64,128], index: 7, kind: input, shape index: {}]
  %s8 = inlined_call_operand.vmem [shape: f32[1,128], index: 8, kind: input, shape index: {}]
  %s9 = inlined_call_operand.hbm [shape: f32[2,128], index: 9, kind: output, shape index: {}]
  %s10 = sld [smem:[#allocation0]]
  $region46: #{tpu_custom_call.1} parent=0
    _
  %s12 = ssub.s32 1, %s10
  %s13 = scalar_select 0, %s12, %s10
  $region1: #{tpu_custom_call.1} parent=0
    #allocation2 [shape = 'u8[1024]{0}', space=vmem, size = 0x400, scoped, tag = 'output window, operand 0, single buffered']
    #allocation3 [shape = 's32[1]{0}', space=sflag, size = 0x4, scoped, tag = 'scoped memory for tpu_custom_call.1']
    %14 = vsyncpa [#allocation3], 0
    // Predicated region
    $region2: #{tpu_custom_call.1} parent=1 // pred_check
      _
    $region3: #{tpu_custom_call.1} parent=1 // pred_check_branch
      %16 = sbr.rel (0) target = $region5
    $region4: #{tpu_custom_call.1} parent=1 // pred_region
      _
    $region5: #{tpu_custom_call.1} parent=1 // pred_fallthru
      _
    // Predicated region
    $region6: #{tpu_custom_call.1} parent=1 // pred_check
      _
    $region7: #{tpu_custom_call.1} parent=1 // pred_check_branch
      %18 = sbr.rel (0) target = $region9
    $region8: #{tpu_custom_call.1} parent=1 // pred_region
      _
    $region9: #{tpu_custom_call.1} parent=1 // pred_fallthru
      _
    // Predicated region
    $region10: #{tpu_custom_call.1} parent=1 // pred_check
      _
    $region11: #{tpu_custom_call.1} parent=1 // pred_check_branch
      %20 = sbr.rel (0) target = $region13
    $region12: #{tpu_custom_call.1} parent=1 // pred_region
      _
    $region13: #{tpu_custom_call.1} parent=1 // pred_fallthru
      _
    // Predicated region
    $region14: #{tpu_custom_call.1} parent=1 // pred_check
      _
    $region15: #{tpu_custom_call.1} parent=1 // pred_check_branch
      %22 = sbr.rel (0) target = $region17
    $region16: #{tpu_custom_call.1} parent=1 // pred_region
      _
    $region17: #{tpu_custom_call.1} parent=1 // pred_fallthru
      _
    // Predicated region
    $region18: #{tpu_custom_call.1} parent=1 // pred_check
      _
    $region19: #{tpu_custom_call.1} parent=1 // pred_check_branch
      %24 = sbr.rel (0) target = $region21
    $region20: #{tpu_custom_call.1} parent=1 // pred_region
      _
    $region21: #{tpu_custom_call.1} parent=1 // pred_fallthru
      _
    // Predicated region
    $region22: #{tpu_custom_call.1} parent=1 // pred_check
      _
    $region23: #{tpu_custom_call.1} parent=1 // pred_check_branch
      %26 = sbr.rel (0) target = $region25
    $region24: #{tpu_custom_call.1} parent=1 // pred_region
      _
    $region25: #{tpu_custom_call.1} parent=1 // pred_fallthru
      _
    // Predicated region
    $region26: #{tpu_custom_call.1} parent=1 // pred_check
      _
    $region27: #{tpu_custom_call.1} parent=1 // pred_check_branch
      %28 = sbr.rel (0) target = $region29
    $region28: #{tpu_custom_call.1} parent=1 // pred_region
      _
    $region29: #{tpu_custom_call.1} parent=1 // pred_fallthru
      _
    // Predicated region
    $region30: #{tpu_custom_call.1} parent=1 // pred_check
      _
    $region31: #{tpu_custom_call.1} parent=1 // pred_check_branch
      %30 = sbr.rel (0) target = $region33
    $region32: #{tpu_custom_call.1} parent=1 // pred_region
      _
    $region33: #{tpu_custom_call.1} parent=1 // pred_fallthru
      _
    // Predicated region
    $region34: #{tpu_custom_call.1} parent=1 // pred_check
      _
    $region35: #{tpu_custom_call.1} parent=1 // pred_check_branch
      %32 = sbr.rel (0) target = $region37
    $region36: #{tpu_custom_call.1} parent=1 // pred_region
      _
    $region37: #{tpu_custom_call.1} parent=1 // pred_fallthru
      _
    %v33 = vld [vmem:[%s0] sm:$0xff]
    %v34 = vld [vmem:[%s0 + $0x8] sm:$0xf]
    %v35 = vld [vmem:[%s1] sm:$0xff]
    %v36 = vld [vmem:[%s1 + $0x8] sm:$0xff]
    %v37 = vld [vmem:[%s1 + $0x10] sm:$0xff]
    %v38 = vld [vmem:[%s1 + $0x18] sm:$0xff]
    %v39 = vld [vmem:[%s1 + $0x20] sm:$0xff]
    %v40 = vld [vmem:[%s1 + $0x28] sm:$0xff]
    %v41 = vld [vmem:[%s1 + $0x30] sm:$0xff]
    %v42 = vld [vmem:[%s1 + $0x38] sm:$0xff]
    %v43 = vld [vmem:[%s1 + $0x40] sm:$0xff]
    %v44 = vld [vmem:[%s1 + $0x48] sm:$0xff]
    %v45 = vld [vmem:[%s1 + $0x50] sm:$0xff]
    %v46 = vld [vmem:[%s1 + $0x58] sm:$0xff]
    %v47 = vld [vmem:[%s1 + $0x60] sm:$0xff]
    %v48 = vld [vmem:[%s1 + $0x68] sm:$0xff]
    %v49 = vld [vmem:[%s1 + $0x70] sm:$0xff]
    %v50 = vld [vmem:[%s1 + $0x78] sm:$0xff]
    %v51 = vld [vmem:[%s1 + $0x80] sm:$0xff]
    %v52 = vld [vmem:[%s1 + $0x88] sm:$0xff]
    %v53 = vld [vmem:[%s1 + $0x90] sm:$0xff]
    %v54 = vld [vmem:[%s1 + $0x98] sm:$0xff]
    %v55 = vld [vmem:[%s1 + $0xa0] sm:$0xff]
    %v56 = vld [vmem:[%s1 + $0xa8] sm:$0xff]
    %v57 = vld [vmem:[%s1 + $0xb0] sm:$0xff]
    %v58 = vld [vmem:[%s1 + $0xb8] sm:$0xff]
    %v59 = vld [vmem:[%s1 + $0xc0] sm:$0xff]
    %v60 = vld [vmem:[%s1 + $0xc8] sm:$0xff]
    %v61 = vld [vmem:[%s1 + $0xd0] sm:$0xff]
    %v62 = vld [vmem:[%s1 + $0xd8] sm:$0xff]
    %v63 = vld [vmem:[%s1 + $0xe0] sm:$0xff]
    %v64 = vld [vmem:[%s1 + $0xe8] sm:$0xff]
    %v65 = vld [vmem:[%s1 + $0xf0] sm:$0xff]
    %v66 = vld [vmem:[%s1 + $0xf8] sm:$0xff]
    %v67 = vld [vmem:[%s1 + $0x100] sm:$0xff]
    %v68 = vld [vmem:[%s1 + $0x108] sm:$0xff]
    %v69 = vld [vmem:[%s1 + $0x110] sm:$0xff]
    %v70 = vld [vmem:[%s1 + $0x118] sm:$0xff]
    %v71 = vld [vmem:[%s1 + $0x120] sm:$0xff]
    %v72 = vld [vmem:[%s1 + $0x128] sm:$0xff]
    %v73 = vld [vmem:[%s1 + $0x130] sm:$0xff]
    %v74 = vld [vmem:[%s1 + $0x138] sm:$0xff]
    %v75 = vld [vmem:[%s1 + $0x140] sm:$0xff]
    %v76 = vld [vmem:[%s1 + $0x148] sm:$0xff]
    %v77 = vld [vmem:[%s1 + $0x150] sm:$0xff]
    %v78 = vld [vmem:[%s1 + $0x158] sm:$0xff]
    %v79 = vld [vmem:[%s1 + $0x160] sm:$0xff]
    %v80 = vld [vmem:[%s1 + $0x168] sm:$0xff]
    %v81 = vld [vmem:[%s1 + $0x170] sm:$0xff]
    %v82 = vld [vmem:[%s1 + $0x178] sm:$0xff]
    %v83 = vld [vmem:[%s1 + $0x180] sm:$0xff]
    %v84 = vld [vmem:[%s1 + $0x188] sm:$0xff]
    %v85 = vld [vmem:[%s1 + $0x190] sm:$0xff]
    %v86 = vld [vmem:[%s1 + $0x198] sm:$0xff]
    %v87 = vld [vmem:[%s1 + $0x1a0] sm:$0xff]
    %v88 = vld [vmem:[%s1 + $0x1a8] sm:$0xff]
    %v89 = vld [vmem:[%s1 + $0x1b0] sm:$0xff]
    %v90 = vld [vmem:[%s1 + $0x1b8] sm:$0xff]
    %v91 = vld [vmem:[%s1 + $0x1c0] sm:$0xff]
    %v92 = vld [vmem:[%s1 + $0x1c8] sm:$0xff]
    %v93 = vld [vmem:[%s1 + $0x1d0] sm:$0xff]
    %v94 = vld [vmem:[%s1 + $0x1d8] sm:$0xff]
    %v95 = vld [vmem:[%s1 + $0x1e0] sm:$0xff]
    %v96 = vld [vmem:[%s1 + $0x1e8] sm:$0xff]
    %v97 = vld [vmem:[%s1 + $0x1f0] sm:$0xff]
    %v98 = vld [vmem:[%s1 + $0x1f8] sm:$0xff]
    %v99 = vld [vmem:[%s1 + $0x200] sm:$0xff]
    %v100 = vld [vmem:[%s1 + $0x208] sm:$0xff]
    %v101 = vld [vmem:[%s1 + $0x210] sm:$0xff]
    %v102 = vld [vmem:[%s1 + $0x218] sm:$0xff]
    %v103 = vld [vmem:[%s1 + $0x220] sm:$0xff]
    %v104 = vld [vmem:[%s1 + $0x228] sm:$0xff]
    %v105 = vld [vmem:[%s1 + $0x230] sm:$0xff]
    %v106 = vld [vmem:[%s1 + $0x238] sm:$0xff]
    %v107 = vld [vmem:[%s1 + $0x240] sm:$0xff]
    %v108 = vld [vmem:[%s1 + $0x248] sm:$0xff]
    %v109 = vld [vmem:[%s1 + $0x250] sm:$0xff]
    %v110 = vld [vmem:[%s1 + $0x258] sm:$0xff]
    %v111 = vld [vmem:[%s1 + $0x260] sm:$0xff]
    %v112 = vld [vmem:[%s1 + $0x268] sm:$0xff]
    %v113 = vld [vmem:[%s1 + $0x270] sm:$0xff]
    %v114 = vld [vmem:[%s1 + $0x278] sm:$0xff]
    %v115 = vld [vmem:[%s1 + $0x280] sm:$0xff]
    %v116 = vld [vmem:[%s1 + $0x288] sm:$0xff]
    %v117 = vld [vmem:[%s1 + $0x290] sm:$0xff]
    %v118 = vld [vmem:[%s1 + $0x298] sm:$0xff]
    %v119 = vld [vmem:[%s1 + $0x2a0] sm:$0xff]
    %v120 = vld [vmem:[%s1 + $0x2a8] sm:$0xff]
    %v121 = vld [vmem:[%s1 + $0x2b0] sm:$0xff]
    %v122 = vld [vmem:[%s1 + $0x2b8] sm:$0xff]
    %v123 = vld [vmem:[%s1 + $0x2c0] sm:$0xff]
    %v124 = vld [vmem:[%s1 + $0x2c8] sm:$0xff]
    %v125 = vld [vmem:[%s1 + $0x2d0] sm:$0xff]
    %v126 = vld [vmem:[%s1 + $0x2d8] sm:$0xff]
    %v127 = vld [vmem:[%s1 + $0x2e0] sm:$0xff]
    %v128 = vld [vmem:[%s1 + $0x2e8] sm:$0xff]
    %v129 = vld [vmem:[%s1 + $0x2f0] sm:$0xff]
    %v130 = vld [vmem:[%s1 + $0x2f8] sm:$0xff]
    %v131 = vld [vmem:[%s2] sm:$0x1]
    %v133 = vlaneseq
    %v134 = vshrl.u32 %v133, 7
    %v135 = vsub.s32 0, %v134
    %v136 = vrot.slane %v131, %v135
    %v140 = vcombine.high %v33, %v33
    %v142 = vunpack.c.l.s4 1983009808
    %v143 = vunpack.c.0.s8 %v142
    %v144 = vlaneseq
    %v145 = vshrl.u32 %v144, 7
    %v146 = vsub.s32 %v143, %v145
    %v147 = vrot.slane %v33, %v146
    %v149 = vunpack.c.l.s4 1983009808
    %v150 = vunpack.c.0.s8 %v149
    %v151 = vlaneseq
    %v152 = vshrl.u32 %v151, 7
    %v153 = vsub.s32 %v150, %v152
    %v154 = vrot.slane %v140, %v153
    %v155 = vcombine.high %v147, %v147
    %v156 = vcombine.high %v154, %v154
    %v158 = vunpack.c.l.s4 1983009808
    %v159 = vunpack.c.0.s8 %v158
    %v160 = vlaneseq
    %v161 = vshrl.u32 %v160, 7
    %v162 = vsub.s32 %v159, %v161
    %v163 = vrot.slane %v34, %v162
    %v164 = vcombine.high %v163, %v163
    %171 = vmatprep.subr.mxu0 0.0
    %v172 = vand.u32 %v35, 4294901760
    %173 = vmatpush1.msra.mxu0 %v172
    %174 = vmatprep.subr.mxu0 0.0
    %v175 = vand.u32 %v36, 4294901760
    %176 = vmatpush1.msra.mxu0 %v175
    %177 = vmatprep.subr.mxu0 0.0
    %v178 = vand.u32 %v37, 4294901760
    %179 = vmatpush1.msra.mxu0 %v178
    %180 = vmatprep.subr.mxu0 0.0
    %v181 = vand.u32 %v38, 4294901760
    %182 = vmatpush1.msra.mxu0 %v181
    %183 = vmatprep.subr.mxu0 0.0
    %v184 = vand.u32 %v39, 4294901760
    %185 = vmatpush1.msra.mxu0 %v184
    %186 = vmatprep.subr.mxu0 0.0
    %v187 = vand.u32 %v40, 4294901760
    %188 = vmatpush1.msra.mxu0 %v187
    %189 = vmatprep.subr.mxu0 0.0
    %v190 = vand.u32 %v41, 4294901760
    %191 = vmatpush1.msra.mxu0 %v190
    %192 = vmatprep.subr.mxu0 0.0
    %v193 = vand.u32 %v42, 4294901760
    %194 = vmatpush1.msra.mxu0 %v193
    %195 = vmatprep.subr.mxu0 0.0
    %v196 = vand.u32 %v43, 4294901760
    %197 = vmatpush1.msra.mxu0 %v196
    %198 = vmatprep.subr.mxu0 0.0
    %v199 = vand.u32 %v44, 4294901760
    %200 = vmatpush1.msra.mxu0 %v199
    %201 = vmatprep.subr.mxu0 0.0
    %v202 = vand.u32 %v45, 4294901760
    %203 = vmatpush1.msra.mxu0 %v202
    %204 = vmatprep.subr.mxu0 0.0
    %v205 = vand.u32 %v46, 4294901760
    %206 = vmatpush1.msra.mxu0 %v205
    %207 = vmatprep.subr.mxu0 0.0
    %v208 = vand.u32 %v47, 4294901760
    %209 = vmatpush1.msra.mxu0 %v208
    %210 = vmatprep.subr.mxu0 0.0
    %v211 = vand.u32 %v48, 4294901760
    %212 = vmatpush1.msra.mxu0 %v211
    %213 = vmatprep.subr.mxu0 0.0
    %v214 = vand.u32 %v49, 4294901760
    %215 = vmatpush1.msra.mxu0 %v214
    %216 = vmatprep.subr.mxu0 0.0
    %v217 = vand.u32 %v50, 4294901760
    %218 = vmatpush1.msra.mxu0 %v217
    %219 = vmatprep.subr.mxu0 0.0
    %v220 = vand.u32 %v51, 4294901760
    %221 = vmatpush1.msra.mxu0 %v220
    %222 = vmatprep.subr.mxu0 0.0
    %v223 = vand.u32 %v52, 4294901760
    %224 = vmatpush1.msra.mxu0 %v223
    %225 = vmatprep.subr.mxu0 0.0
    %v226 = vand.u32 %v53, 4294901760
    %227 = vmatpush1.msra.mxu0 %v226
    %228 = vmatprep.subr.mxu0 0.0
    %v229 = vand.u32 %v54, 4294901760
    %230 = vmatpush1.msra.mxu0 %v229
    %231 = vmatprep.subr.mxu0 0.0
    %v232 = vand.u32 %v55, 4294901760
    %233 = vmatpush1.msra.mxu0 %v232
    %234 = vmatprep.subr.mxu0 0.0
    %v235 = vand.u32 %v56, 4294901760
    %236 = vmatpush1.msra.mxu0 %v235
    %237 = vmatprep.subr.mxu0 0.0
    %v238 = vand.u32 %v57, 4294901760
    %239 = vmatpush1.msra.mxu0 %v238
    %240 = vmatprep.subr.mxu0 0.0
    %v241 = vand.u32 %v58, 4294901760
    %242 = vmatpush1.msra.mxu0 %v241
    %243 = vmatprep.subr.mxu0 0.0
    %v244 = vand.u32 %v59, 4294901760
    %245 = vmatpush1.msra.mxu0 %v244
    %246 = vmatprep.subr.mxu0 0.0
    %v247 = vand.u32 %v60, 4294901760
    %248 = vmatpush1.msra.mxu0 %v247
    %249 = vmatprep.subr.mxu0 0.0
    %v250 = vand.u32 %v61, 4294901760
    %251 = vmatpush1.msra.mxu0 %v250
    %252 = vmatprep.subr.mxu0 0.0
    %v253 = vand.u32 %v62, 4294901760
    %254 = vmatpush1.msra.mxu0 %v253
    %255 = vmatprep.subr.mxu0 0.0
    %v256 = vand.u32 %v63, 4294901760
    %257 = vmatpush1.msra.mxu0 %v256
    %258 = vmatprep.subr.mxu0 0.0
    %v259 = vand.u32 %v64, 4294901760
    %260 = vmatpush1.msra.mxu0 %v259
    %261 = vmatprep.subr.mxu0 0.0
    %v262 = vand.u32 %v65, 4294901760
    %263 = vmatpush1.msra.mxu0 %v262
    %264 = vmatprep.subr.mxu0 0.0
    %v265 = vand.u32 %v66, 4294901760
    %266 = vmatpush1.msra.mxu0 %v265
    %v267 = vand.u32 %v155, 4294901760
    %v268 = vsub.f32 %v155, %v267
    %v269 = vand.u32 %v268, 4294901760
    %v270 = vsub.f32 %v268, %v269
    %v271 = vand.u32 %v270, 4294901760
    %272 = vmatprep.mubr.f32.mxu0 %v271
    %v273 = vand.u32 %v147, 4294901760
    %v274 = vsub.f32 %v147, %v273
    %v275 = vand.u32 %v274, 4294901760
    %v276 = vsub.f32 %v274, %v275
    %v277 = vand.u32 %v276, 4294901760
    %278 = vmatmul.mubr.f32.gmra.mrb[0].mxu0 %v277
    %v279 = vpop.f32.mrb[0].mxu0
    %v280 = vadd.f32 %v136, %v279
    %v281 = vpop.f32.mrb[0].mxu0
    %282 = vdwg.mxu0
    %283 = vmatprep.subr.mxu0 0.0
    %v284 = vand.u32 %v35, 4294901760
    %v285 = vsub.f32 %v35, %v284
    %v286 = vand.u32 %v285, 4294901760
    %v287 = vsub.f32 %v285, %v286
    %v288 = vand.u32 %v287, 4294901760
    %289 = vmatpush1.msra.mxu0 %v288
    %290 = vmatprep.subr.mxu0 0.0
    %v291 = vand.u32 %v36, 4294901760
    %v292 = vsub.f32 %v36, %v291
    %v293 = vand.u32 %v292, 4294901760
    %v294 = vsub.f32 %v292, %v293
    %v295 = vand.u32 %v294, 4294901760
    %296 = vmatpush1.msra.mxu0 %v295
    %297 = vmatprep.subr.mxu0 0.0
    %v298 = vand.u32 %v37, 4294901760
    %v299 = vsub.f32 %v37, %v298
    %v300 = vand.u32 %v299, 4294901760
    %v301 = vsub.f32 %v299, %v300
    %v302 = vand.u32 %v301, 4294901760
    %303 = vmatpush1.msra.mxu0 %v302
    %304 = vmatprep.subr.mxu0 0.0
    %v305 = vand.u32 %v38, 4294901760
    %v306 = vsub.f32 %v38, %v305
    %v307 = vand.u32 %v306, 4294901760
    %v308 = vsub.f32 %v306, %v307
    %v309 = vand.u32 %v308, 4294901760
    %310 = vmatpush1.msra.mxu0 %v309
    %311 = vmatprep.subr.mxu0 0.0
    %v312 = vand.u32 %v39, 4294901760
    %v313 = vsub.f32 %v39, %v312
    %v314 = vand.u32 %v313, 4294901760
    %v315 = vsub.f32 %v313, %v314
    %v316 = vand.u32 %v315, 4294901760
    %317 = vmatpush1.msra.mxu0 %v316
    %318 = vmatprep.subr.mxu0 0.0
    %v319 = vand.u32 %v40, 4294901760
    %v320 = vsub.f32 %v40, %v319
    %v321 = vand.u32 %v320, 4294901760
    %v322 = vsub.f32 %v320, %v321
    %v323 = vand.u32 %v322, 4294901760
    %324 = vmatpush1.msra.mxu0 %v323
    %325 = vmatprep.subr.mxu0 0.0
    %v326 = vand.u32 %v41, 4294901760
    %v327 = vsub.f32 %v41, %v326
    %v328 = vand.u32 %v327, 4294901760
    %v329 = vsub.f32 %v327, %v328
    %v330 = vand.u32 %v329, 4294901760
    %331 = vmatpush1.msra.mxu0 %v330
    %332 = vmatprep.subr.mxu0 0.0
    %v333 = vand.u32 %v42, 4294901760
    %v334 = vsub.f32 %v42, %v333
    %v335 = vand.u32 %v334, 4294901760
    %v336 = vsub.f32 %v334, %v335
    %v337 = vand.u32 %v336, 4294901760
    %338 = vmatpush1.msra.mxu0 %v337
    %339 = vmatprep.subr.mxu0 0.0
    %v340 = vand.u32 %v43, 4294901760
    %v341 = vsub.f32 %v43, %v340
    %v342 = vand.u32 %v341, 4294901760
    %v343 = vsub.f32 %v341, %v342
    %v344 = vand.u32 %v343, 4294901760
    %345 = vmatpush1.msra.mxu0 %v344
    %346 = vmatprep.subr.mxu0 0.0
    %v347 = vand.u32 %v44, 4294901760
    %v348 = vsub.f32 %v44, %v347
    %v349 = vand.u32 %v348, 4294901760
    %v350 = vsub.f32 %v348, %v349
    %v351 = vand.u32 %v350, 4294901760
    %352 = vmatpush1.msra.mxu0 %v351
    %353 = vmatprep.subr.mxu0 0.0
    %v354 = vand.u32 %v45, 4294901760
    %v355 = vsub.f32 %v45, %v354
    %v356 = vand.u32 %v355, 4294901760
    %v357 = vsub.f32 %v355, %v356
    %v358 = vand.u32 %v357, 4294901760
    %359 = vmatpush1.msra.mxu0 %v358
    %360 = vmatprep.subr.mxu0 0.0
    %v361 = vand.u32 %v46, 4294901760
    %v362 = vsub.f32 %v46, %v361
    %v363 = vand.u32 %v362, 4294901760
    %v364 = vsub.f32 %v362, %v363
    %v365 = vand.u32 %v364, 4294901760
    %366 = vmatpush1.msra.mxu0 %v365
    %367 = vmatprep.subr.mxu0 0.0
    %v368 = vand.u32 %v47, 4294901760
    %v369 = vsub.f32 %v47, %v368
    %v370 = vand.u32 %v369, 4294901760
    %v371 = vsub.f32 %v369, %v370
    %v372 = vand.u32 %v371, 4294901760
    %373 = vmatpush1.msra.mxu0 %v372
    %374 = vmatprep.subr.mxu0 0.0
    %v375 = vand.u32 %v48, 4294901760
    %v376 = vsub.f32 %v48, %v375
    %v377 = vand.u32 %v376, 4294901760
    %v378 = vsub.f32 %v376, %v377
    %v379 = vand.u32 %v378, 4294901760
    %380 = vmatpush1.msra.mxu0 %v379
    %381 = vmatprep.subr.mxu0 0.0
    %v382 = vand.u32 %v49, 4294901760
    %v383 = vsub.f32 %v49, %v382
    %v384 = vand.u32 %v383, 4294901760
    %v385 = vsub.f32 %v383, %v384
    %v386 = vand.u32 %v385, 4294901760
    %387 = vmatpush1.msra.mxu0 %v386
    %388 = vmatprep.subr.mxu0 0.0
    %v389 = vand.u32 %v50, 4294901760
    %v390 = vsub.f32 %v50, %v389
    %v391 = vand.u32 %v390, 4294901760
    %v392 = vsub.f32 %v390, %v391
    %v393 = vand.u32 %v392, 4294901760
    %394 = vmatpush1.msra.mxu0 %v393
    %395 = vmatprep.subr.mxu0 0.0
    %v396 = vand.u32 %v51, 4294901760
    %v397 = vsub.f32 %v51, %v396
    %v398 = vand.u32 %v397, 4294901760
    %v399 = vsub.f32 %v397, %v398
    %v400 = vand.u32 %v399, 4294901760
    %401 = vmatpush1.msra.mxu0 %v400
    %402 = vmatprep.subr.mxu0 0.0
    %v403 = vand.u32 %v52, 4294901760
    %v404 = vsub.f32 %v52, %v403
    %v405 = vand.u32 %v404, 4294901760
    %v406 = vsub.f32 %v404, %v405
    %v407 = vand.u32 %v406, 4294901760
    %408 = vmatpush1.msra.mxu0 %v407
    %409 = vmatprep.subr.mxu0 0.0
    %v410 = vand.u32 %v53, 4294901760
    %v411 = vsub.f32 %v53, %v410
    %v412 = vand.u32 %v411, 4294901760
    %v413 = vsub.f32 %v411, %v412
    %v414 = vand.u32 %v413, 4294901760
    %415 = vmatpush1.msra.mxu0 %v414
    %416 = vmatprep.subr.mxu0 0.0
    %v417 = vand.u32 %v54, 4294901760
    %v418 = vsub.f32 %v54, %v417
    %v419 = vand.u32 %v418, 4294901760
    %v420 = vsub.f32 %v418, %v419
    %v421 = vand.u32 %v420, 4294901760
    %422 = vmatpush1.msra.mxu0 %v421
    %423 = vmatprep.subr.mxu0 0.0
    %v424 = vand.u32 %v55, 4294901760
    %v425 = vsub.f32 %v55, %v424
    %v426 = vand.u32 %v425, 4294901760
    %v427 = vsub.f32 %v425, %v426
    %v428 = vand.u32 %v427, 4294901760
    %429 = vmatpush1.msra.mxu0 %v428
    %430 = vmatprep.subr.mxu0 0.0
    %v431 = vand.u32 %v56, 4294901760
    %v432 = vsub.f32 %v56, %v431
    %v433 = vand.u32 %v432, 4294901760
    %v434 = vsub.f32 %v432, %v433
    %v435 = vand.u32 %v434, 4294901760
    %436 = vmatpush1.msra.mxu0 %v435
    %437 = vmatprep.subr.mxu0 0.0
    %v438 = vand.u32 %v57, 4294901760
    %v439 = vsub.f32 %v57, %v438
    %v440 = vand.u32 %v439, 4294901760
    %v441 = vsub.f32 %v439, %v440
    %v442 = vand.u32 %v441, 4294901760
    %443 = vmatpush1.msra.mxu0 %v442
    %444 = vmatprep.subr.mxu0 0.0
    %v445 = vand.u32 %v58, 4294901760
    %v446 = vsub.f32 %v58, %v445
    %v447 = vand.u32 %v446, 4294901760
    %v448 = vsub.f32 %v446, %v447
    %v449 = vand.u32 %v448, 4294901760
    %450 = vmatpush1.msra.mxu0 %v449
    %451 = vmatprep.subr.mxu0 0.0
    %v452 = vand.u32 %v59, 4294901760
    %v453 = vsub.f32 %v59, %v452
    %v454 = vand.u32 %v453, 4294901760
    %v455 = vsub.f32 %v453, %v454
    %v456 = vand.u32 %v455, 4294901760
    %457 = vmatpush1.msra.mxu0 %v456
    %458 = vmatprep.subr.mxu0 0.0
    %v459 = vand.u32 %v60, 4294901760
    %v460 = vsub.f32 %v60, %v459
    %v461 = vand.u32 %v460, 4294901760
    %v462 = vsub.f32 %v460, %v461
    %v463 = vand.u32 %v462, 4294901760
    %464 = vmatpush1.msra.mxu0 %v463
    %465 = vmatprep.subr.mxu0 0.0
    %v466 = vand.u32 %v61, 4294901760
    %v467 = vsub.f32 %v61, %v466
    %v468 = vand.u32 %v467, 4294901760
    %v469 = vsub.f32 %v467, %v468
    %v470 = vand.u32 %v469, 4294901760
    %471 = vmatpush1.msra.mxu0 %v470
    %472 = vmatprep.subr.mxu0 0.0
    %v473 = vand.u32 %v62, 4294901760
    %v474 = vsub.f32 %v62, %v473
    %v475 = vand.u32 %v474, 4294901760
    %v476 = vsub.f32 %v474, %v475
    %v477 = vand.u32 %v476, 4294901760
    %478 = vmatpush1.msra.mxu0 %v477
    %479 = vmatprep.subr.mxu0 0.0
    %v480 = vand.u32 %v63, 4294901760
    %v481 = vsub.f32 %v63, %v480
    %v482 = vand.u32 %v481, 4294901760
    %v483 = vsub.f32 %v481, %v482
    %v484 = vand.u32 %v483, 4294901760
    %485 = vmatpush1.msra.mxu0 %v484
    %486 = vmatprep.subr.mxu0 0.0
    %v487 = vand.u32 %v64, 4294901760
    %v488 = vsub.f32 %v64, %v487
    %v489 = vand.u32 %v488, 4294901760
    %v490 = vsub.f32 %v488, %v489
    %v491 = vand.u32 %v490, 4294901760
    %492 = vmatpush1.msra.mxu0 %v491
    %493 = vmatprep.subr.mxu0 0.0
    %v494 = vand.u32 %v65, 4294901760
    %v495 = vsub.f32 %v65, %v494
    %v496 = vand.u32 %v495, 4294901760
    %v497 = vsub.f32 %v495, %v496
    %v498 = vand.u32 %v497, 4294901760
    %499 = vmatpush1.msra.mxu0 %v498
    %500 = vmatprep.subr.mxu0 0.0
    %v501 = vand.u32 %v66, 4294901760
    %v502 = vsub.f32 %v66, %v501
    %v503 = vand.u32 %v502, 4294901760
    %v504 = vsub.f32 %v502, %v503
    %v505 = vand.u32 %v504, 4294901760
    %506 = vmatpush1.msra.mxu0 %v505
    %v507 = vand.u32 %v155, 4294901760
    %508 = vmatprep.mubr.f32.mxu0 %v507
    %v509 = vand.u32 %v147, 4294901760
    %510 = vmatmul.mubr.f32.gmra.mrb[0].mxu0 %v509
    %v511 = vpop.f32.mrb[0].mxu0
    %v512 = vadd.f32 %v280, %v511
    %v513 = vpop.f32.mrb[0].mxu0
    %514 = vdwg.mxu0
    %515 = vmatprep.subr.mxu0 0.0
    %v516 = vand.u32 %v35, 4294901760
    %v517 = vsub.f32 %v35, %v516
    %518 = vmatpush1.msra.mxu0 %v517
    %519 = vmatprep.subr.mxu0 0.0
    %v520 = vand.u32 %v36, 4294901760
    %v521 = vsub.f32 %v36, %v520
    %522 = vmatpush1.msra.mxu0 %v521
    %523 = vmatprep.subr.mxu0 0.0
    %v524 = vand.u32 %v37, 4294901760
    %v525 = vsub.f32 %v37, %v524
    %526 = vmatpush1.msra.mxu0 %v525
    %527 = vmatprep.subr.mxu0 0.0
    %v528 = vand.u32 %v38, 4294901760
    %v529 = vsub.f32 %v38, %v528
    %530 = vmatpush1.msra.mxu0 %v529
    %531 = vmatprep.subr.mxu0 0.0
    %v532 = vand.u32 %v39, 4294901760
    %v533 = vsub.f32 %v39, %v532
    %534 = vmatpush1.msra.mxu0 %v533
    %535 = vmatprep.subr.mxu0 0.0
    %v536 = vand.u32 %v40, 4294901760
    %v537 = vsub.f32 %v40, %v536
    %538 = vmatpush1.msra.mxu0 %v537
    %539 = vmatprep.subr.mxu0 0.0
    %v540 = vand.u32 %v41, 4294901760
    %v541 = vsub.f32 %v41, %v540
    %542 = vmatpush1.msra.mxu0 %v541
    %543 = vmatprep.subr.mxu0 0.0
    %v544 = vand.u32 %v42, 4294901760
    %v545 = vsub.f32 %v42, %v544
    %546 = vmatpush1.msra.mxu0 %v545
    %547 = vmatprep.subr.mxu0 0.0
    %v548 = vand.u32 %v43, 4294901760
    %v549 = vsub.f32 %v43, %v548
    %550 = vmatpush1.msra.mxu0 %v549
    %551 = vmatprep.subr.mxu0 0.0
    %v552 = vand.u32 %v44, 4294901760
    %v553 = vsub.f32 %v44, %v552
    %554 = vmatpush1.msra.mxu0 %v553
    %555 = vmatprep.subr.mxu0 0.0
    %v556 = vand.u32 %v45, 4294901760
    %v557 = vsub.f32 %v45, %v556
    %558 = vmatpush1.msra.mxu0 %v557
    %559 = vmatprep.subr.mxu0 0.0
    %v560 = vand.u32 %v46, 4294901760
    %v561 = vsub.f32 %v46, %v560
    %562 = vmatpush1.msra.mxu0 %v561
    %563 = vmatprep.subr.mxu0 0.0
    %v564 = vand.u32 %v47, 4294901760
    %v565 = vsub.f32 %v47, %v564
    %566 = vmatpush1.msra.mxu0 %v565
    %567 = vmatprep.subr.mxu0 0.0
    %v568 = vand.u32 %v48, 4294901760
    %v569 = vsub.f32 %v48, %v568
    %570 = vmatpush1.msra.mxu0 %v569
    %571 = vmatprep.subr.mxu0 0.0
    %v572 = vand.u32 %v49, 4294901760
    %v573 = vsub.f32 %v49, %v572
    %574 = vmatpush1.msra.mxu0 %v573
    %575 = vmatprep.subr.mxu0 0.0
    %v576 = vand.u32 %v50, 4294901760
    %v577 = vsub.f32 %v50, %v576
    %578 = vmatpush1.msra.mxu0 %v577
    %579 = vmatprep.subr.mxu0 0.0
    %v580 = vand.u32 %v51, 4294901760
    %v581 = vsub.f32 %v51, %v580
    %582 = vmatpush1.msra.mxu0 %v581
    %583 = vmatprep.subr.mxu0 0.0
    %v584 = vand.u32 %v52, 4294901760
    %v585 = vsub.f32 %v52, %v584
    %586 = vmatpush1.msra.mxu0 %v585
    %587 = vmatprep.subr.mxu0 0.0
    %v588 = vand.u32 %v53, 4294901760
    %v589 = vsub.f32 %v53, %v588
    %590 = vmatpush1.msra.mxu0 %v589
    %591 = vmatprep.subr.mxu0 0.0
    %v592 = vand.u32 %v54, 4294901760
    %v593 = vsub.f32 %v54, %v592
    %594 = vmatpush1.msra.mxu0 %v593
    %595 = vmatprep.subr.mxu0 0.0
    %v596 = vand.u32 %v55, 4294901760
    %v597 = vsub.f32 %v55, %v596
    %598 = vmatpush1.msra.mxu0 %v597
    %599 = vmatprep.subr.mxu0 0.0
    %v600 = vand.u32 %v56, 4294901760
    %v601 = vsub.f32 %v56, %v600
    %602 = vmatpush1.msra.mxu0 %v601
    %603 = vmatprep.subr.mxu0 0.0
    %v604 = vand.u32 %v57, 4294901760
    %v605 = vsub.f32 %v57, %v604
    %606 = vmatpush1.msra.mxu0 %v605
    %607 = vmatprep.subr.mxu0 0.0
    %v608 = vand.u32 %v58, 4294901760
    %v609 = vsub.f32 %v58, %v608
    %610 = vmatpush1.msra.mxu0 %v609
    %611 = vmatprep.subr.mxu0 0.0
    %v612 = vand.u32 %v59, 4294901760
    %v613 = vsub.f32 %v59, %v612
    %614 = vmatpush1.msra.mxu0 %v613
    %615 = vmatprep.subr.mxu0 0.0
    %v616 = vand.u32 %v60, 4294901760
    %v617 = vsub.f32 %v60, %v616
    %618 = vmatpush1.msra.mxu0 %v617
    %619 = vmatprep.subr.mxu0 0.0
    %v620 = vand.u32 %v61, 4294901760
    %v621 = vsub.f32 %v61, %v620
    %622 = vmatpush1.msra.mxu0 %v621
    %623 = vmatprep.subr.mxu0 0.0
    %v624 = vand.u32 %v62, 4294901760
    %v625 = vsub.f32 %v62, %v624
    %626 = vmatpush1.msra.mxu0 %v625
    %627 = vmatprep.subr.mxu0 0.0
    %v628 = vand.u32 %v63, 4294901760
    %v629 = vsub.f32 %v63, %v628
    %630 = vmatpush1.msra.mxu0 %v629
    %631 = vmatprep.subr.mxu0 0.0
    %v632 = vand.u32 %v64, 4294901760
    %v633 = vsub.f32 %v64, %v632
    %634 = vmatpush1.msra.mxu0 %v633
    %635 = vmatprep.subr.mxu0 0.0
    %v636 = vand.u32 %v65, 4294901760
    %v637 = vsub.f32 %v65, %v636
    %638 = vmatpush1.msra.mxu0 %v637
    %639 = vmatprep.subr.mxu0 0.0
    %v640 = vand.u32 %v66, 4294901760
    %v641 = vsub.f32 %v66, %v640
    %642 = vmatpush1.msra.mxu0 %v641
    %v643 = vand.u32 %v155, 4294901760
    %v644 = vsub.f32 %v155, %v643
    %645 = vmatprep.mubr.f32.mxu0 %v644
    %v646 = vand.u32 %v147, 4294901760
    %v647 = vsub.f32 %v147, %v646
    %648 = vmatmul.mubr.f32.gmra.mrb[0].mxu0 %v647
    %v649 = vpop.f32.mrb[0].mxu0
    %v650 = vadd.f32 %v512, %v649
    %v651 = vpop.f32.mrb[0].mxu0
    %652 = vdwg.mxu0
    %653 = vmatprep.subr.mxu0 0.0
    %v654 = vand.u32 %v35, 4294901760
    %655 = vmatpush1.msra.mxu0 %v654
    %656 = vmatprep.subr.mxu0 0.0
    %v657 = vand.u32 %v36, 4294901760
    %658 = vmatpush1.msra.mxu0 %v657
    %659 = vmatprep.subr.mxu0 0.0
    %v660 = vand.u32 %v37, 4294901760
    %661 = vmatpush1.msra.mxu0 %v660
    %662 = vmatprep.subr.mxu0 0.0
    %v663 = vand.u32 %v38, 4294901760
    %664 = vmatpush1.msra.mxu0 %v663
    %665 = vmatprep.subr.mxu0 0.0
    %v666 = vand.u32 %v39, 4294901760
    %667 = vmatpush1.msra.mxu0 %v666
    %668 = vmatprep.subr.mxu0 0.0
    %v669 = vand.u32 %v40, 4294901760
    %670 = vmatpush1.msra.mxu0 %v669
    %671 = vmatprep.subr.mxu0 0.0
    %v672 = vand.u32 %v41, 4294901760
    %673 = vmatpush1.msra.mxu0 %v672
    %674 = vmatprep.subr.mxu0 0.0
    %v675 = vand.u32 %v42, 4294901760
    %676 = vmatpush1.msra.mxu0 %v675
    %677 = vmatprep.subr.mxu0 0.0
    %v678 = vand.u32 %v43, 4294901760
    %679 = vmatpush1.msra.mxu0 %v678
    %680 = vmatprep.subr.mxu0 0.0
    %v681 = vand.u32 %v44, 4294901760
    %682 = vmatpush1.msra.mxu0 %v681
    %683 = vmatprep.subr.mxu0 0.0
    %v684 = vand.u32 %v45, 4294901760
    %685 = vmatpush1.msra.mxu0 %v684
    %686 = vmatprep.subr.mxu0 0.0
    %v687 = vand.u32 %v46, 4294901760
    %688 = vmatpush1.msra.mxu0 %v687
    %689 = vmatprep.subr.mxu0 0.0
    %v690 = vand.u32 %v47, 4294901760
    %691 = vmatpush1.msra.mxu0 %v690
    %692 = vmatprep.subr.mxu0 0.0
    %v693 = vand.u32 %v48, 4294901760
    %694 = vmatpush1.msra.mxu0 %v693
    %695 = vmatprep.subr.mxu0 0.0
    %v696 = vand.u32 %v49, 4294901760
    %697 = vmatpush1.msra.mxu0 %v696
    %698 = vmatprep.subr.mxu0 0.0
    %v699 = vand.u32 %v50, 4294901760
    %700 = vmatpush1.msra.mxu0 %v699
    %701 = vmatprep.subr.mxu0 0.0
    %v702 = vand.u32 %v51, 4294901760
    %703 = vmatpush1.msra.mxu0 %v702
    %704 = vmatprep.subr.mxu0 0.0
    %v705 = vand.u32 %v52, 4294901760
    %706 = vmatpush1.msra.mxu0 %v705
    %707 = vmatprep.subr.mxu0 0.0
    %v708 = vand.u32 %v53, 4294901760
    %709 = vmatpush1.msra.mxu0 %v708
    %710 = vmatprep.subr.mxu0 0.0
    %v711 = vand.u32 %v54, 4294901760
    %712 = vmatpush1.msra.mxu0 %v711
    %713 = vmatprep.subr.mxu0 0.0
    %v714 = vand.u32 %v55, 4294901760
    %715 = vmatpush1.msra.mxu0 %v714
    %716 = vmatprep.subr.mxu0 0.0
    %v717 = vand.u32 %v56, 4294901760
    %718 = vmatpush1.msra.mxu0 %v717
    %719 = vmatprep.subr.mxu0 0.0
    %v720 = vand.u32 %v57, 4294901760
    %721 = vmatpush1.msra.mxu0 %v720
    %722 = vmatprep.subr.mxu0 0.0
    %v723 = vand.u32 %v58, 4294901760
    %724 = vmatpush1.msra.mxu0 %v723
    %725 = vmatprep.subr.mxu0 0.0
    %v726 = vand.u32 %v59, 4294901760
    %727 = vmatpush1.msra.mxu0 %v726
    %728 = vmatprep.subr.mxu0 0.0
    %v729 = vand.u32 %v60, 4294901760
    %730 = vmatpush1.msra.mxu0 %v729
    %731 = vmatprep.subr.mxu0 0.0
    %v732 = vand.u32 %v61, 4294901760
    %733 = vmatpush1.msra.mxu0 %v732
    %734 = vmatprep.subr.mxu0 0.0
    %v735 = vand.u32 %v62, 4294901760
    %736 = vmatpush1.msra.mxu0 %v735
    %737 = vmatprep.subr.mxu0 0.0
    %v738 = vand.u32 %v63, 4294901760
    %739 = vmatpush1.msra.mxu0 %v738
    %740 = vmatprep.subr.mxu0 0.0
    %v741 = vand.u32 %v64, 4294901760
    %742 = vmatpush1.msra.mxu0 %v741
    %743 = vmatprep.subr.mxu0 0.0
    %v744 = vand.u32 %v65, 4294901760
    %745 = vmatpush1.msra.mxu0 %v744
    %746 = vmatprep.subr.mxu0 0.0
    %v747 = vand.u32 %v66, 4294901760
    %748 = vmatpush1.msra.mxu0 %v747
    %v749 = vand.u32 %v155, 4294901760
    %v750 = vsub.f32 %v155, %v749
    %v751 = vand.u32 %v750, 4294901760
    %752 = vmatprep.mubr.f32.mxu0 %v751
    %v753 = vand.u32 %v147, 4294901760
    %v754 = vsub.f32 %v147, %v753
    %v755 = vand.u32 %v754, 4294901760
    %756 = vmatmul.mubr.f32.gmra.mrb[0].mxu0 %v755
    %v757 = vpop.f32.mrb[0].mxu0
    %v758 = vadd.f32 %v650, %v757
    %v759 = vpop.f32.mrb[0].mxu0
    %760 = vdwg.mxu0
    %761 = vmatprep.subr.mxu0 0.0
    %v762 = vand.u32 %v35, 4294901760
    %v763 = vsub.f32 %v35, %v762
    %v764 = vand.u32 %v763, 4294901760
    %765 = vmatpush1.msra.mxu0 %v764
    %766 = vmatprep.subr.mxu0 0.0
    %v767 = vand.u32 %v36, 4294901760
    %v768 = vsub.f32 %v36, %v767
    %v769 = vand.u32 %v768, 4294901760
    %770 = vmatpush1.msra.mxu0 %v769
    %771 = vmatprep.subr.mxu0 0.0
    %v772 = vand.u32 %v37, 4294901760
    %v773 = vsub.f32 %v37, %v772
    %v774 = vand.u32 %v773, 4294901760
    %775 = vmatpush1.msra.mxu0 %v774
    %776 = vmatprep.subr.mxu0 0.0
    %v777 = vand.u32 %v38, 4294901760
    %v778 = vsub.f32 %v38, %v777
    %v779 = vand.u32 %v778, 4294901760
    %780 = vmatpush1.msra.mxu0 %v779
    %781 = vmatprep.subr.mxu0 0.0
    %v782 = vand.u32 %v39, 4294901760
    %v783 = vsub.f32 %v39, %v782
    %v784 = vand.u32 %v783, 4294901760
    %785 = vmatpush1.msra.mxu0 %v784
    %786 = vmatprep.subr.mxu0 0.0
    %v787 = vand.u32 %v40, 4294901760
    %v788 = vsub.f32 %v40, %v787
    %v789 = vand.u32 %v788, 4294901760
    %790 = vmatpush1.msra.mxu0 %v789
    %791 = vmatprep.subr.mxu0 0.0
    %v792 = vand.u32 %v41, 4294901760
    %v793 = vsub.f32 %v41, %v792
    %v794 = vand.u32 %v793, 4294901760
    %795 = vmatpush1.msra.mxu0 %v794
    %796 = vmatprep.subr.mxu0 0.0
    %v797 = vand.u32 %v42, 4294901760
    %v798 = vsub.f32 %v42, %v797
    %v799 = vand.u32 %v798, 4294901760
    %800 = vmatpush1.msra.mxu0 %v799
    %801 = vmatprep.subr.mxu0 0.0
    %v802 = vand.u32 %v43, 4294901760
    %v803 = vsub.f32 %v43, %v802
    %v804 = vand.u32 %v803, 4294901760
    %805 = vmatpush1.msra.mxu0 %v804
    %806 = vmatprep.subr.mxu0 0.0
    %v807 = vand.u32 %v44, 4294901760
    %v808 = vsub.f32 %v44, %v807
    %v809 = vand.u32 %v808, 4294901760
    %810 = vmatpush1.msra.mxu0 %v809
    %811 = vmatprep.subr.mxu0 0.0
    %v812 = vand.u32 %v45, 4294901760
    %v813 = vsub.f32 %v45, %v812
    %v814 = vand.u32 %v813, 4294901760
    %815 = vmatpush1.msra.mxu0 %v814
    %816 = vmatprep.subr.mxu0 0.0
    %v817 = vand.u32 %v46, 4294901760
    %v818 = vsub.f32 %v46, %v817
    %v819 = vand.u32 %v818, 4294901760
    %820 = vmatpush1.msra.mxu0 %v819
    %821 = vmatprep.subr.mxu0 0.0
    %v822 = vand.u32 %v47, 4294901760
    %v823 = vsub.f32 %v47, %v822
    %v824 = vand.u32 %v823, 4294901760
    %825 = vmatpush1.msra.mxu0 %v824
    %826 = vmatprep.subr.mxu0 0.0
    %v827 = vand.u32 %v48, 4294901760
    %v828 = vsub.f32 %v48, %v827
    %v829 = vand.u32 %v828, 4294901760
    %830 = vmatpush1.msra.mxu0 %v829
    %831 = vmatprep.subr.mxu0 0.0
    %v832 = vand.u32 %v49, 4294901760
    %v833 = vsub.f32 %v49, %v832
    %v834 = vand.u32 %v833, 4294901760
    %835 = vmatpush1.msra.mxu0 %v834
    %836 = vmatprep.subr.mxu0 0.0
    %v837 = vand.u32 %v50, 4294901760
    %v838 = vsub.f32 %v50, %v837
    %v839 = vand.u32 %v838, 4294901760
    %840 = vmatpush1.msra.mxu0 %v839
    %841 = vmatprep.subr.mxu0 0.0
    %v842 = vand.u32 %v51, 4294901760
    %v843 = vsub.f32 %v51, %v842
    %v844 = vand.u32 %v843, 4294901760
    %845 = vmatpush1.msra.mxu0 %v844
    %846 = vmatprep.subr.mxu0 0.0
    %v847 = vand.u32 %v52, 4294901760
    %v848 = vsub.f32 %v52, %v847
    %v849 = vand.u32 %v848, 4294901760
    %850 = vmatpush1.msra.mxu0 %v849
    %851 = vmatprep.subr.mxu0 0.0
    %v852 = vand.u32 %v53, 4294901760
    %v853 = vsub.f32 %v53, %v852
    %v854 = vand.u32 %v853, 4294901760
    %855 = vmatpush1.msra.mxu0 %v854
    %856 = vmatprep.subr.mxu0 0.0
    %v857 = vand.u32 %v54, 4294901760
    %v858 = vsub.f32 %v54, %v857
    %v859 = vand.u32 %v858, 4294901760
    %860 = vmatpush1.msra.mxu0 %v859
    %861 = vmatprep.subr.mxu0 0.0
    %v862 = vand.u32 %v55, 4294901760
    %v863 = vsub.f32 %v55, %v862
    %v864 = vand.u32 %v863, 4294901760
    %865 = vmatpush1.msra.mxu0 %v864
    %866 = vmatprep.subr.mxu0 0.0
    %v867 = vand.u32 %v56, 4294901760
    %v868 = vsub.f32 %v56, %v867
    %v869 = vand.u32 %v868, 4294901760
    %870 = vmatpush1.msra.mxu0 %v869
    %871 = vmatprep.subr.mxu0 0.0
    %v872 = vand.u32 %v57, 4294901760
    %v873 = vsub.f32 %v57, %v872
    %v874 = vand.u32 %v873, 4294901760
    %875 = vmatpush1.msra.mxu0 %v874
    %876 = vmatprep.subr.mxu0 0.0
    %v877 = vand.u32 %v58, 4294901760
    %v878 = vsub.f32 %v58, %v877
    %v879 = vand.u32 %v878, 4294901760
    %880 = vmatpush1.msra.mxu0 %v879
    %881 = vmatprep.subr.mxu0 0.0
    %v882 = vand.u32 %v59, 4294901760
    %v883 = vsub.f32 %v59, %v882
    %v884 = vand.u32 %v883, 4294901760
    %885 = vmatpush1.msra.mxu0 %v884
    %886 = vmatprep.subr.mxu0 0.0
    %v887 = vand.u32 %v60, 4294901760
    %v888 = vsub.f32 %v60, %v887
    %v889 = vand.u32 %v888, 4294901760
    %890 = vmatpush1.msra.mxu0 %v889
    %891 = vmatprep.subr.mxu0 0.0
    %v892 = vand.u32 %v61, 4294901760
    %v893 = vsub.f32 %v61, %v892
    %v894 = vand.u32 %v893, 4294901760
    %895 = vmatpush1.msra.mxu0 %v894
    %896 = vmatprep.subr.mxu0 0.0
    %v897 = vand.u32 %v62, 4294901760
    %v898 = vsub.f32 %v62, %v897
    %v899 = vand.u32 %v898, 4294901760
    %900 = vmatpush1.msra.mxu0 %v899
    %901 = vmatprep.subr.mxu0 0.0
    %v902 = vand.u32 %v63, 4294901760
    %v903 = vsub.f32 %v63, %v902
    %v904 = vand.u32 %v903, 4294901760
    %905 = vmatpush1.msra.mxu0 %v904
    %906 = vmatprep.subr.mxu0 0.0
    %v907 = vand.u32 %v64, 4294901760
    %v908 = vsub.f32 %v64, %v907
    %v909 = vand.u32 %v908, 4294901760
    %910 = vmatpush1.msra.mxu0 %v909
    %911 = vmatprep.subr.mxu0 0.0
    %v912 = vand.u32 %v65, 4294901760
    %v913 = vsub.f32 %v65, %v912
    %v914 = vand.u32 %v913, 4294901760
    %915 = vmatpush1.msra.mxu0 %v914
    %916 = vmatprep.subr.mxu0 0.0
    %v917 = vand.u32 %v66, 4294901760
    %v918 = vsub.f32 %v66, %v917
    %v919 = vand.u32 %v918, 4294901760
    %920 = vmatpush1.msra.mxu0 %v919
    %v921 = vand.u32 %v155, 4294901760
    %922 = vmatprep.mubr.f32.mxu0 %v921
    %v923 = vand.u32 %v147, 4294901760
    %924 = vmatmul.mubr.f32.gmra.mrb[0].mxu0 %v923
    %v925 = vpop.f32.mrb[0].mxu0
    %v926 = vadd.f32 %v758, %v925
    %v927 = vpop.f32.mrb[0].mxu0
    %928 = vdwg.mxu0
    %929 = vmatprep.subr.mxu0 0.0
    %v930 = vand.u32 %v35, 4294901760
    %931 = vmatpush1.msra.mxu0 %v930
    %932 = vmatprep.subr.mxu0 0.0
    %v933 = vand.u32 %v36, 4294901760
    %934 = vmatpush1.msra.mxu0 %v933
    %935 = vmatprep.subr.mxu0 0.0
    %v936 = vand.u32 %v37, 4294901760
    %937 = vmatpush1.msra.mxu0 %v936
    %938 = vmatprep.subr.mxu0 0.0
    %v939 = vand.u32 %v38, 4294901760
    %940 = vmatpush1.msra.mxu0 %v939
    %941 = vmatprep.subr.mxu0 0.0
    %v942 = vand.u32 %v39, 4294901760
    %943 = vmatpush1.msra.mxu0 %v942
    %944 = vmatprep.subr.mxu0 0.0
    %v945 = vand.u32 %v40, 4294901760
    %946 = vmatpush1.msra.mxu0 %v945
    %947 = vmatprep.subr.mxu0 0.0
    %v948 = vand.u32 %v41, 4294901760
    %949 = vmatpush1.msra.mxu0 %v948
    %950 = vmatprep.subr.mxu0 0.0
    %v951 = vand.u32 %v42, 4294901760
    %952 = vmatpush1.msra.mxu0 %v951
    %953 = vmatprep.subr.mxu0 0.0
    %v954 = vand.u32 %v43, 4294901760
    %955 = vmatpush1.msra.mxu0 %v954
    %956 = vmatprep.subr.mxu0 0.0
    %v957 = vand.u32 %v44, 4294901760
    %958 = vmatpush1.msra.mxu0 %v957
    %959 = vmatprep.subr.mxu0 0.0
    %v960 = vand.u32 %v45, 4294901760
    %961 = vmatpush1.msra.mxu0 %v960
    %962 = vmatprep.subr.mxu0 0.0
    %v963 = vand.u32 %v46, 4294901760
    %964 = vmatpush1.msra.mxu0 %v963
    %965 = vmatprep.subr.mxu0 0.0
    %v966 = vand.u32 %v47, 4294901760
    %967 = vmatpush1.msra.mxu0 %v966
    %968 = vmatprep.subr.mxu0 0.0
    %v969 = vand.u32 %v48, 4294901760
    %970 = vmatpush1.msra.mxu0 %v969
    %971 = vmatprep.subr.mxu0 0.0
    %v972 = vand.u32 %v49, 4294901760
    %973 = vmatpush1.msra.mxu0 %v972
    %974 = vmatprep.subr.mxu0 0.0
    %v975 = vand.u32 %v50, 4294901760
    %976 = vmatpush1.msra.mxu0 %v975
    %977 = vmatprep.subr.mxu0 0.0
    %v978 = vand.u32 %v51, 4294901760
    %979 = vmatpush1.msra.mxu0 %v978
    %980 = vmatprep.subr.mxu0 0.0
    %v981 = vand.u32 %v52, 4294901760
    %982 = vmatpush1.msra.mxu0 %v981
    %983 = vmatprep.subr.mxu0 0.0
    %v984 = vand.u32 %v53, 4294901760
    %985 = vmatpush1.msra.mxu0 %v984
    %986 = vmatprep.subr.mxu0 0.0
    %v987 = vand.u32 %v54, 4294901760
    %988 = vmatpush1.msra.mxu0 %v987
    %989 = vmatprep.subr.mxu0 0.0
    %v990 = vand.u32 %v55, 4294901760
    %991 = vmatpush1.msra.mxu0 %v990
    %992 = vmatprep.subr.mxu0 0.0
    %v993 = vand.u32 %v56, 4294901760
    %994 = vmatpush1.msra.mxu0 %v993
    %995 = vmatprep.subr.mxu0 0.0
    %v996 = vand.u32 %v57, 4294901760
    %997 = vmatpush1.msra.mxu0 %v996
    %998 = vmatprep.subr.mxu0 0.0
    %v999 = vand.u32 %v58, 4294901760
    %1000 = vmatpush1.msra.mxu0 %v999
    %1001 = vmatprep.subr.mxu0 0.0
    %v1002 = vand.u32 %v59, 4294901760
    %1003 = vmatpush1.msra.mxu0 %v1002
    %1004 = vmatprep.subr.mxu0 0.0
    %v1005 = vand.u32 %v60, 4294901760
    %1006 = vmatpush1.msra.mxu0 %v1005
    %1007 = vmatprep.subr.mxu0 0.0
    %v1008 = vand.u32 %v61, 4294901760
    %1009 = vmatpush1.msra.mxu0 %v1008
    %1010 = vmatprep.subr.mxu0 0.0
    %v1011 = vand.u32 %v62, 4294901760
    %1012 = vmatpush1.msra.mxu0 %v1011
    %1013 = vmatprep.subr.mxu0 0.0
    %v1014 = vand.u32 %v63, 4294901760
    %1015 = vmatpush1.msra.mxu0 %v1014
    %1016 = vmatprep.subr.mxu0 0.0
    %v1017 = vand.u32 %v64, 4294901760
    %1018 = vmatpush1.msra.mxu0 %v1017
    %1019 = vmatprep.subr.mxu0 0.0
    %v1020 = vand.u32 %v65, 4294901760
    %1021 = vmatpush1.msra.mxu0 %v1020
    %1022 = vmatprep.subr.mxu0 0.0
    %v1023 = vand.u32 %v66, 4294901760
    %1024 = vmatpush1.msra.mxu0 %v1023
    %v1025 = vand.u32 %v155, 4294901760
    %1026 = vmatprep.mubr.f32.mxu0 %v1025
    %v1027 = vand.u32 %v147, 4294901760
    %1028 = vmatmul.mubr.f32.gmra.mrb[0].mxu0 %v1027
    %v1029 = vpop.f32.mrb[0].mxu0
    %v1030 = vadd.f32 %v926, %v1029
    %v1031 = vpop.f32.mrb[0].mxu0
    %1032 = vdwg.mxu0
    %1033 = vmatprep.subr.mxu0 0.0
    %v1034 = vand.u32 %v67, 4294901760
    %1035 = vmatpush1.msra.mxu0 %v1034
    %1036 = vmatprep.subr.mxu0 0.0
    %v1037 = vand.u32 %v68, 4294901760
    %1038 = vmatpush1.msra.mxu0 %v1037
    %1039 = vmatprep.subr.mxu0 0.0
    %v1040 = vand.u32 %v69, 4294901760
    %1041 = vmatpush1.msra.mxu0 %v1040
    %1042 = vmatprep.subr.mxu0 0.0
    %v1043 = vand.u32 %v70, 4294901760
    %1044 = vmatpush1.msra.mxu0 %v1043
    %1045 = vmatprep.subr.mxu0 0.0
    %v1046 = vand.u32 %v71, 4294901760
    %1047 = vmatpush1.msra.mxu0 %v1046
    %1048 = vmatprep.subr.mxu0 0.0
    %v1049 = vand.u32 %v72, 4294901760
    %1050 = vmatpush1.msra.mxu0 %v1049
    %1051 = vmatprep.subr.mxu0 0.0
    %v1052 = vand.u32 %v73, 4294901760
    %1053 = vmatpush1.msra.mxu0 %v1052
    %1054 = vmatprep.subr.mxu0 0.0
    %v1055 = vand.u32 %v74, 4294901760
    %1056 = vmatpush1.msra.mxu0 %v1055
    %1057 = vmatprep.subr.mxu0 0.0
    %v1058 = vand.u32 %v75, 4294901760
    %1059 = vmatpush1.msra.mxu0 %v1058
    %1060 = vmatprep.subr.mxu0 0.0
    %v1061 = vand.u32 %v76, 4294901760
    %1062 = vmatpush1.msra.mxu0 %v1061
    %1063 = vmatprep.subr.mxu0 0.0
    %v1064 = vand.u32 %v77, 4294901760
    %1065 = vmatpush1.msra.mxu0 %v1064
    %1066 = vmatprep.subr.mxu0 0.0
    %v1067 = vand.u32 %v78, 4294901760
    %1068 = vmatpush1.msra.mxu0 %v1067
    %1069 = vmatprep.subr.mxu0 0.0
    %v1070 = vand.u32 %v79, 4294901760
    %1071 = vmatpush1.msra.mxu0 %v1070
    %1072 = vmatprep.subr.mxu0 0.0
    %v1073 = vand.u32 %v80, 4294901760
    %1074 = vmatpush1.msra.mxu0 %v1073
    %1075 = vmatprep.subr.mxu0 0.0
    %v1076 = vand.u32 %v81, 4294901760
    %1077 = vmatpush1.msra.mxu0 %v1076
    %1078 = vmatprep.subr.mxu0 0.0
    %v1079 = vand.u32 %v82, 4294901760
    %1080 = vmatpush1.msra.mxu0 %v1079
    %1081 = vmatprep.subr.mxu0 0.0
    %v1082 = vand.u32 %v83, 4294901760
    %1083 = vmatpush1.msra.mxu0 %v1082
    %1084 = vmatprep.subr.mxu0 0.0
    %v1085 = vand.u32 %v84, 4294901760
    %1086 = vmatpush1.msra.mxu0 %v1085
    %1087 = vmatprep.subr.mxu0 0.0
    %v1088 = vand.u32 %v85, 4294901760
    %1089 = vmatpush1.msra.mxu0 %v1088
    %1090 = vmatprep.subr.mxu0 0.0
    %v1091 = vand.u32 %v86, 4294901760
    %1092 = vmatpush1.msra.mxu0 %v1091
    %1093 = vmatprep.subr.mxu0 0.0
    %v1094 = vand.u32 %v87, 4294901760
    %1095 = vmatpush1.msra.mxu0 %v1094
    %1096 = vmatprep.subr.mxu0 0.0
    %v1097 = vand.u32 %v88, 4294901760
    %1098 = vmatpush1.msra.mxu0 %v1097
    %1099 = vmatprep.subr.mxu0 0.0
    %v1100 = vand.u32 %v89, 4294901760
    %1101 = vmatpush1.msra.mxu0 %v1100
    %1102 = vmatprep.subr.mxu0 0.0
    %v1103 = vand.u32 %v90, 4294901760
    %1104 = vmatpush1.msra.mxu0 %v1103
    %1105 = vmatprep.subr.mxu0 0.0
    %v1106 = vand.u32 %v91, 4294901760
    %1107 = vmatpush1.msra.mxu0 %v1106
    %1108 = vmatprep.subr.mxu0 0.0
    %v1109 = vand.u32 %v92, 4294901760
    %1110 = vmatpush1.msra.mxu0 %v1109
    %1111 = vmatprep.subr.mxu0 0.0
    %v1112 = vand.u32 %v93, 4294901760
    %1113 = vmatpush1.msra.mxu0 %v1112
    %1114 = vmatprep.subr.mxu0 0.0
    %v1115 = vand.u32 %v94, 4294901760
    %1116 = vmatpush1.msra.mxu0 %v1115
    %1117 = vmatprep.subr.mxu0 0.0
    %v1118 = vand.u32 %v95, 4294901760
    %1119 = vmatpush1.msra.mxu0 %v1118
    %1120 = vmatprep.subr.mxu0 0.0
    %v1121 = vand.u32 %v96, 4294901760
    %1122 = vmatpush1.msra.mxu0 %v1121
    %1123 = vmatprep.subr.mxu0 0.0
    %v1124 = vand.u32 %v97, 4294901760
    %1125 = vmatpush1.msra.mxu0 %v1124
    %1126 = vmatprep.subr.mxu0 0.0
    %v1127 = vand.u32 %v98, 4294901760
    %1128 = vmatpush1.msra.mxu0 %v1127
    %v1129 = vand.u32 %v156, 4294901760
    %v1130 = vsub.f32 %v156, %v1129
    %v1131 = vand.u32 %v1130, 4294901760
    %v1132 = vsub.f32 %v1130, %v1131
    %v1133 = vand.u32 %v1132, 4294901760
    %1134 = vmatprep.mubr.f32.mxu0 %v1133
    %v1135 = vand.u32 %v154, 4294901760
    %v1136 = vsub.f32 %v154, %v1135
    %v1137 = vand.u32 %v1136, 4294901760
    %v1138 = vsub.f32 %v1136, %v1137
    %v1139 = vand.u32 %v1138, 4294901760
    %1140 = vmatmul.mubr.f32.gmra.mrb[0].mxu0 %v1139
    %v1141 = vpop.f32.mrb[0].mxu0
    %v1142 = vadd.f32 %v1030, %v1141
    %v1143 = vpop.f32.mrb[0].mxu0
    %1144 = vdwg.mxu0
    %1145 = vmatprep.subr.mxu0 0.0
    %v1146 = vand.u32 %v67, 4294901760
    %v1147 = vsub.f32 %v67, %v1146
    %v1148 = vand.u32 %v1147, 4294901760
    %v1149 = vsub.f32 %v1147, %v1148
    %v1150 = vand.u32 %v1149, 4294901760
    %1151 = vmatpush1.msra.mxu0 %v1150
    %1152 = vmatprep.subr.mxu0 0.0
    %v1153 = vand.u32 %v68, 4294901760
    %v1154 = vsub.f32 %v68, %v1153
    %v1155 = vand.u32 %v1154, 4294901760
    %v1156 = vsub.f32 %v1154, %v1155
    %v1157 = vand.u32 %v1156, 4294901760
    %1158 = vmatpush1.msra.mxu0 %v1157
    %1159 = vmatprep.subr.mxu0 0.0
    %v1160 = vand.u32 %v69, 4294901760
    %v1161 = vsub.f32 %v69, %v1160
    %v1162 = vand.u32 %v1161, 4294901760
    %v1163 = vsub.f32 %v1161, %v1162
    %v1164 = vand.u32 %v1163, 4294901760
    %1165 = vmatpush1.msra.mxu0 %v1164
    %1166 = vmatprep.subr.mxu0 0.0
    %v1167 = vand.u32 %v70, 4294901760
    %v1168 = vsub.f32 %v70, %v1167
    %v1169 = vand.u32 %v1168, 4294901760
    %v1170 = vsub.f32 %v1168, %v1169
    %v1171 = vand.u32 %v1170, 4294901760
    %1172 = vmatpush1.msra.mxu0 %v1171
    %1173 = vmatprep.subr.mxu0 0.0
    %v1174 = vand.u32 %v71, 4294901760
    %v1175 = vsub.f32 %v71, %v1174
    %v1176 = vand.u32 %v1175, 4294901760
    %v1177 = vsub.f32 %v1175, %v1176
    %v1178 = vand.u32 %v1177, 4294901760
    %1179 = vmatpush1.msra.mxu0 %v1178
    %1180 = vmatprep.subr.mxu0 0.0
    %v1181 = vand.u32 %v72, 4294901760
    %v1182 = vsub.f32 %v72, %v1181
    %v1183 = vand.u32 %v1182, 4294901760
    %v1184 = vsub.f32 %v1182, %v1183
    %v1185 = vand.u32 %v1184, 4294901760
    %1186 = vmatpush1.msra.mxu0 %v1185
    %1187 = vmatprep.subr.mxu0 0.0
    %v1188 = vand.u32 %v73, 4294901760
    %v1189 = vsub.f32 %v73, %v1188
    %v1190 = vand.u32 %v1189, 4294901760
    %v1191 = vsub.f32 %v1189, %v1190
    %v1192 = vand.u32 %v1191, 4294901760
    %1193 = vmatpush1.msra.mxu0 %v1192
    %1194 = vmatprep.subr.mxu0 0.0
    %v1195 = vand.u32 %v74, 4294901760
    %v1196 = vsub.f32 %v74, %v1195
    %v1197 = vand.u32 %v1196, 4294901760
    %v1198 = vsub.f32 %v1196, %v1197
    %v1199 = vand.u32 %v1198, 4294901760
    %1200 = vmatpush1.msra.mxu0 %v1199
    %1201 = vmatprep.subr.mxu0 0.0
    %v1202 = vand.u32 %v75, 4294901760
    %v1203 = vsub.f32 %v75, %v1202
    %v1204 = vand.u32 %v1203, 4294901760
    %v1205 = vsub.f32 %v1203, %v1204
    %v1206 = vand.u32 %v1205, 4294901760
    %1207 = vmatpush1.msra.mxu0 %v1206
    %1208 = vmatprep.subr.mxu0 0.0
    %v1209 = vand.u32 %v76, 4294901760
    %v1210 = vsub.f32 %v76, %v1209
    %v1211 = vand.u32 %v1210, 4294901760
    %v1212 = vsub.f32 %v1210, %v1211
    %v1213 = vand.u32 %v1212, 4294901760
    %1214 = vmatpush1.msra.mxu0 %v1213
    %1215 = vmatprep.subr.mxu0 0.0
    %v1216 = vand.u32 %v77, 4294901760
    %v1217 = vsub.f32 %v77, %v1216
    %v1218 = vand.u32 %v1217, 4294901760
    %v1219 = vsub.f32 %v1217, %v1218
    %v1220 = vand.u32 %v1219, 4294901760
    %1221 = vmatpush1.msra.mxu0 %v1220
    %1222 = vmatprep.subr.mxu0 0.0
    %v1223 = vand.u32 %v78, 4294901760
    %v1224 = vsub.f32 %v78, %v1223
    %v1225 = vand.u32 %v1224, 4294901760
    %v1226 = vsub.f32 %v1224, %v1225
    %v1227 = vand.u32 %v1226, 4294901760
    %1228 = vmatpush1.msra.mxu0 %v1227
    %1229 = vmatprep.subr.mxu0 0.0
    %v1230 = vand.u32 %v79, 4294901760
    %v1231 = vsub.f32 %v79, %v1230
    %v1232 = vand.u32 %v1231, 4294901760
    %v1233 = vsub.f32 %v1231, %v1232
    %v1234 = vand.u32 %v1233, 4294901760
    %1235 = vmatpush1.msra.mxu0 %v1234
    %1236 = vmatprep.subr.mxu0 0.0
    %v1237 = vand.u32 %v80, 4294901760
    %v1238 = vsub.f32 %v80, %v1237
    %v1239 = vand.u32 %v1238, 4294901760
    %v1240 = vsub.f32 %v1238, %v1239
    %v1241 = vand.u32 %v1240, 4294901760
    %1242 = vmatpush1.msra.mxu0 %v1241
    %1243 = vmatprep.subr.mxu0 0.0
    %v1244 = vand.u32 %v81, 4294901760
    %v1245 = vsub.f32 %v81, %v1244
    %v1246 = vand.u32 %v1245, 4294901760
    %v1247 = vsub.f32 %v1245, %v1246
    %v1248 = vand.u32 %v1247, 4294901760
    %1249 = vmatpush1.msra.mxu0 %v1248
    %1250 = vmatprep.subr.mxu0 0.0
    %v1251 = vand.u32 %v82, 4294901760
    %v1252 = vsub.f32 %v82, %v1251
    %v1253 = vand.u32 %v1252, 4294901760
    %v1254 = vsub.f32 %v1252, %v1253
    %v1255 = vand.u32 %v1254, 4294901760
    %1256 = vmatpush1.msra.mxu0 %v1255
    %1257 = vmatprep.subr.mxu0 0.0
    %v1258 = vand.u32 %v83, 4294901760
    %v1259 = vsub.f32 %v83, %v1258
    %v1260 = vand.u32 %v1259, 4294901760
    %v1261 = vsub.f32 %v1259, %v1260
    %v1262 = vand.u32 %v1261, 4294901760
    %1263 = vmatpush1.msra.mxu0 %v1262
    %1264 = vmatprep.subr.mxu0 0.0
    %v1265 = vand.u32 %v84, 4294901760
    %v1266 = vsub.f32 %v84, %v1265
    %v1267 = vand.u32 %v1266, 4294901760
    %v1268 = vsub.f32 %v1266, %v1267
    %v1269 = vand.u32 %v1268, 4294901760
    %1270 = vmatpush1.msra.mxu0 %v1269
    %1271 = vmatprep.subr.mxu0 0.0
    %v1272 = vand.u32 %v85, 4294901760
    %v1273 = vsub.f32 %v85, %v1272
    %v1274 = vand.u32 %v1273, 4294901760
    %v1275 = vsub.f32 %v1273, %v1274
    %v1276 = vand.u32 %v1275, 4294901760
    %1277 = vmatpush1.msra.mxu0 %v1276
    %1278 = vmatprep.subr.mxu0 0.0
    %v1279 = vand.u32 %v86, 4294901760
    %v1280 = vsub.f32 %v86, %v1279
    %v1281 = vand.u32 %v1280, 4294901760
    %v1282 = vsub.f32 %v1280, %v1281
    %v1283 = vand.u32 %v1282, 4294901760
    %1284 = vmatpush1.msra.mxu0 %v1283
    %1285 = vmatprep.subr.mxu0 0.0
    %v1286 = vand.u32 %v87, 4294901760
    %v1287 = vsub.f32 %v87, %v1286
    %v1288 = vand.u32 %v1287, 4294901760
    %v1289 = vsub.f32 %v1287, %v1288
    %v1290 = vand.u32 %v1289, 4294901760
    %1291 = vmatpush1.msra.mxu0 %v1290
    %1292 = vmatprep.subr.mxu0 0.0
    %v1293 = vand.u32 %v88, 4294901760
    %v1294 = vsub.f32 %v88, %v1293
    %v1295 = vand.u32 %v1294, 4294901760
    %v1296 = vsub.f32 %v1294, %v1295
    %v1297 = vand.u32 %v1296, 4294901760
    %1298 = vmatpush1.msra.mxu0 %v1297
    %1299 = vmatprep.subr.mxu0 0.0
    %v1300 = vand.u32 %v89, 4294901760
    %v1301 = vsub.f32 %v89, %v1300
    %v1302 = vand.u32 %v1301, 4294901760
    %v1303 = vsub.f32 %v1301, %v1302
    %v1304 = vand.u32 %v1303, 4294901760
    %1305 = vmatpush1.msra.mxu0 %v1304
    %1306 = vmatprep.subr.mxu0 0.0
    %v1307 = vand.u32 %v90, 4294901760
    %v1308 = vsub.f32 %v90, %v1307
    %v1309 = vand.u32 %v1308, 4294901760
    %v1310 = vsub.f32 %v1308, %v1309
    %v1311 = vand.u32 %v1310, 4294901760
    %1312 = vmatpush1.msra.mxu0 %v1311
    %1313 = vmatprep.subr.mxu0 0.0
    %v1314 = vand.u32 %v91, 4294901760
    %v1315 = vsub.f32 %v91, %v1314
    %v1316 = vand.u32 %v1315, 4294901760
    %v1317 = vsub.f32 %v1315, %v1316
    %v1318 = vand.u32 %v1317, 4294901760
    %1319 = vmatpush1.msra.mxu0 %v1318
    %1320 = vmatprep.subr.mxu0 0.0
    %v1321 = vand.u32 %v92, 4294901760
    %v1322 = vsub.f32 %v92, %v1321
    %v1323 = vand.u32 %v1322, 4294901760
    %v1324 = vsub.f32 %v1322, %v1323
    %v1325 = vand.u32 %v1324, 4294901760
    %1326 = vmatpush1.msra.mxu0 %v1325
    %1327 = vmatprep.subr.mxu0 0.0
    %v1328 = vand.u32 %v93, 4294901760
    %v1329 = vsub.f32 %v93, %v1328
    %v1330 = vand.u32 %v1329, 4294901760
    %v1331 = vsub.f32 %v1329, %v1330
    %v1332 = vand.u32 %v1331, 4294901760
    %1333 = vmatpush1.msra.mxu0 %v1332
    %1334 = vmatprep.subr.mxu0 0.0
    %v1335 = vand.u32 %v94, 4294901760
    %v1336 = vsub.f32 %v94, %v1335
    %v1337 = vand.u32 %v1336, 4294901760
    %v1338 = vsub.f32 %v1336, %v1337
    %v1339 = vand.u32 %v1338, 4294901760
    %1340 = vmatpush1.msra.mxu0 %v1339
    %1341 = vmatprep.subr.mxu0 0.0
    %v1342 = vand.u32 %v95, 4294901760
    %v1343 = vsub.f32 %v95, %v1342
    %v1344 = vand.u32 %v1343, 4294901760
    %v1345 = vsub.f32 %v1343, %v1344
    %v1346 = vand.u32 %v1345, 4294901760
    %1347 = vmatpush1.msra.mxu0 %v1346
    %1348 = vmatprep.subr.mxu0 0.0
    %v1349 = vand.u32 %v96, 4294901760
    %v1350 = vsub.f32 %v96, %v1349
    %v1351 = vand.u32 %v1350, 4294901760
    %v1352 = vsub.f32 %v1350, %v1351
    %v1353 = vand.u32 %v1352, 4294901760
    %1354 = vmatpush1.msra.mxu0 %v1353
    %1355 = vmatprep.subr.mxu0 0.0
    %v1356 = vand.u32 %v97, 4294901760
    %v1357 = vsub.f32 %v97, %v1356
    %v1358 = vand.u32 %v1357, 4294901760
    %v1359 = vsub.f32 %v1357, %v1358
    %v1360 = vand.u32 %v1359, 4294901760
    %1361 = vmatpush1.msra.mxu0 %v1360
    %1362 = vmatprep.subr.mxu0 0.0
    %v1363 = vand.u32 %v98, 4294901760
    %v1364 = vsub.f32 %v98, %v1363
    %v1365 = vand.u32 %v1364, 4294901760
    %v1366 = vsub.f32 %v1364, %v1365
    %v1367 = vand.u32 %v1366, 4294901760
    %1368 = vmatpush1.msra.mxu0 %v1367
    %v1369 = vand.u32 %v156, 4294901760
    %1370 = vmatprep.mubr.f32.mxu0 %v1369
    %v1371 = vand.u32 %v154, 4294901760
    %1372 = vmatmul.mubr.f32.gmra.mrb[0].mxu0 %v1371
    %v1373 = vpop.f32.mrb[0].mxu0
    %v1374 = vadd.f32 %v1142, %v1373
    %v1375 = vpop.f32.mrb[0].mxu0
    %1376 = vdwg.mxu0
    %1377 = vmatprep.subr.mxu0 0.0
    %v1378 = vand.u32 %v67, 4294901760
    %v1379 = vsub.f32 %v67, %v1378
    %1380 = vmatpush1.msra.mxu0 %v1379
    %1381 = vmatprep.subr.mxu0 0.0
    %v1382 = vand.u32 %v68, 4294901760
    %v1383 = vsub.f32 %v68, %v1382
    %1384 = vmatpush1.msra.mxu0 %v1383
    %1385 = vmatprep.subr.mxu0 0.0
    %v1386 = vand.u32 %v69, 4294901760
    %v1387 = vsub.f32 %v69, %v1386
    %1388 = vmatpush1.msra.mxu0 %v1387
    %1389 = vmatprep.subr.mxu0 0.0
    %v1390 = vand.u32 %v70, 4294901760
    %v1391 = vsub.f32 %v70, %v1390
    %1392 = vmatpush1.msra.mxu0 %v1391
    %1393 = vmatprep.subr.mxu0 0.0
    %v1394 = vand.u32 %v71, 4294901760
    %v1395 = vsub.f32 %v71, %v1394
    %1396 = vmatpush1.msra.mxu0 %v1395
    %1397 = vmatprep.subr.mxu0 0.0
    %v1398 = vand.u32 %v72, 4294901760
    %v1399 = vsub.f32 %v72, %v1398
    %1400 = vmatpush1.msra.mxu0 %v1399
    %1401 = vmatprep.subr.mxu0 0.0
    %v1402 = vand.u32 %v73, 4294901760
    %v1403 = vsub.f32 %v73, %v1402
    %1404 = vmatpush1.msra.mxu0 %v1403
    %1405 = vmatprep.subr.mxu0 0.0
    %v1406 = vand.u32 %v74, 4294901760
    %v1407 = vsub.f32 %v74, %v1406
    %1408 = vmatpush1.msra.mxu0 %v1407
    %1409 = vmatprep.subr.mxu0 0.0
    %v1410 = vand.u32 %v75, 4294901760
    %v1411 = vsub.f32 %v75, %v1410
    %1412 = vmatpush1.msra.mxu0 %v1411
    %1413 = vmatprep.subr.mxu0 0.0
    %v1414 = vand.u32 %v76, 4294901760
    %v1415 = vsub.f32 %v76, %v1414
    %1416 = vmatpush1.msra.mxu0 %v1415
    %1417 = vmatprep.subr.mxu0 0.0
    %v1418 = vand.u32 %v77, 4294901760
    %v1419 = vsub.f32 %v77, %v1418
    %1420 = vmatpush1.msra.mxu0 %v1419
    %1421 = vmatprep.subr.mxu0 0.0
    %v1422 = vand.u32 %v78, 4294901760
    %v1423 = vsub.f32 %v78, %v1422
    %1424 = vmatpush1.msra.mxu0 %v1423
    %1425 = vmatprep.subr.mxu0 0.0
    %v1426 = vand.u32 %v79, 4294901760
    %v1427 = vsub.f32 %v79, %v1426
    %1428 = vmatpush1.msra.mxu0 %v1427
    %1429 = vmatprep.subr.mxu0 0.0
    %v1430 = vand.u32 %v80, 4294901760
    %v1431 = vsub.f32 %v80, %v1430
    %1432 = vmatpush1.msra.mxu0 %v1431
    %1433 = vmatprep.subr.mxu0 0.0
    %v1434 = vand.u32 %v81, 4294901760
    %v1435 = vsub.f32 %v81, %v1434
    %1436 = vmatpush1.msra.mxu0 %v1435
    %1437 = vmatprep.subr.mxu0 0.0
    %v1438 = vand.u32 %v82, 4294901760
    %v1439 = vsub.f32 %v82, %v1438
    %1440 = vmatpush1.msra.mxu0 %v1439
    %1441 = vmatprep.subr.mxu0 0.0
    %v1442 = vand.u32 %v83, 4294901760
    %v1443 = vsub.f32 %v83, %v1442
    %1444 = vmatpush1.msra.mxu0 %v1443
    %1445 = vmatprep.subr.mxu0 0.0
    %v1446 = vand.u32 %v84, 4294901760
    %v1447 = vsub.f32 %v84, %v1446
    %1448 = vmatpush1.msra.mxu0 %v1447
    %1449 = vmatprep.subr.mxu0 0.0
    %v1450 = vand.u32 %v85, 4294901760
    %v1451 = vsub.f32 %v85, %v1450
    %1452 = vmatpush1.msra.mxu0 %v1451
    %1453 = vmatprep.subr.mxu0 0.0
    %v1454 = vand.u32 %v86, 4294901760
    %v1455 = vsub.f32 %v86, %v1454
    %1456 = vmatpush1.msra.mxu0 %v1455
    %1457 = vmatprep.subr.mxu0 0.0
    %v1458 = vand.u32 %v87, 4294901760
    %v1459 = vsub.f32 %v87, %v1458
    %1460 = vmatpush1.msra.mxu0 %v1459
    %1461 = vmatprep.subr.mxu0 0.0
    %v1462 = vand.u32 %v88, 4294901760
    %v1463 = vsub.f32 %v88, %v1462
    %1464 = vmatpush1.msra.mxu0 %v1463
    %1465 = vmatprep.subr.mxu0 0.0
    %v1466 = vand.u32 %v89, 4294901760
    %v1467 = vsub.f32 %v89, %v1466
    %1468 = vmatpush1.msra.mxu0 %v1467
    %1469 = vmatprep.subr.mxu0 0.0
    %v1470 = vand.u32 %v90, 4294901760
    %v1471 = vsub.f32 %v90, %v1470
    %1472 = vmatpush1.msra.mxu0 %v1471
    %1473 = vmatprep.subr.mxu0 0.0
    %v1474 = vand.u32 %v91, 4294901760
    %v1475 = vsub.f32 %v91, %v1474
    %1476 = vmatpush1.msra.mxu0 %v1475
    %1477 = vmatprep.subr.mxu0 0.0
    %v1478 = vand.u32 %v92, 4294901760
    %v1479 = vsub.f32 %v92, %v1478
    %1480 = vmatpush1.msra.mxu0 %v1479
    %1481 = vmatprep.subr.mxu0 0.0
    %v1482 = vand.u32 %v93, 4294901760
    %v1483 = vsub.f32 %v93, %v1482
    %1484 = vmatpush1.msra.mxu0 %v1483
    %1485 = vmatprep.subr.mxu0 0.0
    %v1486 = vand.u32 %v94, 4294901760
    %v1487 = vsub.f32 %v94, %v1486
    %1488 = vmatpush1.msra.mxu0 %v1487
    %1489 = vmatprep.subr.mxu0 0.0
    %v1490 = vand.u32 %v95, 4294901760
    %v1491 = vsub.f32 %v95, %v1490
    %1492 = vmatpush1.msra.mxu0 %v1491
    %1493 = vmatprep.subr.mxu0 0.0
    %v1494 = vand.u32 %v96, 4294901760
    %v1495 = vsub.f32 %v96, %v1494
    %1496 = vmatpush1.msra.mxu0 %v1495
    %1497 = vmatprep.subr.mxu0 0.0
    %v1498 = vand.u32 %v97, 4294901760
    %v1499 = vsub.f32 %v97, %v1498
    %1500 = vmatpush1.msra.mxu0 %v1499
    %1501 = vmatprep.subr.mxu0 0.0
    %v1502 = vand.u32 %v98, 4294901760
    %v1503 = vsub.f32 %v98, %v1502
    %1504 = vmatpush1.msra.mxu0 %v1503
    %v1505 = vand.u32 %v156, 4294901760
    %v1506 = vsub.f32 %v156, %v1505
    %1507 = vmatprep.mubr.f32.mxu0 %v1506
    %v1508 = vand.u32 %v154, 4294901760
    %v1509 = vsub.f32 %v154, %v1508
    %1510 = vmatmul.mubr.f32.gmra.mrb[0].mxu0 %v1509
    %v1511 = vpop.f32.mrb[0].mxu0
    %v1512 = vadd.f32 %v1374, %v1511
    %v1513 = vpop.f32.mrb[0].mxu0
    %1514 = vdwg.mxu0
    %1515 = vmatprep.subr.mxu0 0.0
    %v1516 = vand.u32 %v67, 4294901760
    %1517 = vmatpush1.msra.mxu0 %v1516
    %1518 = vmatprep.subr.mxu0 0.0
    %v1519 = vand.u32 %v68, 4294901760
    %1520 = vmatpush1.msra.mxu0 %v1519
    %1521 = vmatprep.subr.mxu0 0.0
    %v1522 = vand.u32 %v69, 4294901760
    %1523 = vmatpush1.msra.mxu0 %v1522
    %1524 = vmatprep.subr.mxu0 0.0
    %v1525 = vand.u32 %v70, 4294901760
    %1526 = vmatpush1.msra.mxu0 %v1525
    %1527 = vmatprep.subr.mxu0 0.0
    %v1528 = vand.u32 %v71, 4294901760
    %1529 = vmatpush1.msra.mxu0 %v1528
    %1530 = vmatprep.subr.mxu0 0.0
    %v1531 = vand.u32 %v72, 4294901760
    %1532 = vmatpush1.msra.mxu0 %v1531
    %1533 = vmatprep.subr.mxu0 0.0
    %v1534 = vand.u32 %v73, 4294901760
    %1535 = vmatpush1.msra.mxu0 %v1534
    %1536 = vmatprep.subr.mxu0 0.0
    %v1537 = vand.u32 %v74, 4294901760
    %1538 = vmatpush1.msra.mxu0 %v1537
    %1539 = vmatprep.subr.mxu0 0.0
    %v1540 = vand.u32 %v75, 4294901760
    %1541 = vmatpush1.msra.mxu0 %v1540
    %1542 = vmatprep.subr.mxu0 0.0
    %v1543 = vand.u32 %v76, 4294901760
    %1544 = vmatpush1.msra.mxu0 %v1543
    %1545 = vmatprep.subr.mxu0 0.0
    %v1546 = vand.u32 %v77, 4294901760
    %1547 = vmatpush1.msra.mxu0 %v1546
    %1548 = vmatprep.subr.mxu0 0.0
    %v1549 = vand.u32 %v78, 4294901760
    %1550 = vmatpush1.msra.mxu0 %v1549
    %1551 = vmatprep.subr.mxu0 0.0
    %v1552 = vand.u32 %v79, 4294901760
    %1553 = vmatpush1.msra.mxu0 %v1552
    %1554 = vmatprep.subr.mxu0 0.0
    %v1555 = vand.u32 %v80, 4294901760
    %1556 = vmatpush1.msra.mxu0 %v1555
    %1557 = vmatprep.subr.mxu0 0.0
    %v1558 = vand.u32 %v81, 4294901760
    %1559 = vmatpush1.msra.mxu0 %v1558
    %1560 = vmatprep.subr.mxu0 0.0
    %v1561 = vand.u32 %v82, 4294901760
    %1562 = vmatpush1.msra.mxu0 %v1561
    %1563 = vmatprep.subr.mxu0 0.0
    %v1564 = vand.u32 %v83, 4294901760
    %1565 = vmatpush1.msra.mxu0 %v1564
    %1566 = vmatprep.subr.mxu0 0.0
    %v1567 = vand.u32 %v84, 4294901760
    %1568 = vmatpush1.msra.mxu0 %v1567
    %1569 = vmatprep.subr.mxu0 0.0
    %v1570 = vand.u32 %v85, 4294901760
    %1571 = vmatpush1.msra.mxu0 %v1570
    %1572 = vmatprep.subr.mxu0 0.0
    %v1573 = vand.u32 %v86, 4294901760
    %1574 = vmatpush1.msra.mxu0 %v1573
    %1575 = vmatprep.subr.mxu0 0.0
    %v1576 = vand.u32 %v87, 4294901760
    %1577 = vmatpush1.msra.mxu0 %v1576
    %1578 = vmatprep.subr.mxu0 0.0
    %v1579 = vand.u32 %v88, 4294901760
    %1580 = vmatpush1.msra.mxu0 %v1579
    %1581 = vmatprep.subr.mxu0 0.0
    %v1582 = vand.u32 %v89, 4294901760
    %1583 = vmatpush1.msra.mxu0 %v1582
    %1584 = vmatprep.subr.mxu0 0.0
    %v1585 = vand.u32 %v90, 4294901760
    %1586 = vmatpush1.msra.mxu0 %v1585
    %1587 = vmatprep.subr.mxu0 0.0
    %v1588 = vand.u32 %v91, 4294901760
    %1589 = vmatpush1.msra.mxu0 %v1588
    %1590 = vmatprep.subr.mxu0 0.0
    %v1591 = vand.u32 %v92, 4294901760
    %1592 = vmatpush1.msra.mxu0 %v1591
    %1593 = vmatprep.subr.mxu0 0.0
    %v1594 = vand.u32 %v93, 4294901760
    %1595 = vmatpush1.msra.mxu0 %v1594
    %1596 = vmatprep.subr.mxu0 0.0
    %v1597 = vand.u32 %v94, 4294901760
    %1598 = vmatpush1.msra.mxu0 %v1597
    %1599 = vmatprep.subr.mxu0 0.0
    %v1600 = vand.u32 %v95, 4294901760
    %1601 = vmatpush1.msra.mxu0 %v1600
    %1602 = vmatprep.subr.mxu0 0.0
    %v1603 = vand.u32 %v96, 4294901760
    %1604 = vmatpush1.msra.mxu0 %v1603
    %1605 = vmatprep.subr.mxu0 0.0
    %v1606 = vand.u32 %v97, 4294901760
    %1607 = vmatpush1.msra.mxu0 %v1606
    %1608 = vmatprep.subr.mxu0 0.0
    %v1609 = vand.u32 %v98, 4294901760
    %1610 = vmatpush1.msra.mxu0 %v1609
    %v1611 = vand.u32 %v156, 4294901760
    %v1612 = vsub.f32 %v156, %v1611
    %v1613 = vand.u32 %v1612, 4294901760
    %1614 = vmatprep.mubr.f32.mxu0 %v1613
    %v1615 = vand.u32 %v154, 4294901760
    %v1616 = vsub.f32 %v154, %v1615
    %v1617 = vand.u32 %v1616, 4294901760
    %1618 = vmatmul.mubr.f32.gmra.mrb[0].mxu0 %v1617
    %v1619 = vpop.f32.mrb[0].mxu0
    %v1620 = vadd.f32 %v1512, %v1619
    %v1621 = vpop.f32.mrb[0].mxu0
    %1622 = vdwg.mxu0
    %1623 = vmatprep.subr.mxu0 0.0
    %v1624 = vand.u32 %v67, 4294901760
    %v1625 = vsub.f32 %v67, %v1624
    %v1626 = vand.u32 %v1625, 4294901760
    %1627 = vmatpush1.msra.mxu0 %v1626
    %1628 = vmatprep.subr.mxu0 0.0
    %v1629 = vand.u32 %v68, 4294901760
    %v1630 = vsub.f32 %v68, %v1629
    %v1631 = vand.u32 %v1630, 4294901760
    %1632 = vmatpush1.msra.mxu0 %v1631
    %1633 = vmatprep.subr.mxu0 0.0
    %v1634 = vand.u32 %v69, 4294901760
    %v1635 = vsub.f32 %v69, %v1634
    %v1636 = vand.u32 %v1635, 4294901760
    %1637 = vmatpush1.msra.mxu0 %v1636
    %1638 = vmatprep.subr.mxu0 0.0
    %v1639 = vand.u32 %v70, 4294901760
    %v1640 = vsub.f32 %v70, %v1639
    %v1641 = vand.u32 %v1640, 4294901760
    %1642 = vmatpush1.msra.mxu0 %v1641
    %1643 = vmatprep.subr.mxu0 0.0
    %v1644 = vand.u32 %v71, 4294901760
    %v1645 = vsub.f32 %v71, %v1644
    %v1646 = vand.u32 %v1645, 4294901760
    %1647 = vmatpush1.msra.mxu0 %v1646
    %1648 = vmatprep.subr.mxu0 0.0
    %v1649 = vand.u32 %v72, 4294901760
    %v1650 = vsub.f32 %v72, %v1649
    %v1651 = vand.u32 %v1650, 4294901760
    %1652 = vmatpush1.msra.mxu0 %v1651
    %1653 = vmatprep.subr.mxu0 0.0
    %v1654 = vand.u32 %v73, 4294901760
    %v1655 = vsub.f32 %v73, %v1654
    %v1656 = vand.u32 %v1655, 4294901760
    %1657 = vmatpush1.msra.mxu0 %v1656
    %1658 = vmatprep.subr.mxu0 0.0
    %v1659 = vand.u32 %v74, 4294901760
    %v1660 = vsub.f32 %v74, %v1659
    %v1661 = vand.u32 %v1660, 4294901760
    %1662 = vmatpush1.msra.mxu0 %v1661
    %1663 = vmatprep.subr.mxu0 0.0
    %v1664 = vand.u32 %v75, 4294901760
    %v1665 = vsub.f32 %v75, %v1664
    %v1666 = vand.u32 %v1665, 4294901760
    %1667 = vmatpush1.msra.mxu0 %v1666
    %1668 = vmatprep.subr.mxu0 0.0
    %v1669 = vand.u32 %v76, 4294901760
    %v1670 = vsub.f32 %v76, %v1669
    %v1671 = vand.u32 %v1670, 4294901760
    %1672 = vmatpush1.msra.mxu0 %v1671
    %1673 = vmatprep.subr.mxu0 0.0
    %v1674 = vand.u32 %v77, 4294901760
    %v1675 = vsub.f32 %v77, %v1674
    %v1676 = vand.u32 %v1675, 4294901760
    %1677 = vmatpush1.msra.mxu0 %v1676
    %1678 = vmatprep.subr.mxu0 0.0
    %v1679 = vand.u32 %v78, 4294901760
    %v1680 = vsub.f32 %v78, %v1679
    %v1681 = vand.u32 %v1680, 4294901760
    %1682 = vmatpush1.msra.mxu0 %v1681
    %1683 = vmatprep.subr.mxu0 0.0
    %v1684 = vand.u32 %v79, 4294901760
    %v1685 = vsub.f32 %v79, %v1684
    %v1686 = vand.u32 %v1685, 4294901760
    %1687 = vmatpush1.msra.mxu0 %v1686
    %1688 = vmatprep.subr.mxu0 0.0
    %v1689 = vand.u32 %v80, 4294901760
    %v1690 = vsub.f32 %v80, %v1689
    %v1691 = vand.u32 %v1690, 4294901760
    %1692 = vmatpush1.msra.mxu0 %v1691
    %1693 = vmatprep.subr.mxu0 0.0
    %v1694 = vand.u32 %v81, 4294901760
    %v1695 = vsub.f32 %v81, %v1694
    %v1696 = vand.u32 %v1695, 4294901760
    %1697 = vmatpush1.msra.mxu0 %v1696
    %1698 = vmatprep.subr.mxu0 0.0
    %v1699 = vand.u32 %v82, 4294901760
    %v1700 = vsub.f32 %v82, %v1699
    %v1701 = vand.u32 %v1700, 4294901760
    %1702 = vmatpush1.msra.mxu0 %v1701
    %1703 = vmatprep.subr.mxu0 0.0
    %v1704 = vand.u32 %v83, 4294901760
    %v1705 = vsub.f32 %v83, %v1704
    %v1706 = vand.u32 %v1705, 4294901760
    %1707 = vmatpush1.msra.mxu0 %v1706
    %1708 = vmatprep.subr.mxu0 0.0
    %v1709 = vand.u32 %v84, 4294901760
    %v1710 = vsub.f32 %v84, %v1709
    %v1711 = vand.u32 %v1710, 4294901760
    %1712 = vmatpush1.msra.mxu0 %v1711
    %1713 = vmatprep.subr.mxu0 0.0
    %v1714 = vand.u32 %v85, 4294901760
    %v1715 = vsub.f32 %v85, %v1714
    %v1716 = vand.u32 %v1715, 4294901760
    %1717 = vmatpush1.msra.mxu0 %v1716
    %1718 = vmatprep.subr.mxu0 0.0
    %v1719 = vand.u32 %v86, 4294901760
    %v1720 = vsub.f32 %v86, %v1719
    %v1721 = vand.u32 %v1720, 4294901760
    %1722 = vmatpush1.msra.mxu0 %v1721
    %1723 = vmatprep.subr.mxu0 0.0
    %v1724 = vand.u32 %v87, 4294901760
    %v1725 = vsub.f32 %v87, %v1724
    %v1726 = vand.u32 %v1725, 4294901760
    %1727 = vmatpush1.msra.mxu0 %v1726
    %1728 = vmatprep.subr.mxu0 0.0
    %v1729 = vand.u32 %v88, 4294901760
    %v1730 = vsub.f32 %v88, %v1729
    %v1731 = vand.u32 %v1730, 4294901760
    %1732 = vmatpush1.msra.mxu0 %v1731
    %1733 = vmatprep.subr.mxu0 0.0
    %v1734 = vand.u32 %v89, 4294901760
    %v1735 = vsub.f32 %v89, %v1734
    %v1736 = vand.u32 %v1735, 4294901760
    %1737 = vmatpush1.msra.mxu0 %v1736
    %1738 = vmatprep.subr.mxu0 0.0
    %v1739 = vand.u32 %v90, 4294901760
    %v1740 = vsub.f32 %v90, %v1739
    %v1741 = vand.u32 %v1740, 4294901760
    %1742 = vmatpush1.msra.mxu0 %v1741
    %1743 = vmatprep.subr.mxu0 0.0
    %v1744 = vand.u32 %v91, 4294901760
    %v1745 = vsub.f32 %v91, %v1744
    %v1746 = vand.u32 %v1745, 4294901760
    %1747 = vmatpush1.msra.mxu0 %v1746
    %1748 = vmatprep.subr.mxu0 0.0
    %v1749 = vand.u32 %v92, 4294901760
    %v1750 = vsub.f32 %v92, %v1749
    %v1751 = vand.u32 %v1750, 4294901760
    %1752 = vmatpush1.msra.mxu0 %v1751
    %1753 = vmatprep.subr.mxu0 0.0
    %v1754 = vand.u32 %v93, 4294901760
    %v1755 = vsub.f32 %v93, %v1754
    %v1756 = vand.u32 %v1755, 4294901760
    %1757 = vmatpush1.msra.mxu0 %v1756
    %1758 = vmatprep.subr.mxu0 0.0
    %v1759 = vand.u32 %v94, 4294901760
    %v1760 = vsub.f32 %v94, %v1759
    %v1761 = vand.u32 %v1760, 4294901760
    %1762 = vmatpush1.msra.mxu0 %v1761
    %1763 = vmatprep.subr.mxu0 0.0
    %v1764 = vand.u32 %v95, 4294901760
    %v1765 = vsub.f32 %v95, %v1764
    %v1766 = vand.u32 %v1765, 4294901760
    %1767 = vmatpush1.msra.mxu0 %v1766
    %1768 = vmatprep.subr.mxu0 0.0
    %v1769 = vand.u32 %v96, 4294901760
    %v1770 = vsub.f32 %v96, %v1769
    %v1771 = vand.u32 %v1770, 4294901760
    %1772 = vmatpush1.msra.mxu0 %v1771
    %1773 = vmatprep.subr.mxu0 0.0
    %v1774 = vand.u32 %v97, 4294901760
    %v1775 = vsub.f32 %v97, %v1774
    %v1776 = vand.u32 %v1775, 4294901760
    %1777 = vmatpush1.msra.mxu0 %v1776
    %1778 = vmatprep.subr.mxu0 0.0
    %v1779 = vand.u32 %v98, 4294901760
    %v1780 = vsub.f32 %v98, %v1779
    %v1781 = vand.u32 %v1780, 4294901760
    %1782 = vmatpush1.msra.mxu0 %v1781
    %v1783 = vand.u32 %v156, 4294901760
    %1784 = vmatprep.mubr.f32.mxu0 %v1783
    %v1785 = vand.u32 %v154, 4294901760
    %1786 = vmatmul.mubr.f32.gmra.mrb[0].mxu0 %v1785
    %v1787 = vpop.f32.mrb[0].mxu0
    %v1788 = vadd.f32 %v1620, %v1787
    %v1789 = vpop.f32.mrb[0].mxu0
    %1790 = vdwg.mxu0
    %1791 = vmatprep.subr.mxu0 0.0
    %v1792 = vand.u32 %v67, 4294901760
    %1793 = vmatpush1.msra.mxu0 %v1792
    %1794 = vmatprep.subr.mxu0 0.0
    %v1795 = vand.u32 %v68, 4294901760
    %1796 = vmatpush1.msra.mxu0 %v1795
    %1797 = vmatprep.subr.mxu0 0.0
    %v1798 = vand.u32 %v69, 4294901760
    %1799 = vmatpush1.msra.mxu0 %v1798
    %1800 = vmatprep.subr.mxu0 0.0
    %v1801 = vand.u32 %v70, 4294901760
    %1802 = vmatpush1.msra.mxu0 %v1801
    %1803 = vmatprep.subr.mxu0 0.0
    %v1804 = vand.u32 %v71, 4294901760
    %1805 = vmatpush1.msra.mxu0 %v1804
    %1806 = vmatprep.subr.mxu0 0.0
    %v1807 = vand.u32 %v72, 4294901760
    %1808 = vmatpush1.msra.mxu0 %v1807
    %1809 = vmatprep.subr.mxu0 0.0
    %v1810 = vand.u32 %v73, 4294901760
    %1811 = vmatpush1.msra.mxu0 %v1810
    %1812 = vmatprep.subr.mxu0 0.0
    %v1813 = vand.u32 %v74, 4294901760
    %1814 = vmatpush1.msra.mxu0 %v1813
    %1815 = vmatprep.subr.mxu0 0.0
    %v1816 = vand.u32 %v75, 4294901760
    %1817 = vmatpush1.msra.mxu0 %v1816
    %1818 = vmatprep.subr.mxu0 0.0
    %v1819 = vand.u32 %v76, 4294901760
    %1820 = vmatpush1.msra.mxu0 %v1819
    %1821 = vmatprep.subr.mxu0 0.0
    %v1822 = vand.u32 %v77, 4294901760
    %1823 = vmatpush1.msra.mxu0 %v1822
    %1824 = vmatprep.subr.mxu0 0.0
    %v1825 = vand.u32 %v78, 4294901760
    %1826 = vmatpush1.msra.mxu0 %v1825
    %1827 = vmatprep.subr.mxu0 0.0
    %v1828 = vand.u32 %v79, 4294901760
    %1829 = vmatpush1.msra.mxu0 %v1828
    %1830 = vmatprep.subr.mxu0 0.0
    %v1831 = vand.u32 %v80, 4294901760
    %1832 = vmatpush1.msra.mxu0 %v1831
    %1833 = vmatprep.subr.mxu0 0.0
    %v1834 = vand.u32 %v81, 4294901760
    %1835 = vmatpush1.msra.mxu0 %v1834
    %1836 = vmatprep.subr.mxu0 0.0
    %v1837 = vand.u32 %v82, 4294901760
    %1838 = vmatpush1.msra.mxu0 %v1837
    %1839 = vmatprep.subr.mxu0 0.0
    %v1840 = vand.u32 %v83, 4294901760
    %1841 = vmatpush1.msra.mxu0 %v1840
    %1842 = vmatprep.subr.mxu0 0.0
    %v1843 = vand.u32 %v84, 4294901760
    %1844 = vmatpush1.msra.mxu0 %v1843
    %1845 = vmatprep.subr.mxu0 0.0
    %v1846 = vand.u32 %v85, 4294901760
    %1847 = vmatpush1.msra.mxu0 %v1846
    %1848 = vmatprep.subr.mxu0 0.0
    %v1849 = vand.u32 %v86, 4294901760
    %1850 = vmatpush1.msra.mxu0 %v1849
    %1851 = vmatprep.subr.mxu0 0.0
    %v1852 = vand.u32 %v87, 4294901760
    %1853 = vmatpush1.msra.mxu0 %v1852
    %1854 = vmatprep.subr.mxu0 0.0
    %v1855 = vand.u32 %v88, 4294901760
    %1856 = vmatpush1.msra.mxu0 %v1855
    %1857 = vmatprep.subr.mxu0 0.0
    %v1858 = vand.u32 %v89, 4294901760
    %1859 = vmatpush1.msra.mxu0 %v1858
    %1860 = vmatprep.subr.mxu0 0.0
    %v1861 = vand.u32 %v90, 4294901760
    %1862 = vmatpush1.msra.mxu0 %v1861
    %1863 = vmatprep.subr.mxu0 0.0
    %v1864 = vand.u32 %v91, 4294901760
    %1865 = vmatpush1.msra.mxu0 %v1864
    %1866 = vmatprep.subr.mxu0 0.0
    %v1867 = vand.u32 %v92, 4294901760
    %1868 = vmatpush1.msra.mxu0 %v1867
    %1869 = vmatprep.subr.mxu0 0.0
    %v1870 = vand.u32 %v93, 4294901760
    %1871 = vmatpush1.msra.mxu0 %v1870
    %1872 = vmatprep.subr.mxu0 0.0
    %v1873 = vand.u32 %v94, 4294901760
    %1874 = vmatpush1.msra.mxu0 %v1873
    %1875 = vmatprep.subr.mxu0 0.0
    %v1876 = vand.u32 %v95, 4294901760
    %1877 = vmatpush1.msra.mxu0 %v1876
    %1878 = vmatprep.subr.mxu0 0.0
    %v1879 = vand.u32 %v96, 4294901760
    %1880 = vmatpush1.msra.mxu0 %v1879
    %1881 = vmatprep.subr.mxu0 0.0
    %v1882 = vand.u32 %v97, 4294901760
    %1883 = vmatpush1.msra.mxu0 %v1882
    %1884 = vmatprep.subr.mxu0 0.0
    %v1885 = vand.u32 %v98, 4294901760
    %1886 = vmatpush1.msra.mxu0 %v1885
    %v1887 = vand.u32 %v156, 4294901760
    %1888 = vmatprep.mubr.f32.mxu0 %v1887
    %v1889 = vand.u32 %v154, 4294901760
    %1890 = vmatmul.mubr.f32.gmra.mrb[0].mxu0 %v1889
    %v1891 = vpop.f32.mrb[0].mxu0
    %v1892 = vadd.f32 %v1788, %v1891
    %v1893 = vpop.f32.mrb[0].mxu0
    %1894 = vdwg.mxu0
    %1895 = vmatprep.subr.mxu0 0.0
    %v1896 = vand.u32 %v99, 4294901760
    %1897 = vmatpush1.msra.mxu0 %v1896
    %1898 = vmatprep.subr.mxu0 0.0
    %v1899 = vand.u32 %v100, 4294901760
    %1900 = vmatpush1.msra.mxu0 %v1899
    %1901 = vmatprep.subr.mxu0 0.0
    %v1902 = vand.u32 %v101, 4294901760
    %1903 = vmatpush1.msra.mxu0 %v1902
    %1904 = vmatprep.subr.mxu0 0.0
    %v1905 = vand.u32 %v102, 4294901760
    %1906 = vmatpush1.msra.mxu0 %v1905
    %1907 = vmatprep.subr.mxu0 0.0
    %v1908 = vand.u32 %v103, 4294901760
    %1909 = vmatpush1.msra.mxu0 %v1908
    %1910 = vmatprep.subr.mxu0 0.0
    %v1911 = vand.u32 %v104, 4294901760
    %1912 = vmatpush1.msra.mxu0 %v1911
    %1913 = vmatprep.subr.mxu0 0.0
    %v1914 = vand.u32 %v105, 4294901760
    %1915 = vmatpush1.msra.mxu0 %v1914
    %1916 = vmatprep.subr.mxu0 0.0
    %v1917 = vand.u32 %v106, 4294901760
    %1918 = vmatpush1.msra.mxu0 %v1917
    %1919 = vmatprep.subr.mxu0 0.0
    %v1920 = vand.u32 %v107, 4294901760
    %1921 = vmatpush1.msra.mxu0 %v1920
    %1922 = vmatprep.subr.mxu0 0.0
    %v1923 = vand.u32 %v108, 4294901760
    %1924 = vmatpush1.msra.mxu0 %v1923
    %1925 = vmatprep.subr.mxu0 0.0
    %v1926 = vand.u32 %v109, 4294901760
    %1927 = vmatpush1.msra.mxu0 %v1926
    %1928 = vmatprep.subr.mxu0 0.0
    %v1929 = vand.u32 %v110, 4294901760
    %1930 = vmatpush1.msra.mxu0 %v1929
    %1931 = vmatprep.subr.mxu0 0.0
    %v1932 = vand.u32 %v111, 4294901760
    %1933 = vmatpush1.msra.mxu0 %v1932
    %1934 = vmatprep.subr.mxu0 0.0
    %v1935 = vand.u32 %v112, 4294901760
    %1936 = vmatpush1.msra.mxu0 %v1935
    %1937 = vmatprep.subr.mxu0 0.0
    %v1938 = vand.u32 %v113, 4294901760
    %1939 = vmatpush1.msra.mxu0 %v1938
    %1940 = vmatprep.subr.mxu0 0.0
    %v1941 = vand.u32 %v114, 4294901760
    %1942 = vmatpush1.msra.mxu0 %v1941
    %1943 = vmatprep.subr.mxu0 0.0
    %v1944 = vand.u32 %v115, 4294901760
    %1945 = vmatpush1.msra.mxu0 %v1944
    %1946 = vmatprep.subr.mxu0 0.0
    %v1947 = vand.u32 %v116, 4294901760
    %1948 = vmatpush1.msra.mxu0 %v1947
    %1949 = vmatprep.subr.mxu0 0.0
    %v1950 = vand.u32 %v117, 4294901760
    %1951 = vmatpush1.msra.mxu0 %v1950
    %1952 = vmatprep.subr.mxu0 0.0
    %v1953 = vand.u32 %v118, 4294901760
    %1954 = vmatpush1.msra.mxu0 %v1953
    %1955 = vmatprep.subr.mxu0 0.0
    %v1956 = vand.u32 %v119, 4294901760
    %1957 = vmatpush1.msra.mxu0 %v1956
    %1958 = vmatprep.subr.mxu0 0.0
    %v1959 = vand.u32 %v120, 4294901760
    %1960 = vmatpush1.msra.mxu0 %v1959
    %1961 = vmatprep.subr.mxu0 0.0
    %v1962 = vand.u32 %v121, 4294901760
    %1963 = vmatpush1.msra.mxu0 %v1962
    %1964 = vmatprep.subr.mxu0 0.0
    %v1965 = vand.u32 %v122, 4294901760
    %1966 = vmatpush1.msra.mxu0 %v1965
    %1967 = vmatprep.subr.mxu0 0.0
    %v1968 = vand.u32 %v123, 4294901760
    %1969 = vmatpush1.msra.mxu0 %v1968
    %1970 = vmatprep.subr.mxu0 0.0
    %v1971 = vand.u32 %v124, 4294901760
    %1972 = vmatpush1.msra.mxu0 %v1971
    %1973 = vmatprep.subr.mxu0 0.0
    %v1974 = vand.u32 %v125, 4294901760
    %1975 = vmatpush1.msra.mxu0 %v1974
    %1976 = vmatprep.subr.mxu0 0.0
    %v1977 = vand.u32 %v126, 4294901760
    %1978 = vmatpush1.msra.mxu0 %v1977
    %1979 = vmatprep.subr.mxu0 0.0
    %v1980 = vand.u32 %v127, 4294901760
    %1981 = vmatpush1.msra.mxu0 %v1980
    %1982 = vmatprep.subr.mxu0 0.0
    %v1983 = vand.u32 %v128, 4294901760
    %1984 = vmatpush1.msra.mxu0 %v1983
    %1985 = vmatprep.subr.mxu0 0.0
    %v1986 = vand.u32 %v129, 4294901760
    %1987 = vmatpush1.msra.mxu0 %v1986
    %1988 = vmatprep.subr.mxu0 0.0
    %v1989 = vand.u32 %v130, 4294901760
    %1990 = vmatpush1.msra.mxu0 %v1989
    %v1991 = vand.u32 %v164, 4294901760
    %v1992 = vsub.f32 %v164, %v1991
    %v1993 = vand.u32 %v1992, 4294901760
    %v1994 = vsub.f32 %v1992, %v1993
    %v1995 = vand.u32 %v1994, 4294901760
    %1996 = vmatprep.mubr.f32.mxu0 %v1995
    %v1997 = vand.u32 %v163, 4294901760
    %v1998 = vsub.f32 %v163, %v1997
    %v1999 = vand.u32 %v1998, 4294901760
    %v2000 = vsub.f32 %v1998, %v1999
    %v2001 = vand.u32 %v2000, 4294901760
    %2002 = vmatmul.mubr.f32.gmra.mrb[0].mxu0 %v2001
    %v2003 = vpop.f32.mrb[0].mxu0
    %v2004 = vadd.f32 %v1892, %v2003
    %v2005 = vpop.f32.mrb[0].mxu0
    %2006 = vdwg.mxu0
    %2007 = vmatprep.subr.mxu0 0.0
    %v2008 = vand.u32 %v99, 4294901760
    %v2009 = vsub.f32 %v99, %v2008
    %v2010 = vand.u32 %v2009, 4294901760
    %v2011 = vsub.f32 %v2009, %v2010
    %v2012 = vand.u32 %v2011, 4294901760
    %2013 = vmatpush1.msra.mxu0 %v2012
    %2014 = vmatprep.subr.mxu0 0.0
    %v2015 = vand.u32 %v100, 4294901760
    %v2016 = vsub.f32 %v100, %v2015
    %v2017 = vand.u32 %v2016, 4294901760
    %v2018 = vsub.f32 %v2016, %v2017
    %v2019 = vand.u32 %v2018, 4294901760
    %2020 = vmatpush1.msra.mxu0 %v2019
    %2021 = vmatprep.subr.mxu0 0.0
    %v2022 = vand.u32 %v101, 4294901760
    %v2023 = vsub.f32 %v101, %v2022
    %v2024 = vand.u32 %v2023, 4294901760
    %v2025 = vsub.f32 %v2023, %v2024
    %v2026 = vand.u32 %v2025, 4294901760
    %2027 = vmatpush1.msra.mxu0 %v2026
    %2028 = vmatprep.subr.mxu0 0.0
    %v2029 = vand.u32 %v102, 4294901760
    %v2030 = vsub.f32 %v102, %v2029
    %v2031 = vand.u32 %v2030, 4294901760
    %v2032 = vsub.f32 %v2030, %v2031
    %v2033 = vand.u32 %v2032, 4294901760
    %2034 = vmatpush1.msra.mxu0 %v2033
    %2035 = vmatprep.subr.mxu0 0.0
    %v2036 = vand.u32 %v103, 4294901760
    %v2037 = vsub.f32 %v103, %v2036
    %v2038 = vand.u32 %v2037, 4294901760
    %v2039 = vsub.f32 %v2037, %v2038
    %v2040 = vand.u32 %v2039, 4294901760
    %2041 = vmatpush1.msra.mxu0 %v2040
    %2042 = vmatprep.subr.mxu0 0.0
    %v2043 = vand.u32 %v104, 4294901760
    %v2044 = vsub.f32 %v104, %v2043
    %v2045 = vand.u32 %v2044, 4294901760
    %v2046 = vsub.f32 %v2044, %v2045
    %v2047 = vand.u32 %v2046, 4294901760
    %2048 = vmatpush1.msra.mxu0 %v2047
    %2049 = vmatprep.subr.mxu0 0.0
    %v2050 = vand.u32 %v105, 4294901760
    %v2051 = vsub.f32 %v105, %v2050
    %v2052 = vand.u32 %v2051, 4294901760
    %v2053 = vsub.f32 %v2051, %v2052
    %v2054 = vand.u32 %v2053, 4294901760
    %2055 = vmatpush1.msra.mxu0 %v2054
    %2056 = vmatprep.subr.mxu0 0.0
    %v2057 = vand.u32 %v106, 4294901760
    %v2058 = vsub.f32 %v106, %v2057
    %v2059 = vand.u32 %v2058, 4294901760
    %v2060 = vsub.f32 %v2058, %v2059
    %v2061 = vand.u32 %v2060, 4294901760
    %2062 = vmatpush1.msra.mxu0 %v2061
    %2063 = vmatprep.subr.mxu0 0.0
    %v2064 = vand.u32 %v107, 4294901760
    %v2065 = vsub.f32 %v107, %v2064
    %v2066 = vand.u32 %v2065, 4294901760
    %v2067 = vsub.f32 %v2065, %v2066
    %v2068 = vand.u32 %v2067, 4294901760
    %2069 = vmatpush1.msra.mxu0 %v2068
    %2070 = vmatprep.subr.mxu0 0.0
    %v2071 = vand.u32 %v108, 4294901760
    %v2072 = vsub.f32 %v108, %v2071
    %v2073 = vand.u32 %v2072, 4294901760
    %v2074 = vsub.f32 %v2072, %v2073
    %v2075 = vand.u32 %v2074, 4294901760
    %2076 = vmatpush1.msra.mxu0 %v2075
    %2077 = vmatprep.subr.mxu0 0.0
    %v2078 = vand.u32 %v109, 4294901760
    %v2079 = vsub.f32 %v109, %v2078
    %v2080 = vand.u32 %v2079, 4294901760
    %v2081 = vsub.f32 %v2079, %v2080
    %v2082 = vand.u32 %v2081, 4294901760
    %2083 = vmatpush1.msra.mxu0 %v2082
    %2084 = vmatprep.subr.mxu0 0.0
    %v2085 = vand.u32 %v110, 4294901760
    %v2086 = vsub.f32 %v110, %v2085
    %v2087 = vand.u32 %v2086, 4294901760
    %v2088 = vsub.f32 %v2086, %v2087
    %v2089 = vand.u32 %v2088, 4294901760
    %2090 = vmatpush1.msra.mxu0 %v2089
    %2091 = vmatprep.subr.mxu0 0.0
    %v2092 = vand.u32 %v111, 4294901760
    %v2093 = vsub.f32 %v111, %v2092
    %v2094 = vand.u32 %v2093, 4294901760
    %v2095 = vsub.f32 %v2093, %v2094
    %v2096 = vand.u32 %v2095, 4294901760
    %2097 = vmatpush1.msra.mxu0 %v2096
    %2098 = vmatprep.subr.mxu0 0.0
    %v2099 = vand.u32 %v112, 4294901760
    %v2100 = vsub.f32 %v112, %v2099
    %v2101 = vand.u32 %v2100, 4294901760
    %v2102 = vsub.f32 %v2100, %v2101
    %v2103 = vand.u32 %v2102, 4294901760
    %2104 = vmatpush1.msra.mxu0 %v2103
    %2105 = vmatprep.subr.mxu0 0.0
    %v2106 = vand.u32 %v113, 4294901760
    %v2107 = vsub.f32 %v113, %v2106
    %v2108 = vand.u32 %v2107, 4294901760
    %v2109 = vsub.f32 %v2107, %v2108
    %v2110 = vand.u32 %v2109, 4294901760
    %2111 = vmatpush1.msra.mxu0 %v2110
    %2112 = vmatprep.subr.mxu0 0.0
    %v2113 = vand.u32 %v114, 4294901760
    %v2114 = vsub.f32 %v114, %v2113
    %v2115 = vand.u32 %v2114, 4294901760
    %v2116 = vsub.f32 %v2114, %v2115
    %v2117 = vand.u32 %v2116, 4294901760
    %2118 = vmatpush1.msra.mxu0 %v2117
    %2119 = vmatprep.subr.mxu0 0.0
    %v2120 = vand.u32 %v115, 4294901760
    %v2121 = vsub.f32 %v115, %v2120
    %v2122 = vand.u32 %v2121, 4294901760
    %v2123 = vsub.f32 %v2121, %v2122
    %v2124 = vand.u32 %v2123, 4294901760
    %2125 = vmatpush1.msra.mxu0 %v2124
    %2126 = vmatprep.subr.mxu0 0.0
    %v2127 = vand.u32 %v116, 4294901760
    %v2128 = vsub.f32 %v116, %v2127
    %v2129 = vand.u32 %v2128, 4294901760
    %v2130 = vsub.f32 %v2128, %v2129
    %v2131 = vand.u32 %v2130, 4294901760
    %2132 = vmatpush1.msra.mxu0 %v2131
    %2133 = vmatprep.subr.mxu0 0.0
    %v2134 = vand.u32 %v117, 4294901760
    %v2135 = vsub.f32 %v117, %v2134
    %v2136 = vand.u32 %v2135, 4294901760
    %v2137 = vsub.f32 %v2135, %v2136
    %v2138 = vand.u32 %v2137, 4294901760
    %2139 = vmatpush1.msra.mxu0 %v2138
    %2140 = vmatprep.subr.mxu0 0.0
    %v2141 = vand.u32 %v118, 4294901760
    %v2142 = vsub.f32 %v118, %v2141
    %v2143 = vand.u32 %v2142, 4294901760
    %v2144 = vsub.f32 %v2142, %v2143
    %v2145 = vand.u32 %v2144, 4294901760
    %2146 = vmatpush1.msra.mxu0 %v2145
    %2147 = vmatprep.subr.mxu0 0.0
    %v2148 = vand.u32 %v119, 4294901760
    %v2149 = vsub.f32 %v119, %v2148
    %v2150 = vand.u32 %v2149, 4294901760
    %v2151 = vsub.f32 %v2149, %v2150
    %v2152 = vand.u32 %v2151, 4294901760
    %2153 = vmatpush1.msra.mxu0 %v2152
    %2154 = vmatprep.subr.mxu0 0.0
    %v2155 = vand.u32 %v120, 4294901760
    %v2156 = vsub.f32 %v120, %v2155
    %v2157 = vand.u32 %v2156, 4294901760
    %v2158 = vsub.f32 %v2156, %v2157
    %v2159 = vand.u32 %v2158, 4294901760
    %2160 = vmatpush1.msra.mxu0 %v2159
    %2161 = vmatprep.subr.mxu0 0.0
    %v2162 = vand.u32 %v121, 4294901760
    %v2163 = vsub.f32 %v121, %v2162
    %v2164 = vand.u32 %v2163, 4294901760
    %v2165 = vsub.f32 %v2163, %v2164
    %v2166 = vand.u32 %v2165, 4294901760
    %2167 = vmatpush1.msra.mxu0 %v2166
    %2168 = vmatprep.subr.mxu0 0.0
    %v2169 = vand.u32 %v122, 4294901760
    %v2170 = vsub.f32 %v122, %v2169
    %v2171 = vand.u32 %v2170, 4294901760
    %v2172 = vsub.f32 %v2170, %v2171
    %v2173 = vand.u32 %v2172, 4294901760
    %2174 = vmatpush1.msra.mxu0 %v2173
    %2175 = vmatprep.subr.mxu0 0.0
    %v2176 = vand.u32 %v123, 4294901760
    %v2177 = vsub.f32 %v123, %v2176
    %v2178 = vand.u32 %v2177, 4294901760
    %v2179 = vsub.f32 %v2177, %v2178
    %v2180 = vand.u32 %v2179, 4294901760
    %2181 = vmatpush1.msra.mxu0 %v2180
    %2182 = vmatprep.subr.mxu0 0.0
    %v2183 = vand.u32 %v124, 4294901760
    %v2184 = vsub.f32 %v124, %v2183
    %v2185 = vand.u32 %v2184, 4294901760
    %v2186 = vsub.f32 %v2184, %v2185
    %v2187 = vand.u32 %v2186, 4294901760
    %2188 = vmatpush1.msra.mxu0 %v2187
    %2189 = vmatprep.subr.mxu0 0.0
    %v2190 = vand.u32 %v125, 4294901760
    %v2191 = vsub.f32 %v125, %v2190
    %v2192 = vand.u32 %v2191, 4294901760
    %v2193 = vsub.f32 %v2191, %v2192
    %v2194 = vand.u32 %v2193, 4294901760
    %2195 = vmatpush1.msra.mxu0 %v2194
    %2196 = vmatprep.subr.mxu0 0.0
    %v2197 = vand.u32 %v126, 4294901760
    %v2198 = vsub.f32 %v126, %v2197
    %v2199 = vand.u32 %v2198, 4294901760
    %v2200 = vsub.f32 %v2198, %v2199
    %v2201 = vand.u32 %v2200, 4294901760
    %2202 = vmatpush1.msra.mxu0 %v2201
    %2203 = vmatprep.subr.mxu0 0.0
    %v2204 = vand.u32 %v127, 4294901760
    %v2205 = vsub.f32 %v127, %v2204
    %v2206 = vand.u32 %v2205, 4294901760
    %v2207 = vsub.f32 %v2205, %v2206
    %v2208 = vand.u32 %v2207, 4294901760
    %2209 = vmatpush1.msra.mxu0 %v2208
    %2210 = vmatprep.subr.mxu0 0.0
    %v2211 = vand.u32 %v128, 4294901760
    %v2212 = vsub.f32 %v128, %v2211
    %v2213 = vand.u32 %v2212, 4294901760
    %v2214 = vsub.f32 %v2212, %v2213
    %v2215 = vand.u32 %v2214, 4294901760
    %2216 = vmatpush1.msra.mxu0 %v2215
    %2217 = vmatprep.subr.mxu0 0.0
    %v2218 = vand.u32 %v129, 4294901760
    %v2219 = vsub.f32 %v129, %v2218
    %v2220 = vand.u32 %v2219, 4294901760
    %v2221 = vsub.f32 %v2219, %v2220
    %v2222 = vand.u32 %v2221, 4294901760
    %2223 = vmatpush1.msra.mxu0 %v2222
    %2224 = vmatprep.subr.mxu0 0.0
    %v2225 = vand.u32 %v130, 4294901760
    %v2226 = vsub.f32 %v130, %v2225
    %v2227 = vand.u32 %v2226, 4294901760
    %v2228 = vsub.f32 %v2226, %v2227
    %v2229 = vand.u32 %v2228, 4294901760
    %2230 = vmatpush1.msra.mxu0 %v2229
    %v2231 = vand.u32 %v164, 4294901760
    %2232 = vmatprep.mubr.f32.mxu0 %v2231
    %v2233 = vand.u32 %v163, 4294901760
    %2234 = vmatmul.mubr.f32.gmra.mrb[0].mxu0 %v2233
    %v2235 = vpop.f32.mrb[0].mxu0
    %v2236 = vadd.f32 %v2004, %v2235
    %v2237 = vpop.f32.mrb[0].mxu0
    %2238 = vdwg.mxu0
    %2239 = vmatprep.subr.mxu0 0.0
    %v2240 = vand.u32 %v99, 4294901760
    %v2241 = vsub.f32 %v99, %v2240
    %2242 = vmatpush1.msra.mxu0 %v2241
    %2243 = vmatprep.subr.mxu0 0.0
    %v2244 = vand.u32 %v100, 4294901760
    %v2245 = vsub.f32 %v100, %v2244
    %2246 = vmatpush1.msra.mxu0 %v2245
    %2247 = vmatprep.subr.mxu0 0.0
    %v2248 = vand.u32 %v101, 4294901760
    %v2249 = vsub.f32 %v101, %v2248
    %2250 = vmatpush1.msra.mxu0 %v2249
    %2251 = vmatprep.subr.mxu0 0.0
    %v2252 = vand.u32 %v102, 4294901760
    %v2253 = vsub.f32 %v102, %v2252
    %2254 = vmatpush1.msra.mxu0 %v2253
    %2255 = vmatprep.subr.mxu0 0.0
    %v2256 = vand.u32 %v103, 4294901760
    %v2257 = vsub.f32 %v103, %v2256
    %2258 = vmatpush1.msra.mxu0 %v2257
    %2259 = vmatprep.subr.mxu0 0.0
    %v2260 = vand.u32 %v104, 4294901760
    %v2261 = vsub.f32 %v104, %v2260
    %2262 = vmatpush1.msra.mxu0 %v2261
    %2263 = vmatprep.subr.mxu0 0.0
    %v2264 = vand.u32 %v105, 4294901760
    %v2265 = vsub.f32 %v105, %v2264
    %2266 = vmatpush1.msra.mxu0 %v2265
    %2267 = vmatprep.subr.mxu0 0.0
    %v2268 = vand.u32 %v106, 4294901760
    %v2269 = vsub.f32 %v106, %v2268
    %2270 = vmatpush1.msra.mxu0 %v2269
    %2271 = vmatprep.subr.mxu0 0.0
    %v2272 = vand.u32 %v107, 4294901760
    %v2273 = vsub.f32 %v107, %v2272
    %2274 = vmatpush1.msra.mxu0 %v2273
    %2275 = vmatprep.subr.mxu0 0.0
    %v2276 = vand.u32 %v108, 4294901760
    %v2277 = vsub.f32 %v108, %v2276
    %2278 = vmatpush1.msra.mxu0 %v2277
    %2279 = vmatprep.subr.mxu0 0.0
    %v2280 = vand.u32 %v109, 4294901760
    %v2281 = vsub.f32 %v109, %v2280
    %2282 = vmatpush1.msra.mxu0 %v2281
    %2283 = vmatprep.subr.mxu0 0.0
    %v2284 = vand.u32 %v110, 4294901760
    %v2285 = vsub.f32 %v110, %v2284
    %2286 = vmatpush1.msra.mxu0 %v2285
    %2287 = vmatprep.subr.mxu0 0.0
    %v2288 = vand.u32 %v111, 4294901760
    %v2289 = vsub.f32 %v111, %v2288
    %2290 = vmatpush1.msra.mxu0 %v2289
    %2291 = vmatprep.subr.mxu0 0.0
    %v2292 = vand.u32 %v112, 4294901760
    %v2293 = vsub.f32 %v112, %v2292
    %2294 = vmatpush1.msra.mxu0 %v2293
    %2295 = vmatprep.subr.mxu0 0.0
    %v2296 = vand.u32 %v113, 4294901760
    %v2297 = vsub.f32 %v113, %v2296
    %2298 = vmatpush1.msra.mxu0 %v2297
    %2299 = vmatprep.subr.mxu0 0.0
    %v2300 = vand.u32 %v114, 4294901760
    %v2301 = vsub.f32 %v114, %v2300
    %2302 = vmatpush1.msra.mxu0 %v2301
    %2303 = vmatprep.subr.mxu0 0.0
    %v2304 = vand.u32 %v115, 4294901760
    %v2305 = vsub.f32 %v115, %v2304
    %2306 = vmatpush1.msra.mxu0 %v2305
    %2307 = vmatprep.subr.mxu0 0.0
    %v2308 = vand.u32 %v116, 4294901760
    %v2309 = vsub.f32 %v116, %v2308
    %2310 = vmatpush1.msra.mxu0 %v2309
    %2311 = vmatprep.subr.mxu0 0.0
    %v2312 = vand.u32 %v117, 4294901760
    %v2313 = vsub.f32 %v117, %v2312
    %2314 = vmatpush1.msra.mxu0 %v2313
    %2315 = vmatprep.subr.mxu0 0.0
    %v2316 = vand.u32 %v118, 4294901760
    %v2317 = vsub.f32 %v118, %v2316
    %2318 = vmatpush1.msra.mxu0 %v2317
    %2319 = vmatprep.subr.mxu0 0.0
    %v2320 = vand.u32 %v119, 4294901760
    %v2321 = vsub.f32 %v119, %v2320
    %2322 = vmatpush1.msra.mxu0 %v2321
    %2323 = vmatprep.subr.mxu0 0.0
    %v2324 = vand.u32 %v120, 4294901760
    %v2325 = vsub.f32 %v120, %v2324
    %2326 = vmatpush1.msra.mxu0 %v2325
    %2327 = vmatprep.subr.mxu0 0.0
    %v2328 = vand.u32 %v121, 4294901760
    %v2329 = vsub.f32 %v121, %v2328
    %2330 = vmatpush1.msra.mxu0 %v2329
    %2331 = vmatprep.subr.mxu0 0.0
    %v2332 = vand.u32 %v122, 4294901760
    %v2333 = vsub.f32 %v122, %v2332
    %2334 = vmatpush1.msra.mxu0 %v2333
    %2335 = vmatprep.subr.mxu0 0.0
    %v2336 = vand.u32 %v123, 4294901760
    %v2337 = vsub.f32 %v123, %v2336
    %2338 = vmatpush1.msra.mxu0 %v2337
    %2339 = vmatprep.subr.mxu0 0.0
    %v2340 = vand.u32 %v124, 4294901760
    %v2341 = vsub.f32 %v124, %v2340
    %2342 = vmatpush1.msra.mxu0 %v2341
    %2343 = vmatprep.subr.mxu0 0.0
    %v2344 = vand.u32 %v125, 4294901760
    %v2345 = vsub.f32 %v125, %v2344
    %2346 = vmatpush1.msra.mxu0 %v2345
    %2347 = vmatprep.subr.mxu0 0.0
    %v2348 = vand.u32 %v126, 4294901760
    %v2349 = vsub.f32 %v126, %v2348
    %2350 = vmatpush1.msra.mxu0 %v2349
    %2351 = vmatprep.subr.mxu0 0.0
    %v2352 = vand.u32 %v127, 4294901760
    %v2353 = vsub.f32 %v127, %v2352
    %2354 = vmatpush1.msra.mxu0 %v2353
    %2355 = vmatprep.subr.mxu0 0.0
    %v2356 = vand.u32 %v128, 4294901760
    %v2357 = vsub.f32 %v128, %v2356
    %2358 = vmatpush1.msra.mxu0 %v2357
    %2359 = vmatprep.subr.mxu0 0.0
    %v2360 = vand.u32 %v129, 4294901760
    %v2361 = vsub.f32 %v129, %v2360
    %2362 = vmatpush1.msra.mxu0 %v2361
    %2363 = vmatprep.subr.mxu0 0.0
    %v2364 = vand.u32 %v130, 4294901760
    %v2365 = vsub.f32 %v130, %v2364
    %2366 = vmatpush1.msra.mxu0 %v2365
    %v2367 = vand.u32 %v164, 4294901760
    %v2368 = vsub.f32 %v164, %v2367
    %2369 = vmatprep.mubr.f32.mxu0 %v2368
    %v2370 = vand.u32 %v163, 4294901760
    %v2371 = vsub.f32 %v163, %v2370
    %2372 = vmatmul.mubr.f32.gmra.mrb[0].mxu0 %v2371
    %v2373 = vpop.f32.mrb[0].mxu0
    %v2374 = vadd.f32 %v2236, %v2373
    %v2375 = vpop.f32.mrb[0].mxu0
    %2376 = vdwg.mxu0
    %2377 = vmatprep.subr.mxu0 0.0
    %v2378 = vand.u32 %v99, 4294901760
    %2379 = vmatpush1.msra.mxu0 %v2378
    %2380 = vmatprep.subr.mxu0 0.0
    %v2381 = vand.u32 %v100, 4294901760
    %2382 = vmatpush1.msra.mxu0 %v2381
    %2383 = vmatprep.subr.mxu0 0.0
    %v2384 = vand.u32 %v101, 4294901760
    %2385 = vmatpush1.msra.mxu0 %v2384
    %2386 = vmatprep.subr.mxu0 0.0
    %v2387 = vand.u32 %v102, 4294901760
    %2388 = vmatpush1.msra.mxu0 %v2387
    %2389 = vmatprep.subr.mxu0 0.0
    %v2390 = vand.u32 %v103, 4294901760
    %2391 = vmatpush1.msra.mxu0 %v2390
    %2392 = vmatprep.subr.mxu0 0.0
    %v2393 = vand.u32 %v104, 4294901760
    %2394 = vmatpush1.msra.mxu0 %v2393
    %2395 = vmatprep.subr.mxu0 0.0
    %v2396 = vand.u32 %v105, 4294901760
    %2397 = vmatpush1.msra.mxu0 %v2396
    %2398 = vmatprep.subr.mxu0 0.0
    %v2399 = vand.u32 %v106, 4294901760
    %2400 = vmatpush1.msra.mxu0 %v2399
    %2401 = vmatprep.subr.mxu0 0.0
    %v2402 = vand.u32 %v107, 4294901760
    %2403 = vmatpush1.msra.mxu0 %v2402
    %2404 = vmatprep.subr.mxu0 0.0
    %v2405 = vand.u32 %v108, 4294901760
    %2406 = vmatpush1.msra.mxu0 %v2405
    %2407 = vmatprep.subr.mxu0 0.0
    %v2408 = vand.u32 %v109, 4294901760
    %2409 = vmatpush1.msra.mxu0 %v2408
    %2410 = vmatprep.subr.mxu0 0.0
    %v2411 = vand.u32 %v110, 4294901760
    %2412 = vmatpush1.msra.mxu0 %v2411
    %2413 = vmatprep.subr.mxu0 0.0
    %v2414 = vand.u32 %v111, 4294901760
    %2415 = vmatpush1.msra.mxu0 %v2414
    %2416 = vmatprep.subr.mxu0 0.0
    %v2417 = vand.u32 %v112, 4294901760
    %2418 = vmatpush1.msra.mxu0 %v2417
    %2419 = vmatprep.subr.mxu0 0.0
    %v2420 = vand.u32 %v113, 4294901760
    %2421 = vmatpush1.msra.mxu0 %v2420
    %2422 = vmatprep.subr.mxu0 0.0
    %v2423 = vand.u32 %v114, 4294901760
    %2424 = vmatpush1.msra.mxu0 %v2423
    %2425 = vmatprep.subr.mxu0 0.0
    %v2426 = vand.u32 %v115, 4294901760
    %2427 = vmatpush1.msra.mxu0 %v2426
    %2428 = vmatprep.subr.mxu0 0.0
    %v2429 = vand.u32 %v116, 4294901760
    %2430 = vmatpush1.msra.mxu0 %v2429
    %2431 = vmatprep.subr.mxu0 0.0
    %v2432 = vand.u32 %v117, 4294901760
    %2433 = vmatpush1.msra.mxu0 %v2432
    %2434 = vmatprep.subr.mxu0 0.0
    %v2435 = vand.u32 %v118, 4294901760
    %2436 = vmatpush1.msra.mxu0 %v2435
    %2437 = vmatprep.subr.mxu0 0.0
    %v2438 = vand.u32 %v119, 4294901760
    %2439 = vmatpush1.msra.mxu0 %v2438
    %2440 = vmatprep.subr.mxu0 0.0
    %v2441 = vand.u32 %v120, 4294901760
    %2442 = vmatpush1.msra.mxu0 %v2441
    %2443 = vmatprep.subr.mxu0 0.0
    %v2444 = vand.u32 %v121, 4294901760
    %2445 = vmatpush1.msra.mxu0 %v2444
    %2446 = vmatprep.subr.mxu0 0.0
    %v2447 = vand.u32 %v122, 4294901760
    %2448 = vmatpush1.msra.mxu0 %v2447
    %2449 = vmatprep.subr.mxu0 0.0
    %v2450 = vand.u32 %v123, 4294901760
    %2451 = vmatpush1.msra.mxu0 %v2450
    %2452 = vmatprep.subr.mxu0 0.0
    %v2453 = vand.u32 %v124, 4294901760
    %2454 = vmatpush1.msra.mxu0 %v2453
    %2455 = vmatprep.subr.mxu0 0.0
    %v2456 = vand.u32 %v125, 4294901760
    %2457 = vmatpush1.msra.mxu0 %v2456
    %2458 = vmatprep.subr.mxu0 0.0
    %v2459 = vand.u32 %v126, 4294901760
    %2460 = vmatpush1.msra.mxu0 %v2459
    %2461 = vmatprep.subr.mxu0 0.0
    %v2462 = vand.u32 %v127, 4294901760
    %2463 = vmatpush1.msra.mxu0 %v2462
    %2464 = vmatprep.subr.mxu0 0.0
    %v2465 = vand.u32 %v128, 4294901760
    %2466 = vmatpush1.msra.mxu0 %v2465
    %2467 = vmatprep.subr.mxu0 0.0
    %v2468 = vand.u32 %v129, 4294901760
    %2469 = vmatpush1.msra.mxu0 %v2468
    %2470 = vmatprep.subr.mxu0 0.0
    %v2471 = vand.u32 %v130, 4294901760
    %2472 = vmatpush1.msra.mxu0 %v2471
    %v2473 = vand.u32 %v164, 4294901760
    %v2474 = vsub.f32 %v164, %v2473
    %v2475 = vand.u32 %v2474, 4294901760
    %2476 = vmatprep.mubr.f32.mxu0 %v2475
    %v2477 = vand.u32 %v163, 4294901760
    %v2478 = vsub.f32 %v163, %v2477
    %v2479 = vand.u32 %v2478, 4294901760
    %2480 = vmatmul.mubr.f32.gmra.mrb[0].mxu0 %v2479
    %v2481 = vpop.f32.mrb[0].mxu0
    %v2482 = vadd.f32 %v2374, %v2481
    %v2483 = vpop.f32.mrb[0].mxu0
    %2484 = vdwg.mxu0
    %2485 = vmatprep.subr.mxu0 0.0
    %v2486 = vand.u32 %v99, 4294901760
    %v2487 = vsub.f32 %v99, %v2486
    %v2488 = vand.u32 %v2487, 4294901760
    %2489 = vmatpush1.msra.mxu0 %v2488
    %2490 = vmatprep.subr.mxu0 0.0
    %v2491 = vand.u32 %v100, 4294901760
    %v2492 = vsub.f32 %v100, %v2491
    %v2493 = vand.u32 %v2492, 4294901760
    %2494 = vmatpush1.msra.mxu0 %v2493
    %2495 = vmatprep.subr.mxu0 0.0
    %v2496 = vand.u32 %v101, 4294901760
    %v2497 = vsub.f32 %v101, %v2496
    %v2498 = vand.u32 %v2497, 4294901760
    %2499 = vmatpush1.msra.mxu0 %v2498
    %2500 = vmatprep.subr.mxu0 0.0
    %v2501 = vand.u32 %v102, 4294901760
    %v2502 = vsub.f32 %v102, %v2501
    %v2503 = vand.u32 %v2502, 4294901760
    %2504 = vmatpush1.msra.mxu0 %v2503
    %2505 = vmatprep.subr.mxu0 0.0
    %v2506 = vand.u32 %v103, 4294901760
    %v2507 = vsub.f32 %v103, %v2506
    %v2508 = vand.u32 %v2507, 4294901760
    %2509 = vmatpush1.msra.mxu0 %v2508
    %2510 = vmatprep.subr.mxu0 0.0
    %v2511 = vand.u32 %v104, 4294901760
    %v2512 = vsub.f32 %v104, %v2511
    %v2513 = vand.u32 %v2512, 4294901760
    %2514 = vmatpush1.msra.mxu0 %v2513
    %2515 = vmatprep.subr.mxu0 0.0
    %v2516 = vand.u32 %v105, 4294901760
    %v2517 = vsub.f32 %v105, %v2516
    %v2518 = vand.u32 %v2517, 4294901760
    %2519 = vmatpush1.msra.mxu0 %v2518
    %2520 = vmatprep.subr.mxu0 0.0
    %v2521 = vand.u32 %v106, 4294901760
    %v2522 = vsub.f32 %v106, %v2521
    %v2523 = vand.u32 %v2522, 4294901760
    %2524 = vmatpush1.msra.mxu0 %v2523
    %2525 = vmatprep.subr.mxu0 0.0
    %v2526 = vand.u32 %v107, 4294901760
    %v2527 = vsub.f32 %v107, %v2526
    %v2528 = vand.u32 %v2527, 4294901760
    %2529 = vmatpush1.msra.mxu0 %v2528
    %2530 = vmatprep.subr.mxu0 0.0
    %v2531 = vand.u32 %v108, 4294901760
    %v2532 = vsub.f32 %v108, %v2531
    %v2533 = vand.u32 %v2532, 4294901760
    %2534 = vmatpush1.msra.mxu0 %v2533
    %2535 = vmatprep.subr.mxu0 0.0
    %v2536 = vand.u32 %v109, 4294901760
    %v2537 = vsub.f32 %v109, %v2536
    %v2538 = vand.u32 %v2537, 4294901760
    %2539 = vmatpush1.msra.mxu0 %v2538
    %2540 = vmatprep.subr.mxu0 0.0
    %v2541 = vand.u32 %v110, 4294901760
    %v2542 = vsub.f32 %v110, %v2541
    %v2543 = vand.u32 %v2542, 4294901760
    %2544 = vmatpush1.msra.mxu0 %v2543
    %2545 = vmatprep.subr.mxu0 0.0
    %v2546 = vand.u32 %v111, 4294901760
    %v2547 = vsub.f32 %v111, %v2546
    %v2548 = vand.u32 %v2547, 4294901760
    %2549 = vmatpush1.msra.mxu0 %v2548
    %2550 = vmatprep.subr.mxu0 0.0
    %v2551 = vand.u32 %v112, 4294901760
    %v2552 = vsub.f32 %v112, %v2551
    %v2553 = vand.u32 %v2552, 4294901760
    %2554 = vmatpush1.msra.mxu0 %v2553
    %2555 = vmatprep.subr.mxu0 0.0
    %v2556 = vand.u32 %v113, 4294901760
    %v2557 = vsub.f32 %v113, %v2556
    %v2558 = vand.u32 %v2557, 4294901760
    %2559 = vmatpush1.msra.mxu0 %v2558
    %2560 = vmatprep.subr.mxu0 0.0
    %v2561 = vand.u32 %v114, 4294901760
    %v2562 = vsub.f32 %v114, %v2561
    %v2563 = vand.u32 %v2562, 4294901760
    %2564 = vmatpush1.msra.mxu0 %v2563
    %2565 = vmatprep.subr.mxu0 0.0
    %v2566 = vand.u32 %v115, 4294901760
    %v2567 = vsub.f32 %v115, %v2566
    %v2568 = vand.u32 %v2567, 4294901760
    %2569 = vmatpush1.msra.mxu0 %v2568
    %2570 = vmatprep.subr.mxu0 0.0
    %v2571 = vand.u32 %v116, 4294901760
    %v2572 = vsub.f32 %v116, %v2571
    %v2573 = vand.u32 %v2572, 4294901760
    %2574 = vmatpush1.msra.mxu0 %v2573
    %2575 = vmatprep.subr.mxu0 0.0
    %v2576 = vand.u32 %v117, 4294901760
    %v2577 = vsub.f32 %v117, %v2576
    %v2578 = vand.u32 %v2577, 4294901760
    %2579 = vmatpush1.msra.mxu0 %v2578
    %2580 = vmatprep.subr.mxu0 0.0
    %v2581 = vand.u32 %v118, 4294901760
    %v2582 = vsub.f32 %v118, %v2581
    %v2583 = vand.u32 %v2582, 4294901760
    %2584 = vmatpush1.msra.mxu0 %v2583
    %2585 = vmatprep.subr.mxu0 0.0
    %v2586 = vand.u32 %v119, 4294901760
    %v2587 = vsub.f32 %v119, %v2586
    %v2588 = vand.u32 %v2587, 4294901760
    %2589 = vmatpush1.msra.mxu0 %v2588
    %2590 = vmatprep.subr.mxu0 0.0
    %v2591 = vand.u32 %v120, 4294901760
    %v2592 = vsub.f32 %v120, %v2591
    %v2593 = vand.u32 %v2592, 4294901760
    %2594 = vmatpush1.msra.mxu0 %v2593
    %2595 = vmatprep.subr.mxu0 0.0
    %v2596 = vand.u32 %v121, 4294901760
    %v2597 = vsub.f32 %v121, %v2596
    %v2598 = vand.u32 %v2597, 4294901760
    %2599 = vmatpush1.msra.mxu0 %v2598
    %2600 = vmatprep.subr.mxu0 0.0
    %v2601 = vand.u32 %v122, 4294901760
    %v2602 = vsub.f32 %v122, %v2601
    %v2603 = vand.u32 %v2602, 4294901760
    %2604 = vmatpush1.msra.mxu0 %v2603
    %2605 = vmatprep.subr.mxu0 0.0
    %v2606 = vand.u32 %v123, 4294901760
    %v2607 = vsub.f32 %v123, %v2606
    %v2608 = vand.u32 %v2607, 4294901760
    %2609 = vmatpush1.msra.mxu0 %v2608
    %2610 = vmatprep.subr.mxu0 0.0
    %v2611 = vand.u32 %v124, 4294901760
    %v2612 = vsub.f32 %v124, %v2611
    %v2613 = vand.u32 %v2612, 4294901760
    %2614 = vmatpush1.msra.mxu0 %v2613
    %2615 = vmatprep.subr.mxu0 0.0
    %v2616 = vand.u32 %v125, 4294901760
    %v2617 = vsub.f32 %v125, %v2616
    %v2618 = vand.u32 %v2617, 4294901760
    %2619 = vmatpush1.msra.mxu0 %v2618
    %2620 = vmatprep.subr.mxu0 0.0
    %v2621 = vand.u32 %v126, 4294901760
    %v2622 = vsub.f32 %v126, %v2621
    %v2623 = vand.u32 %v2622, 4294901760
    %2624 = vmatpush1.msra.mxu0 %v2623
    %2625 = vmatprep.subr.mxu0 0.0
    %v2626 = vand.u32 %v127, 4294901760
    %v2627 = vsub.f32 %v127, %v2626
    %v2628 = vand.u32 %v2627, 4294901760
    %2629 = vmatpush1.msra.mxu0 %v2628
    %2630 = vmatprep.subr.mxu0 0.0
    %v2631 = vand.u32 %v128, 4294901760
    %v2632 = vsub.f32 %v128, %v2631
    %v2633 = vand.u32 %v2632, 4294901760
    %2634 = vmatpush1.msra.mxu0 %v2633
    %2635 = vmatprep.subr.mxu0 0.0
    %v2636 = vand.u32 %v129, 4294901760
    %v2637 = vsub.f32 %v129, %v2636
    %v2638 = vand.u32 %v2637, 4294901760
    %2639 = vmatpush1.msra.mxu0 %v2638
    %2640 = vmatprep.subr.mxu0 0.0
    %v2641 = vand.u32 %v130, 4294901760
    %v2642 = vsub.f32 %v130, %v2641
    %v2643 = vand.u32 %v2642, 4294901760
    %2644 = vmatpush1.msra.mxu0 %v2643
    %v2645 = vand.u32 %v164, 4294901760
    %2646 = vmatprep.mubr.f32.mxu0 %v2645
    %v2647 = vand.u32 %v163, 4294901760
    %2648 = vmatmul.mubr.f32.gmra.mrb[0].mxu0 %v2647
    %v2649 = vpop.f32.mrb[0].mxu0
    %v2650 = vadd.f32 %v2482, %v2649
    %v2651 = vpop.f32.mrb[0].mxu0
    %2652 = vdwg.mxu0
    %2653 = vmatprep.subr.mxu0 0.0
    %v2654 = vand.u32 %v99, 4294901760
    %2655 = vmatpush1.msra.mxu0 %v2654
    %2656 = vmatprep.subr.mxu0 0.0
    %v2657 = vand.u32 %v100, 4294901760
    %2658 = vmatpush1.msra.mxu0 %v2657
    %2659 = vmatprep.subr.mxu0 0.0
    %v2660 = vand.u32 %v101, 4294901760
    %2661 = vmatpush1.msra.mxu0 %v2660
    %2662 = vmatprep.subr.mxu0 0.0
    %v2663 = vand.u32 %v102, 4294901760
    %2664 = vmatpush1.msra.mxu0 %v2663
    %2665 = vmatprep.subr.mxu0 0.0
    %v2666 = vand.u32 %v103, 4294901760
    %2667 = vmatpush1.msra.mxu0 %v2666
    %2668 = vmatprep.subr.mxu0 0.0
    %v2669 = vand.u32 %v104, 4294901760
    %2670 = vmatpush1.msra.mxu0 %v2669
    %2671 = vmatprep.subr.mxu0 0.0
    %v2672 = vand.u32 %v105, 4294901760
    %2673 = vmatpush1.msra.mxu0 %v2672
    %2674 = vmatprep.subr.mxu0 0.0
    %v2675 = vand.u32 %v106, 4294901760
    %2676 = vmatpush1.msra.mxu0 %v2675
    %2677 = vmatprep.subr.mxu0 0.0
    %v2678 = vand.u32 %v107, 4294901760
    %2679 = vmatpush1.msra.mxu0 %v2678
    %2680 = vmatprep.subr.mxu0 0.0
    %v2681 = vand.u32 %v108, 4294901760
    %2682 = vmatpush1.msra.mxu0 %v2681
    %2683 = vmatprep.subr.mxu0 0.0
    %v2684 = vand.u32 %v109, 4294901760
    %2685 = vmatpush1.msra.mxu0 %v2684
    %2686 = vmatprep.subr.mxu0 0.0
    %v2687 = vand.u32 %v110, 4294901760
    %2688 = vmatpush1.msra.mxu0 %v2687
    %2689 = vmatprep.subr.mxu0 0.0
    %v2690 = vand.u32 %v111, 4294901760
    %2691 = vmatpush1.msra.mxu0 %v2690
    %2692 = vmatprep.subr.mxu0 0.0
    %v2693 = vand.u32 %v112, 4294901760
    %2694 = vmatpush1.msra.mxu0 %v2693
    %2695 = vmatprep.subr.mxu0 0.0
    %v2696 = vand.u32 %v113, 4294901760
    %2697 = vmatpush1.msra.mxu0 %v2696
    %2698 = vmatprep.subr.mxu0 0.0
    %v2699 = vand.u32 %v114, 4294901760
    %2700 = vmatpush1.msra.mxu0 %v2699
    %2701 = vmatprep.subr.mxu0 0.0
    %v2702 = vand.u32 %v115, 4294901760
    %2703 = vmatpush1.msra.mxu0 %v2702
    %2704 = vmatprep.subr.mxu0 0.0
    %v2705 = vand.u32 %v116, 4294901760
    %2706 = vmatpush1.msra.mxu0 %v2705
    %2707 = vmatprep.subr.mxu0 0.0
    %v2708 = vand.u32 %v117, 4294901760
    %2709 = vmatpush1.msra.mxu0 %v2708
    %2710 = vmatprep.subr.mxu0 0.0
    %v2711 = vand.u32 %v118, 4294901760
    %2712 = vmatpush1.msra.mxu0 %v2711
    %2713 = vmatprep.subr.mxu0 0.0
    %v2714 = vand.u32 %v119, 4294901760
    %2715 = vmatpush1.msra.mxu0 %v2714
    %2716 = vmatprep.subr.mxu0 0.0
    %v2717 = vand.u32 %v120, 4294901760
    %2718 = vmatpush1.msra.mxu0 %v2717
    %2719 = vmatprep.subr.mxu0 0.0
    %v2720 = vand.u32 %v121, 4294901760
    %2721 = vmatpush1.msra.mxu0 %v2720
    %2722 = vmatprep.subr.mxu0 0.0
    %v2723 = vand.u32 %v122, 4294901760
    %2724 = vmatpush1.msra.mxu0 %v2723
    %2725 = vmatprep.subr.mxu0 0.0
    %v2726 = vand.u32 %v123, 4294901760
    %2727 = vmatpush1.msra.mxu0 %v2726
    %2728 = vmatprep.subr.mxu0 0.0
    %v2729 = vand.u32 %v124, 4294901760
    %2730 = vmatpush1.msra.mxu0 %v2729
    %2731 = vmatprep.subr.mxu0 0.0
    %v2732 = vand.u32 %v125, 4294901760
    %2733 = vmatpush1.msra.mxu0 %v2732
    %2734 = vmatprep.subr.mxu0 0.0
    %v2735 = vand.u32 %v126, 4294901760
    %2736 = vmatpush1.msra.mxu0 %v2735
    %2737 = vmatprep.subr.mxu0 0.0
    %v2738 = vand.u32 %v127, 4294901760
    %2739 = vmatpush1.msra.mxu0 %v2738
    %2740 = vmatprep.subr.mxu0 0.0
    %v2741 = vand.u32 %v128, 4294901760
    %2742 = vmatpush1.msra.mxu0 %v2741
    %2743 = vmatprep.subr.mxu0 0.0
    %v2744 = vand.u32 %v129, 4294901760
    %2745 = vmatpush1.msra.mxu0 %v2744
    %2746 = vmatprep.subr.mxu0 0.0
    %v2747 = vand.u32 %v130, 4294901760
    %2748 = vmatpush1.msra.mxu0 %v2747
    %v2749 = vand.u32 %v164, 4294901760
    %2750 = vmatprep.mubr.f32.mxu0 %v2749
    %v2751 = vand.u32 %v163, 4294901760
    %2752 = vmatmul.mubr.f32.gmra.mrb[0].mxu0 %v2751
    %v2753 = vpop.f32.mrb[0].mxu0
    %v2754 = vadd.f32 %v2650, %v2753
    %v2755 = vpop.f32.mrb[0].mxu0
    %2756 = vdwg.mxu0
    %v2757 = vld [vmem:[%s3] sm:$0xff]
    %v2758 = vld [vmem:[%s3 + $0x8] sm:$0xff]
    %v2759 = vld [vmem:[%s3 + $0x10] sm:$0xff]
    %v2760 = vld [vmem:[%s3 + $0x18] sm:$0xff]
    %v2761 = vld [vmem:[%s3 + $0x20] sm:$0xff]
    %v2762 = vld [vmem:[%s3 + $0x28] sm:$0xff]
    %v2763 = vld [vmem:[%s3 + $0x30] sm:$0xff]
    %v2764 = vld [vmem:[%s3 + $0x38] sm:$0xff]
    %v2765 = vld [vmem:[%s4] sm:$0x1]
    %v2767 = vlaneseq
    %v2768 = vshrl.u32 %v2767, 7
    %v2769 = vsub.s32 0, %v2768
    %v2770 = vrot.slane %v2765, %v2769
    %vm2772 = vcmask 523264
    %v2774 = vsel %vm2772, %v2754, 0
    %2776 = vmatprep.subr.mxu0 0.0
    %v2777 = vand.u32 %v2757, 4294901760
    %2778 = vmatpush1.msra.mxu0 %v2777
    %2779 = vmatprep.subr.mxu0 0.0
    %v2780 = vand.u32 %v2758, 4294901760
    %2781 = vmatpush1.msra.mxu0 %v2780
    %2782 = vmatprep.subr.mxu0 0.0
    %v2783 = vand.u32 %v2759, 4294901760
    %2784 = vmatpush1.msra.mxu0 %v2783
    %2785 = vmatprep.subr.mxu0 0.0
    %v2786 = vand.u32 %v2760, 4294901760
    %2787 = vmatpush1.msra.mxu0 %v2786
    %2788 = vmatprep.subr.mxu0 0.0
    %v2789 = vand.u32 %v2761, 4294901760
    %2790 = vmatpush1.msra.mxu0 %v2789
    %2791 = vmatprep.subr.mxu0 0.0
    %v2792 = vand.u32 %v2762, 4294901760
    %2793 = vmatpush1.msra.mxu0 %v2792
    %2794 = vmatprep.subr.mxu0 0.0
    %v2795 = vand.u32 %v2763, 4294901760
    %2796 = vmatpush1.msra.mxu0 %v2795
    %2797 = vmatprep.subr.mxu0 0.0
    %v2798 = vand.u32 %v2764, 4294901760
    %2799 = vmatpush1.msra.mxu0 %v2798
    %2800 = vmatprep.subr.mxu0 0.0
    %2801 = vmatpush1.msra.mxu0 0.0
    %2802 = vmatprep.subr.mxu0 0.0
    %2803 = vmatpush1.msra.mxu0 0.0
    %2804 = vmatprep.subr.mxu0 0.0
    %2805 = vmatpush1.msra.mxu0 0.0
    %2806 = vmatprep.subr.mxu0 0.0
    %2807 = vmatpush1.msra.mxu0 0.0
    %2808 = vmatprep.subr.mxu0 0.0
    %2809 = vmatpush1.msra.mxu0 0.0
    %2810 = vmatprep.subr.mxu0 0.0
    %2811 = vmatpush1.msra.mxu0 0.0
    %2812 = vmatprep.subr.mxu0 0.0
    %2813 = vmatpush1.msra.mxu0 0.0
    %2814 = vmatprep.subr.mxu0 0.0
    %2815 = vmatpush1.msra.mxu0 0.0
    %2816 = vmatprep.subr.mxu0 0.0
    %2817 = vmatpush1.msra.mxu0 0.0
    %2818 = vmatprep.subr.mxu0 0.0
    %2819 = vmatpush1.msra.mxu0 0.0
    %2820 = vmatprep.subr.mxu0 0.0
    %2821 = vmatpush1.msra.mxu0 0.0
    %2822 = vmatprep.subr.mxu0 0.0
    %2823 = vmatpush1.msra.mxu0 0.0
    %2824 = vmatprep.subr.mxu0 0.0
    %2825 = vmatpush1.msra.mxu0 0.0
    %2826 = vmatprep.subr.mxu0 0.0
    %2827 = vmatpush1.msra.mxu0 0.0
    %2828 = vmatprep.subr.mxu0 0.0
    %2829 = vmatpush1.msra.mxu0 0.0
    %2830 = vmatprep.subr.mxu0 0.0
    %2831 = vmatpush1.msra.mxu0 0.0
    %2832 = vmatprep.subr.mxu0 0.0
    %2833 = vmatpush1.msra.mxu0 0.0
    %2834 = vmatprep.subr.mxu0 0.0
    %2835 = vmatpush1.msra.mxu0 0.0
    %2836 = vmatprep.subr.mxu0 0.0
    %2837 = vmatpush1.msra.mxu0 0.0
    %2838 = vmatprep.subr.mxu0 0.0
    %2839 = vmatpush1.msra.mxu0 0.0
    %2840 = vmatprep.subr.mxu0 0.0
    %2841 = vmatpush1.msra.mxu0 0.0
    %2842 = vmatprep.subr.mxu0 0.0
    %2843 = vmatpush1.msra.mxu0 0.0
    %2844 = vmatprep.subr.mxu0 0.0
    %2845 = vmatpush1.msra.mxu0 0.0
    %2846 = vmatprep.subr.mxu0 0.0
    %2847 = vmatpush1.msra.mxu0 0.0
    %2848 = vmatprep.mubr.f32.mxu0 0.0
    %v2849 = vand.u32 %v2774, 4294901760
    %v2850 = vsub.f32 %v2774, %v2849
    %v2851 = vand.u32 %v2850, 4294901760
    %v2852 = vsub.f32 %v2850, %v2851
    %v2853 = vand.u32 %v2852, 4294901760
    %2854 = vmatmul.mubr.f32.gmra.mrb[0].mxu0 %v2853
    %v2855 = vpop.f32.mrb[0].mxu0
    %v2856 = vadd.f32 %v2770, %v2855
    %v2857 = vpop.f32.mrb[0].mxu0
    %2858 = vdwg.mxu0
    %2859 = vmatprep.subr.mxu0 0.0
    %v2860 = vand.u32 %v2757, 4294901760
    %v2861 = vsub.f32 %v2757, %v2860
    %v2862 = vand.u32 %v2861, 4294901760
    %v2863 = vsub.f32 %v2861, %v2862
    %v2864 = vand.u32 %v2863, 4294901760
    %2865 = vmatpush1.msra.mxu0 %v2864
    %2866 = vmatprep.subr.mxu0 0.0
    %v2867 = vand.u32 %v2758, 4294901760
    %v2868 = vsub.f32 %v2758, %v2867
    %v2869 = vand.u32 %v2868, 4294901760
    %v2870 = vsub.f32 %v2868, %v2869
    %v2871 = vand.u32 %v2870, 4294901760
    %2872 = vmatpush1.msra.mxu0 %v2871
    %2873 = vmatprep.subr.mxu0 0.0
    %v2874 = vand.u32 %v2759, 4294901760
    %v2875 = vsub.f32 %v2759, %v2874
    %v2876 = vand.u32 %v2875, 4294901760
    %v2877 = vsub.f32 %v2875, %v2876
    %v2878 = vand.u32 %v2877, 4294901760
    %2879 = vmatpush1.msra.mxu0 %v2878
    %2880 = vmatprep.subr.mxu0 0.0
    %v2881 = vand.u32 %v2760, 4294901760
    %v2882 = vsub.f32 %v2760, %v2881
    %v2883 = vand.u32 %v2882, 4294901760
    %v2884 = vsub.f32 %v2882, %v2883
    %v2885 = vand.u32 %v2884, 4294901760
    %2886 = vmatpush1.msra.mxu0 %v2885
    %2887 = vmatprep.subr.mxu0 0.0
    %v2888 = vand.u32 %v2761, 4294901760
    %v2889 = vsub.f32 %v2761, %v2888
    %v2890 = vand.u32 %v2889, 4294901760
    %v2891 = vsub.f32 %v2889, %v2890
    %v2892 = vand.u32 %v2891, 4294901760
    %2893 = vmatpush1.msra.mxu0 %v2892
    %2894 = vmatprep.subr.mxu0 0.0
    %v2895 = vand.u32 %v2762, 4294901760
    %v2896 = vsub.f32 %v2762, %v2895
    %v2897 = vand.u32 %v2896, 4294901760
    %v2898 = vsub.f32 %v2896, %v2897
    %v2899 = vand.u32 %v2898, 4294901760
    %2900 = vmatpush1.msra.mxu0 %v2899
    %2901 = vmatprep.subr.mxu0 0.0
    %v2902 = vand.u32 %v2763, 4294901760
    %v2903 = vsub.f32 %v2763, %v2902
    %v2904 = vand.u32 %v2903, 4294901760
    %v2905 = vsub.f32 %v2903, %v2904
    %v2906 = vand.u32 %v2905, 4294901760
    %2907 = vmatpush1.msra.mxu0 %v2906
    %2908 = vmatprep.subr.mxu0 0.0
    %v2909 = vand.u32 %v2764, 4294901760
    %v2910 = vsub.f32 %v2764, %v2909
    %v2911 = vand.u32 %v2910, 4294901760
    %v2912 = vsub.f32 %v2910, %v2911
    %v2913 = vand.u32 %v2912, 4294901760
    %2914 = vmatpush1.msra.mxu0 %v2913
    %2915 = vmatprep.subr.mxu0 0.0
    %2916 = vmatpush1.msra.mxu0 0.0
    %2917 = vmatprep.subr.mxu0 0.0
    %2918 = vmatpush1.msra.mxu0 0.0
    %2919 = vmatprep.subr.mxu0 0.0
    %2920 = vmatpush1.msra.mxu0 0.0
    %2921 = vmatprep.subr.mxu0 0.0
    %2922 = vmatpush1.msra.mxu0 0.0
    %2923 = vmatprep.subr.mxu0 0.0
    %2924 = vmatpush1.msra.mxu0 0.0
    %2925 = vmatprep.subr.mxu0 0.0
    %2926 = vmatpush1.msra.mxu0 0.0
    %2927 = vmatprep.subr.mxu0 0.0
    %2928 = vmatpush1.msra.mxu0 0.0
    %2929 = vmatprep.subr.mxu0 0.0
    %2930 = vmatpush1.msra.mxu0 0.0
    %2931 = vmatprep.subr.mxu0 0.0
    %2932 = vmatpush1.msra.mxu0 0.0
    %2933 = vmatprep.subr.mxu0 0.0
    %2934 = vmatpush1.msra.mxu0 0.0
    %2935 = vmatprep.subr.mxu0 0.0
    %2936 = vmatpush1.msra.mxu0 0.0
    %2937 = vmatprep.subr.mxu0 0.0
    %2938 = vmatpush1.msra.mxu0 0.0
    %2939 = vmatprep.subr.mxu0 0.0
    %2940 = vmatpush1.msra.mxu0 0.0
    %2941 = vmatprep.subr.mxu0 0.0
    %2942 = vmatpush1.msra.mxu0 0.0
    %2943 = vmatprep.subr.mxu0 0.0
    %2944 = vmatpush1.msra.mxu0 0.0
    %2945 = vmatprep.subr.mxu0 0.0
    %2946 = vmatpush1.msra.mxu0 0.0
    %2947 = vmatprep.subr.mxu0 0.0
    %2948 = vmatpush1.msra.mxu0 0.0
    %2949 = vmatprep.subr.mxu0 0.0
    %2950 = vmatpush1.msra.mxu0 0.0
    %2951 = vmatprep.subr.mxu0 0.0
    %2952 = vmatpush1.msra.mxu0 0.0
    %2953 = vmatprep.subr.mxu0 0.0
    %2954 = vmatpush1.msra.mxu0 0.0
    %2955 = vmatprep.subr.mxu0 0.0
    %2956 = vmatpush1.msra.mxu0 0.0
    %2957 = vmatprep.subr.mxu0 0.0
    %2958 = vmatpush1.msra.mxu0 0.0
    %2959 = vmatprep.subr.mxu0 0.0
    %2960 = vmatpush1.msra.mxu0 0.0
    %2961 = vmatprep.subr.mxu0 0.0
    %2962 = vmatpush1.msra.mxu0 0.0
    %2963 = vmatprep.mubr.f32.mxu0 0.0
    %v2964 = vand.u32 %v2774, 4294901760
    %2965 = vmatmul.mubr.f32.gmra.mrb[0].mxu0 %v2964
    %v2966 = vpop.f32.mrb[0].mxu0
    %v2967 = vadd.f32 %v2856, %v2966
    %v2968 = vpop.f32.mrb[0].mxu0
    %2969 = vdwg.mxu0
    %2970 = vmatprep.subr.mxu0 0.0
    %v2971 = vand.u32 %v2757, 4294901760
    %v2972 = vsub.f32 %v2757, %v2971
    %2973 = vmatpush1.msra.mxu0 %v2972
    %2974 = vmatprep.subr.mxu0 0.0
    %v2975 = vand.u32 %v2758, 4294901760
    %v2976 = vsub.f32 %v2758, %v2975
    %2977 = vmatpush1.msra.mxu0 %v2976
    %2978 = vmatprep.subr.mxu0 0.0
    %v2979 = vand.u32 %v2759, 4294901760
    %v2980 = vsub.f32 %v2759, %v2979
    %2981 = vmatpush1.msra.mxu0 %v2980
    %2982 = vmatprep.subr.mxu0 0.0
    %v2983 = vand.u32 %v2760, 4294901760
    %v2984 = vsub.f32 %v2760, %v2983
    %2985 = vmatpush1.msra.mxu0 %v2984
    %2986 = vmatprep.subr.mxu0 0.0
    %v2987 = vand.u32 %v2761, 4294901760
    %v2988 = vsub.f32 %v2761, %v2987
    %2989 = vmatpush1.msra.mxu0 %v2988
    %2990 = vmatprep.subr.mxu0 0.0
    %v2991 = vand.u32 %v2762, 4294901760
    %v2992 = vsub.f32 %v2762, %v2991
    %2993 = vmatpush1.msra.mxu0 %v2992
    %2994 = vmatprep.subr.mxu0 0.0
    %v2995 = vand.u32 %v2763, 4294901760
    %v2996 = vsub.f32 %v2763, %v2995
    %2997 = vmatpush1.msra.mxu0 %v2996
    %2998 = vmatprep.subr.mxu0 0.0
    %v2999 = vand.u32 %v2764, 4294901760
    %v3000 = vsub.f32 %v2764, %v2999
    %3001 = vmatpush1.msra.mxu0 %v3000
    %3002 = vmatprep.subr.mxu0 0.0
    %3003 = vmatpush1.msra.mxu0 0.0
    %3004 = vmatprep.subr.mxu0 0.0
    %3005 = vmatpush1.msra.mxu0 0.0
    %3006 = vmatprep.subr.mxu0 0.0
    %3007 = vmatpush1.msra.mxu0 0.0
    %3008 = vmatprep.subr.mxu0 0.0
    %3009 = vmatpush1.msra.mxu0 0.0
    %3010 = vmatprep.subr.mxu0 0.0
    %3011 = vmatpush1.msra.mxu0 0.0
    %3012 = vmatprep.subr.mxu0 0.0
    %3013 = vmatpush1.msra.mxu0 0.0
    %3014 = vmatprep.subr.mxu0 0.0
    %3015 = vmatpush1.msra.mxu0 0.0
    %3016 = vmatprep.subr.mxu0 0.0
    %3017 = vmatpush1.msra.mxu0 0.0
    %3018 = vmatprep.subr.mxu0 0.0
    %3019 = vmatpush1.msra.mxu0 0.0
    %3020 = vmatprep.subr.mxu0 0.0
    %3021 = vmatpush1.msra.mxu0 0.0
    %3022 = vmatprep.subr.mxu0 0.0
    %3023 = vmatpush1.msra.mxu0 0.0
    %3024 = vmatprep.subr.mxu0 0.0
    %3025 = vmatpush1.msra.mxu0 0.0
    %3026 = vmatprep.subr.mxu0 0.0
    %3027 = vmatpush1.msra.mxu0 0.0
    %3028 = vmatprep.subr.mxu0 0.0
    %3029 = vmatpush1.msra.mxu0 0.0
    %3030 = vmatprep.subr.mxu0 0.0
    %3031 = vmatpush1.msra.mxu0 0.0
    %3032 = vmatprep.subr.mxu0 0.0
    %3033 = vmatpush1.msra.mxu0 0.0
    %3034 = vmatprep.subr.mxu0 0.0
    %3035 = vmatpush1.msra.mxu0 0.0
    %3036 = vmatprep.subr.mxu0 0.0
    %3037 = vmatpush1.msra.mxu0 0.0
    %3038 = vmatprep.subr.mxu0 0.0
    %3039 = vmatpush1.msra.mxu0 0.0
    %3040 = vmatprep.subr.mxu0 0.0
    %3041 = vmatpush1.msra.mxu0 0.0
    %3042 = vmatprep.subr.mxu0 0.0
    %3043 = vmatpush1.msra.mxu0 0.0
    %3044 = vmatprep.subr.mxu0 0.0
    %3045 = vmatpush1.msra.mxu0 0.0
    %3046 = vmatprep.subr.mxu0 0.0
    %3047 = vmatpush1.msra.mxu0 0.0
    %3048 = vmatprep.subr.mxu0 0.0
    %3049 = vmatpush1.msra.mxu0 0.0
    %3050 = vmatprep.mubr.f32.mxu0 0.0
    %v3051 = vand.u32 %v2774, 4294901760
    %v3052 = vsub.f32 %v2774, %v3051
    %3053 = vmatmul.mubr.f32.gmra.mrb[0].mxu0 %v3052
    %v3054 = vpop.f32.mrb[0].mxu0
    %v3055 = vadd.f32 %v2967, %v3054
    %v3056 = vpop.f32.mrb[0].mxu0
    %3057 = vdwg.mxu0
    %3058 = vmatprep.subr.mxu0 0.0
    %v3059 = vand.u32 %v2757, 4294901760
    %3060 = vmatpush1.msra.mxu0 %v3059
    %3061 = vmatprep.subr.mxu0 0.0
    %v3062 = vand.u32 %v2758, 4294901760
    %3063 = vmatpush1.msra.mxu0 %v3062
    %3064 = vmatprep.subr.mxu0 0.0
    %v3065 = vand.u32 %v2759, 4294901760
    %3066 = vmatpush1.msra.mxu0 %v3065
    %3067 = vmatprep.subr.mxu0 0.0
    %v3068 = vand.u32 %v2760, 4294901760
    %3069 = vmatpush1.msra.mxu0 %v3068
    %3070 = vmatprep.subr.mxu0 0.0
    %v3071 = vand.u32 %v2761, 4294901760
    %3072 = vmatpush1.msra.mxu0 %v3071
    %3073 = vmatprep.subr.mxu0 0.0
    %v3074 = vand.u32 %v2762, 4294901760
    %3075 = vmatpush1.msra.mxu0 %v3074
    %3076 = vmatprep.subr.mxu0 0.0
    %v3077 = vand.u32 %v2763, 4294901760
    %3078 = vmatpush1.msra.mxu0 %v3077
    %3079 = vmatprep.subr.mxu0 0.0
    %v3080 = vand.u32 %v2764, 4294901760
    %3081 = vmatpush1.msra.mxu0 %v3080
    %3082 = vmatprep.subr.mxu0 0.0
    %3083 = vmatpush1.msra.mxu0 0.0
    %3084 = vmatprep.subr.mxu0 0.0
    %3085 = vmatpush1.msra.mxu0 0.0
    %3086 = vmatprep.subr.mxu0 0.0
    %3087 = vmatpush1.msra.mxu0 0.0
    %3088 = vmatprep.subr.mxu0 0.0
    %3089 = vmatpush1.msra.mxu0 0.0
    %3090 = vmatprep.subr.mxu0 0.0
    %3091 = vmatpush1.msra.mxu0 0.0
    %3092 = vmatprep.subr.mxu0 0.0
    %3093 = vmatpush1.msra.mxu0 0.0
    %3094 = vmatprep.subr.mxu0 0.0
    %3095 = vmatpush1.msra.mxu0 0.0
    %3096 = vmatprep.subr.mxu0 0.0
    %3097 = vmatpush1.msra.mxu0 0.0
    %3098 = vmatprep.subr.mxu0 0.0
    %3099 = vmatpush1.msra.mxu0 0.0
    %3100 = vmatprep.subr.mxu0 0.0
    %3101 = vmatpush1.msra.mxu0 0.0
    %3102 = vmatprep.subr.mxu0 0.0
    %3103 = vmatpush1.msra.mxu0 0.0
    %3104 = vmatprep.subr.mxu0 0.0
    %3105 = vmatpush1.msra.mxu0 0.0
    %3106 = vmatprep.subr.mxu0 0.0
    %3107 = vmatpush1.msra.mxu0 0.0
    %3108 = vmatprep.subr.mxu0 0.0
    %3109 = vmatpush1.msra.mxu0 0.0
    %3110 = vmatprep.subr.mxu0 0.0
    %3111 = vmatpush1.msra.mxu0 0.0
    %3112 = vmatprep.subr.mxu0 0.0
    %3113 = vmatpush1.msra.mxu0 0.0
    %3114 = vmatprep.subr.mxu0 0.0
    %3115 = vmatpush1.msra.mxu0 0.0
    %3116 = vmatprep.subr.mxu0 0.0
    %3117 = vmatpush1.msra.mxu0 0.0
    %3118 = vmatprep.subr.mxu0 0.0
    %3119 = vmatpush1.msra.mxu0 0.0
    %3120 = vmatprep.subr.mxu0 0.0
    %3121 = vmatpush1.msra.mxu0 0.0
    %3122 = vmatprep.subr.mxu0 0.0
    %3123 = vmatpush1.msra.mxu0 0.0
    %3124 = vmatprep.subr.mxu0 0.0
    %3125 = vmatpush1.msra.mxu0 0.0
    %3126 = vmatprep.subr.mxu0 0.0
    %3127 = vmatpush1.msra.mxu0 0.0
    %3128 = vmatprep.subr.mxu0 0.0
    %3129 = vmatpush1.msra.mxu0 0.0
    %3130 = vmatprep.mubr.f32.mxu0 0.0
    %v3131 = vand.u32 %v2774, 4294901760
    %v3132 = vsub.f32 %v2774, %v3131
    %v3133 = vand.u32 %v3132, 4294901760
    %3134 = vmatmul.mubr.f32.gmra.mrb[0].mxu0 %v3133
    %v3135 = vpop.f32.mrb[0].mxu0
    %v3136 = vadd.f32 %v3055, %v3135
    %v3137 = vpop.f32.mrb[0].mxu0
    %3138 = vdwg.mxu0
    %3139 = vmatprep.subr.mxu0 0.0
    %v3140 = vand.u32 %v2757, 4294901760
    %v3141 = vsub.f32 %v2757, %v3140
    %v3142 = vand.u32 %v3141, 4294901760
    %3143 = vmatpush1.msra.mxu0 %v3142
    %3144 = vmatprep.subr.mxu0 0.0
    %v3145 = vand.u32 %v2758, 4294901760
    %v3146 = vsub.f32 %v2758, %v3145
    %v3147 = vand.u32 %v3146, 4294901760
    %3148 = vmatpush1.msra.mxu0 %v3147
    %3149 = vmatprep.subr.mxu0 0.0
    %v3150 = vand.u32 %v2759, 4294901760
    %v3151 = vsub.f32 %v2759, %v3150
    %v3152 = vand.u32 %v3151, 4294901760
    %3153 = vmatpush1.msra.mxu0 %v3152
    %3154 = vmatprep.subr.mxu0 0.0
    %v3155 = vand.u32 %v2760, 4294901760
    %v3156 = vsub.f32 %v2760, %v3155
    %v3157 = vand.u32 %v3156, 4294901760
    %3158 = vmatpush1.msra.mxu0 %v3157
    %3159 = vmatprep.subr.mxu0 0.0
    %v3160 = vand.u32 %v2761, 4294901760
    %v3161 = vsub.f32 %v2761, %v3160
    %v3162 = vand.u32 %v3161, 4294901760
    %3163 = vmatpush1.msra.mxu0 %v3162
    %3164 = vmatprep.subr.mxu0 0.0
    %v3165 = vand.u32 %v2762, 4294901760
    %v3166 = vsub.f32 %v2762, %v3165
    %v3167 = vand.u32 %v3166, 4294901760
    %3168 = vmatpush1.msra.mxu0 %v3167
    %3169 = vmatprep.subr.mxu0 0.0
    %v3170 = vand.u32 %v2763, 4294901760
    %v3171 = vsub.f32 %v2763, %v3170
    %v3172 = vand.u32 %v3171, 4294901760
    %3173 = vmatpush1.msra.mxu0 %v3172
    %3174 = vmatprep.subr.mxu0 0.0
    %v3175 = vand.u32 %v2764, 4294901760
    %v3176 = vsub.f32 %v2764, %v3175
    %v3177 = vand.u32 %v3176, 4294901760
    %3178 = vmatpush1.msra.mxu0 %v3177
    %3179 = vmatprep.subr.mxu0 0.0
    %3180 = vmatpush1.msra.mxu0 0.0
    %3181 = vmatprep.subr.mxu0 0.0
    %3182 = vmatpush1.msra.mxu0 0.0
    %3183 = vmatprep.subr.mxu0 0.0
    %3184 = vmatpush1.msra.mxu0 0.0
    %3185 = vmatprep.subr.mxu0 0.0
    %3186 = vmatpush1.msra.mxu0 0.0
    %3187 = vmatprep.subr.mxu0 0.0
    %3188 = vmatpush1.msra.mxu0 0.0
    %3189 = vmatprep.subr.mxu0 0.0
    %3190 = vmatpush1.msra.mxu0 0.0
    %3191 = vmatprep.subr.mxu0 0.0
    %3192 = vmatpush1.msra.mxu0 0.0
    %3193 = vmatprep.subr.mxu0 0.0
    %3194 = vmatpush1.msra.mxu0 0.0
    %3195 = vmatprep.subr.mxu0 0.0
    %3196 = vmatpush1.msra.mxu0 0.0
    %3197 = vmatprep.subr.mxu0 0.0
    %3198 = vmatpush1.msra.mxu0 0.0
    %3199 = vmatprep.subr.mxu0 0.0
    %3200 = vmatpush1.msra.mxu0 0.0
    %3201 = vmatprep.subr.mxu0 0.0
    %3202 = vmatpush1.msra.mxu0 0.0
    %3203 = vmatprep.subr.mxu0 0.0
    %3204 = vmatpush1.msra.mxu0 0.0
    %3205 = vmatprep.subr.mxu0 0.0
    %3206 = vmatpush1.msra.mxu0 0.0
    %3207 = vmatprep.subr.mxu0 0.0
    %3208 = vmatpush1.msra.mxu0 0.0
    %3209 = vmatprep.subr.mxu0 0.0
    %3210 = vmatpush1.msra.mxu0 0.0
    %3211 = vmatprep.subr.mxu0 0.0
    %3212 = vmatpush1.msra.mxu0 0.0
    %3213 = vmatprep.subr.mxu0 0.0
    %3214 = vmatpush1.msra.mxu0 0.0
    %3215 = vmatprep.subr.mxu0 0.0
    %3216 = vmatpush1.msra.mxu0 0.0
    %3217 = vmatprep.subr.mxu0 0.0
    %3218 = vmatpush1.msra.mxu0 0.0
    %3219 = vmatprep.subr.mxu0 0.0
    %3220 = vmatpush1.msra.mxu0 0.0
    %3221 = vmatprep.subr.mxu0 0.0
    %3222 = vmatpush1.msra.mxu0 0.0
    %3223 = vmatprep.subr.mxu0 0.0
    %3224 = vmatpush1.msra.mxu0 0.0
    %3225 = vmatprep.subr.mxu0 0.0
    %3226 = vmatpush1.msra.mxu0 0.0
    %3227 = vmatprep.mubr.f32.mxu0 0.0
    %v3228 = vand.u32 %v2774, 4294901760
    %3229 = vmatmul.mubr.f32.gmra.mrb[0].mxu0 %v3228
    %v3230 = vpop.f32.mrb[0].mxu0
    %v3231 = vadd.f32 %v3136, %v3230
    %v3232 = vpop.f32.mrb[0].mxu0
    %3233 = vdwg.mxu0
    %3234 = vmatprep.subr.mxu0 0.0
    %v3235 = vand.u32 %v2757, 4294901760
    %3236 = vmatpush1.msra.mxu0 %v3235
    %3237 = vmatprep.subr.mxu0 0.0
    %v3238 = vand.u32 %v2758, 4294901760
    %3239 = vmatpush1.msra.mxu0 %v3238
    %3240 = vmatprep.subr.mxu0 0.0
    %v3241 = vand.u32 %v2759, 4294901760
    %3242 = vmatpush1.msra.mxu0 %v3241
    %3243 = vmatprep.subr.mxu0 0.0
    %v3244 = vand.u32 %v2760, 4294901760
    %3245 = vmatpush1.msra.mxu0 %v3244
    %3246 = vmatprep.subr.mxu0 0.0
    %v3247 = vand.u32 %v2761, 4294901760
    %3248 = vmatpush1.msra.mxu0 %v3247
    %3249 = vmatprep.subr.mxu0 0.0
    %v3250 = vand.u32 %v2762, 4294901760
    %3251 = vmatpush1.msra.mxu0 %v3250
    %3252 = vmatprep.subr.mxu0 0.0
    %v3253 = vand.u32 %v2763, 4294901760
    %3254 = vmatpush1.msra.mxu0 %v3253
    %3255 = vmatprep.subr.mxu0 0.0
    %v3256 = vand.u32 %v2764, 4294901760
    %3257 = vmatpush1.msra.mxu0 %v3256
    %3258 = vmatprep.subr.mxu0 0.0
    %3259 = vmatpush1.msra.mxu0 0.0
    %3260 = vmatprep.subr.mxu0 0.0
    %3261 = vmatpush1.msra.mxu0 0.0
    %3262 = vmatprep.subr.mxu0 0.0
    %3263 = vmatpush1.msra.mxu0 0.0
    %3264 = vmatprep.subr.mxu0 0.0
    %3265 = vmatpush1.msra.mxu0 0.0
    %3266 = vmatprep.subr.mxu0 0.0
    %3267 = vmatpush1.msra.mxu0 0.0
    %3268 = vmatprep.subr.mxu0 0.0
    %3269 = vmatpush1.msra.mxu0 0.0
    %3270 = vmatprep.subr.mxu0 0.0
    %3271 = vmatpush1.msra.mxu0 0.0
    %3272 = vmatprep.subr.mxu0 0.0
    %3273 = vmatpush1.msra.mxu0 0.0
    %3274 = vmatprep.subr.mxu0 0.0
    %3275 = vmatpush1.msra.mxu0 0.0
    %3276 = vmatprep.subr.mxu0 0.0
    %3277 = vmatpush1.msra.mxu0 0.0
    %3278 = vmatprep.subr.mxu0 0.0
    %3279 = vmatpush1.msra.mxu0 0.0
    %3280 = vmatprep.subr.mxu0 0.0
    %3281 = vmatpush1.msra.mxu0 0.0
    %3282 = vmatprep.subr.mxu0 0.0
    %3283 = vmatpush1.msra.mxu0 0.0
    %3284 = vmatprep.subr.mxu0 0.0
    %3285 = vmatpush1.msra.mxu0 0.0
    %3286 = vmatprep.subr.mxu0 0.0
    %3287 = vmatpush1.msra.mxu0 0.0
    %3288 = vmatprep.subr.mxu0 0.0
    %3289 = vmatpush1.msra.mxu0 0.0
    %3290 = vmatprep.subr.mxu0 0.0
    %3291 = vmatpush1.msra.mxu0 0.0
    %3292 = vmatprep.subr.mxu0 0.0
    %3293 = vmatpush1.msra.mxu0 0.0
    %3294 = vmatprep.subr.mxu0 0.0
    %3295 = vmatpush1.msra.mxu0 0.0
    %3296 = vmatprep.subr.mxu0 0.0
    %3297 = vmatpush1.msra.mxu0 0.0
    %3298 = vmatprep.subr.mxu0 0.0
    %3299 = vmatpush1.msra.mxu0 0.0
    %3300 = vmatprep.subr.mxu0 0.0
    %3301 = vmatpush1.msra.mxu0 0.0
    %3302 = vmatprep.subr.mxu0 0.0
    %3303 = vmatpush1.msra.mxu0 0.0
    %3304 = vmatprep.subr.mxu0 0.0
    %3305 = vmatpush1.msra.mxu0 0.0
    %3306 = vmatprep.mubr.f32.mxu0 0.0
    %v3307 = vand.u32 %v2774, 4294901760
    %3308 = vmatmul.mubr.f32.gmra.mrb[0].mxu0 %v3307
    %v3309 = vpop.f32.mrb[0].mxu0
    %v3310 = vadd.f32 %v3231, %v3309
    %v3311 = vpop.f32.mrb[0].mxu0
    %3312 = vdwg.mxu0
    %v3313 = vmax.f32 %v3310, 0.0
    %v3314 = vld [vmem:[%s5] sm:$0xf]
    %v3315 = vld [vmem:[%s6] sm:$0x1]
    %v3317 = vlaneseq
    %v3318 = vshrl.u32 %v3317, 7
    %v3319 = vsub.s32 0, %v3318
    %v3320 = vrot.slane %v3315, %v3319
    %vm3322 = vcmask 31744
    %v3324 = vsel %vm3322, %v3313, 0
    %vm3326 = vcmask 1043456
    %v3328 = vsel %vm3326, %v3314, 0
    %3330 = vmatprep.subr.mxu0 0.0
    %v3331 = vand.u32 %v3328, 4294901760
    %3332 = vmatpush1.msra.mxu0 %v3331
    %3333 = vmatprep.subr.mxu0 0.0
    %3334 = vmatpush1.msra.mxu0 0.0
    %3335 = vmatprep.subr.mxu0 0.0
    %3336 = vmatpush1.msra.mxu0 0.0
    %3337 = vmatprep.subr.mxu0 0.0
    %3338 = vmatpush1.msra.mxu0 0.0
    %3339 = vmatprep.subr.mxu0 0.0
    %3340 = vmatpush1.msra.mxu0 0.0
    %3341 = vmatprep.subr.mxu0 0.0
    %3342 = vmatpush1.msra.mxu0 0.0
    %3343 = vmatprep.subr.mxu0 0.0
    %3344 = vmatpush1.msra.mxu0 0.0
    %3345 = vmatprep.subr.mxu0 0.0
    %3346 = vmatpush1.msra.mxu0 0.0
    %3347 = vmatprep.subr.mxu0 0.0
    %3348 = vmatpush1.msra.mxu0 0.0
    %3349 = vmatprep.subr.mxu0 0.0
    %3350 = vmatpush1.msra.mxu0 0.0
    %3351 = vmatprep.subr.mxu0 0.0
    %3352 = vmatpush1.msra.mxu0 0.0
    %3353 = vmatprep.subr.mxu0 0.0
    %3354 = vmatpush1.msra.mxu0 0.0
    %3355 = vmatprep.subr.mxu0 0.0
    %3356 = vmatpush1.msra.mxu0 0.0
    %3357 = vmatprep.subr.mxu0 0.0
    %3358 = vmatpush1.msra.mxu0 0.0
    %3359 = vmatprep.subr.mxu0 0.0
    %3360 = vmatpush1.msra.mxu0 0.0
    %3361 = vmatprep.subr.mxu0 0.0
    %3362 = vmatpush1.msra.mxu0 0.0
    %3363 = vmatprep.subr.mxu0 0.0
    %3364 = vmatpush1.msra.mxu0 0.0
    %3365 = vmatprep.subr.mxu0 0.0
    %3366 = vmatpush1.msra.mxu0 0.0
    %3367 = vmatprep.subr.mxu0 0.0
    %3368 = vmatpush1.msra.mxu0 0.0
    %3369 = vmatprep.subr.mxu0 0.0
    %3370 = vmatpush1.msra.mxu0 0.0
    %3371 = vmatprep.subr.mxu0 0.0
    %3372 = vmatpush1.msra.mxu0 0.0
    %3373 = vmatprep.subr.mxu0 0.0
    %3374 = vmatpush1.msra.mxu0 0.0
    %3375 = vmatprep.subr.mxu0 0.0
    %3376 = vmatpush1.msra.mxu0 0.0
    %3377 = vmatprep.subr.mxu0 0.0
    %3378 = vmatpush1.msra.mxu0 0.0
    %3379 = vmatprep.subr.mxu0 0.0
    %3380 = vmatpush1.msra.mxu0 0.0
    %3381 = vmatprep.subr.mxu0 0.0
    %3382 = vmatpush1.msra.mxu0 0.0
    %3383 = vmatprep.subr.mxu0 0.0
    %3384 = vmatpush1.msra.mxu0 0.0
    %3385 = vmatprep.subr.mxu0 0.0
    %3386 = vmatpush1.msra.mxu0 0.0
    %3387 = vmatprep.subr.mxu0 0.0
    %3388 = vmatpush1.msra.mxu0 0.0
    %3389 = vmatprep.subr.mxu0 0.0
    %3390 = vmatpush1.msra.mxu0 0.0
    %3391 = vmatprep.subr.mxu0 0.0
    %3392 = vmatpush1.msra.mxu0 0.0
    %3393 = vmatprep.subr.mxu0 0.0
    %3394 = vmatpush1.msra.mxu0 0.0
    %3395 = vmatprep.mubr.f32.mxu0 0.0
    %v3396 = vand.u32 %v3324, 4294901760
    %v3397 = vsub.f32 %v3324, %v3396
    %v3398 = vand.u32 %v3397, 4294901760
    %v3399 = vsub.f32 %v3397, %v3398
    %v3400 = vand.u32 %v3399, 4294901760
    %3401 = vmatmul.mubr.f32.gmra.mrb[0].mxu0 %v3400
    %v3402 = vpop.f32.mrb[0].mxu0
    %v3403 = vadd.f32 %v3320, %v3402
    %v3404 = vpop.f32.mrb[0].mxu0
    %3405 = vdwg.mxu0
    %3406 = vmatprep.subr.mxu0 0.0
    %v3407 = vand.u32 %v3328, 4294901760
    %v3408 = vsub.f32 %v3328, %v3407
    %v3409 = vand.u32 %v3408, 4294901760
    %v3410 = vsub.f32 %v3408, %v3409
    %v3411 = vand.u32 %v3410, 4294901760
    %3412 = vmatpush1.msra.mxu0 %v3411
    %3413 = vmatprep.subr.mxu0 0.0
    %3414 = vmatpush1.msra.mxu0 0.0
    %3415 = vmatprep.subr.mxu0 0.0
    %3416 = vmatpush1.msra.mxu0 0.0
    %3417 = vmatprep.subr.mxu0 0.0
    %3418 = vmatpush1.msra.mxu0 0.0
    %3419 = vmatprep.subr.mxu0 0.0
    %3420 = vmatpush1.msra.mxu0 0.0
    %3421 = vmatprep.subr.mxu0 0.0
    %3422 = vmatpush1.msra.mxu0 0.0
    %3423 = vmatprep.subr.mxu0 0.0
    %3424 = vmatpush1.msra.mxu0 0.0
    %3425 = vmatprep.subr.mxu0 0.0
    %3426 = vmatpush1.msra.mxu0 0.0
    %3427 = vmatprep.subr.mxu0 0.0
    %3428 = vmatpush1.msra.mxu0 0.0
    %3429 = vmatprep.subr.mxu0 0.0
    %3430 = vmatpush1.msra.mxu0 0.0
    %3431 = vmatprep.subr.mxu0 0.0
    %3432 = vmatpush1.msra.mxu0 0.0
    %3433 = vmatprep.subr.mxu0 0.0
    %3434 = vmatpush1.msra.mxu0 0.0
    %3435 = vmatprep.subr.mxu0 0.0
    %3436 = vmatpush1.msra.mxu0 0.0
    %3437 = vmatprep.subr.mxu0 0.0
    %3438 = vmatpush1.msra.mxu0 0.0
    %3439 = vmatprep.subr.mxu0 0.0
    %3440 = vmatpush1.msra.mxu0 0.0
    %3441 = vmatprep.subr.mxu0 0.0
    %3442 = vmatpush1.msra.mxu0 0.0
    %3443 = vmatprep.subr.mxu0 0.0
    %3444 = vmatpush1.msra.mxu0 0.0
    %3445 = vmatprep.subr.mxu0 0.0
    %3446 = vmatpush1.msra.mxu0 0.0
    %3447 = vmatprep.subr.mxu0 0.0
    %3448 = vmatpush1.msra.mxu0 0.0
    %3449 = vmatprep.subr.mxu0 0.0
    %3450 = vmatpush1.msra.mxu0 0.0
    %3451 = vmatprep.subr.mxu0 0.0
    %3452 = vmatpush1.msra.mxu0 0.0
    %3453 = vmatprep.subr.mxu0 0.0
    %3454 = vmatpush1.msra.mxu0 0.0
    %3455 = vmatprep.subr.mxu0 0.0
    %3456 = vmatpush1.msra.mxu0 0.0
    %3457 = vmatprep.subr.mxu0 0.0
    %3458 = vmatpush1.msra.mxu0 0.0
    %3459 = vmatprep.subr.mxu0 0.0
    %3460 = vmatpush1.msra.mxu0 0.0
    %3461 = vmatprep.subr.mxu0 0.0
    %3462 = vmatpush1.msra.mxu0 0.0
    %3463 = vmatprep.subr.mxu0 0.0
    %3464 = vmatpush1.msra.mxu0 0.0
    %3465 = vmatprep.subr.mxu0 0.0
    %3466 = vmatpush1.msra.mxu0 0.0
    %3467 = vmatprep.subr.mxu0 0.0
    %3468 = vmatpush1.msra.mxu0 0.0
    %3469 = vmatprep.subr.mxu0 0.0
    %3470 = vmatpush1.msra.mxu0 0.0
    %3471 = vmatprep.subr.mxu0 0.0
    %3472 = vmatpush1.msra.mxu0 0.0
    %3473 = vmatprep.subr.mxu0 0.0
    %3474 = vmatpush1.msra.mxu0 0.0
    %3475 = vmatprep.mubr.f32.mxu0 0.0
    %v3476 = vand.u32 %v3324, 4294901760
    %3477 = vmatmul.mubr.f32.gmra.mrb[0].mxu0 %v3476
    %v3478 = vpop.f32.mrb[0].mxu0
    %v3479 = vadd.f32 %v3403, %v3478
    %v3480 = vpop.f32.mrb[0].mxu0
    %3481 = vdwg.mxu0
    %3482 = vmatprep.subr.mxu0 0.0
    %v3483 = vand.u32 %v3328, 4294901760
    %v3484 = vsub.f32 %v3328, %v3483
    %3485 = vmatpush1.msra.mxu0 %v3484
    %3486 = vmatprep.subr.mxu0 0.0
    %3487 = vmatpush1.msra.mxu0 0.0
    %3488 = vmatprep.subr.mxu0 0.0
    %3489 = vmatpush1.msra.mxu0 0.0
    %3490 = vmatprep.subr.mxu0 0.0
    %3491 = vmatpush1.msra.mxu0 0.0
    %3492 = vmatprep.subr.mxu0 0.0
    %3493 = vmatpush1.msra.mxu0 0.0
    %3494 = vmatprep.subr.mxu0 0.0
    %3495 = vmatpush1.msra.mxu0 0.0
    %3496 = vmatprep.subr.mxu0 0.0
    %3497 = vmatpush1.msra.mxu0 0.0
    %3498 = vmatprep.subr.mxu0 0.0
    %3499 = vmatpush1.msra.mxu0 0.0
    %3500 = vmatprep.subr.mxu0 0.0
    %3501 = vmatpush1.msra.mxu0 0.0
    %3502 = vmatprep.subr.mxu0 0.0
    %3503 = vmatpush1.msra.mxu0 0.0
    %3504 = vmatprep.subr.mxu0 0.0
    %3505 = vmatpush1.msra.mxu0 0.0
    %3506 = vmatprep.subr.mxu0 0.0
    %3507 = vmatpush1.msra.mxu0 0.0
    %3508 = vmatprep.subr.mxu0 0.0
    %3509 = vmatpush1.msra.mxu0 0.0
    %3510 = vmatprep.subr.mxu0 0.0
    %3511 = vmatpush1.msra.mxu0 0.0
    %3512 = vmatprep.subr.mxu0 0.0
    %3513 = vmatpush1.msra.mxu0 0.0
    %3514 = vmatprep.subr.mxu0 0.0
    %3515 = vmatpush1.msra.mxu0 0.0
    %3516 = vmatprep.subr.mxu0 0.0
    %3517 = vmatpush1.msra.mxu0 0.0
    %3518 = vmatprep.subr.mxu0 0.0
    %3519 = vmatpush1.msra.mxu0 0.0
    %3520 = vmatprep.subr.mxu0 0.0
    %3521 = vmatpush1.msra.mxu0 0.0
    %3522 = vmatprep.subr.mxu0 0.0
    %3523 = vmatpush1.msra.mxu0 0.0
    %3524 = vmatprep.subr.mxu0 0.0
    %3525 = vmatpush1.msra.mxu0 0.0
    %3526 = vmatprep.subr.mxu0 0.0
    %3527 = vmatpush1.msra.mxu0 0.0
    %3528 = vmatprep.subr.mxu0 0.0
    %3529 = vmatpush1.msra.mxu0 0.0
    %3530 = vmatprep.subr.mxu0 0.0
    %3531 = vmatpush1.msra.mxu0 0.0
    %3532 = vmatprep.subr.mxu0 0.0
    %3533 = vmatpush1.msra.mxu0 0.0
    %3534 = vmatprep.subr.mxu0 0.0
    %3535 = vmatpush1.msra.mxu0 0.0
    %3536 = vmatprep.subr.mxu0 0.0
    %3537 = vmatpush1.msra.mxu0 0.0
    %3538 = vmatprep.subr.mxu0 0.0
    %3539 = vmatpush1.msra.mxu0 0.0
    %3540 = vmatprep.subr.mxu0 0.0
    %3541 = vmatpush1.msra.mxu0 0.0
    %3542 = vmatprep.subr.mxu0 0.0
    %3543 = vmatpush1.msra.mxu0 0.0
    %3544 = vmatprep.subr.mxu0 0.0
    %3545 = vmatpush1.msra.mxu0 0.0
    %3546 = vmatprep.subr.mxu0 0.0
    %3547 = vmatpush1.msra.mxu0 0.0
    %3548 = vmatprep.mubr.f32.mxu0 0.0
    %v3549 = vand.u32 %v3324, 4294901760
    %v3550 = vsub.f32 %v3324, %v3549
    %3551 = vmatmul.mubr.f32.gmra.mrb[0].mxu0 %v3550
    %v3552 = vpop.f32.mrb[0].mxu0
    %v3553 = vadd.f32 %v3479, %v3552
    %v3554 = vpop.f32.mrb[0].mxu0
    %3555 = vdwg.mxu0
    %3556 = vmatprep.subr.mxu0 0.0
    %v3557 = vand.u32 %v3328, 4294901760
    %3558 = vmatpush1.msra.mxu0 %v3557
    %3559 = vmatprep.subr.mxu0 0.0
    %3560 = vmatpush1.msra.mxu0 0.0
    %3561 = vmatprep.subr.mxu0 0.0
    %3562 = vmatpush1.msra.mxu0 0.0
    %3563 = vmatprep.subr.mxu0 0.0
    %3564 = vmatpush1.msra.mxu0 0.0
    %3565 = vmatprep.subr.mxu0 0.0
    %3566 = vmatpush1.msra.mxu0 0.0
    %3567 = vmatprep.subr.mxu0 0.0
    %3568 = vmatpush1.msra.mxu0 0.0
    %3569 = vmatprep.subr.mxu0 0.0
    %3570 = vmatpush1.msra.mxu0 0.0
    %3571 = vmatprep.subr.mxu0 0.0
    %3572 = vmatpush1.msra.mxu0 0.0
    %3573 = vmatprep.subr.mxu0 0.0
    %3574 = vmatpush1.msra.mxu0 0.0
    %3575 = vmatprep.subr.mxu0 0.0
    %3576 = vmatpush1.msra.mxu0 0.0
    %3577 = vmatprep.subr.mxu0 0.0
    %3578 = vmatpush1.msra.mxu0 0.0
    %3579 = vmatprep.subr.mxu0 0.0
    %3580 = vmatpush1.msra.mxu0 0.0
    %3581 = vmatprep.subr.mxu0 0.0
    %3582 = vmatpush1.msra.mxu0 0.0
    %3583 = vmatprep.subr.mxu0 0.0
    %3584 = vmatpush1.msra.mxu0 0.0
    %3585 = vmatprep.subr.mxu0 0.0
    %3586 = vmatpush1.msra.mxu0 0.0
    %3587 = vmatprep.subr.mxu0 0.0
    %3588 = vmatpush1.msra.mxu0 0.0
    %3589 = vmatprep.subr.mxu0 0.0
    %3590 = vmatpush1.msra.mxu0 0.0
    %3591 = vmatprep.subr.mxu0 0.0
    %3592 = vmatpush1.msra.mxu0 0.0
    %3593 = vmatprep.subr.mxu0 0.0
    %3594 = vmatpush1.msra.mxu0 0.0
    %3595 = vmatprep.subr.mxu0 0.0
    %3596 = vmatpush1.msra.mxu0 0.0
    %3597 = vmatprep.subr.mxu0 0.0
    %3598 = vmatpush1.msra.mxu0 0.0
    %3599 = vmatprep.subr.mxu0 0.0
    %3600 = vmatpush1.msra.mxu0 0.0
    %3601 = vmatprep.subr.mxu0 0.0
    %3602 = vmatpush1.msra.mxu0 0.0
    %3603 = vmatprep.subr.mxu0 0.0
    %3604 = vmatpush1.msra.mxu0 0.0
    %3605 = vmatprep.subr.mxu0 0.0
    %3606 = vmatpush1.msra.mxu0 0.0
    %3607 = vmatprep.subr.mxu0 0.0
    %3608 = vmatpush1.msra.mxu0 0.0
    %3609 = vmatprep.subr.mxu0 0.0
    %3610 = vmatpush1.msra.mxu0 0.0
    %3611 = vmatprep.subr.mxu0 0.0
    %3612 = vmatpush1.msra.mxu0 0.0
    %3613 = vmatprep.subr.mxu0 0.0
    %3614 = vmatpush1.msra.mxu0 0.0
    %3615 = vmatprep.subr.mxu0 0.0
    %3616 = vmatpush1.msra.mxu0 0.0
    %3617 = vmatprep.subr.mxu0 0.0
    %3618 = vmatpush1.msra.mxu0 0.0
    %3619 = vmatprep.subr.mxu0 0.0
    %3620 = vmatpush1.msra.mxu0 0.0
    %3621 = vmatprep.mubr.f32.mxu0 0.0
    %v3622 = vand.u32 %v3324, 4294901760
    %v3623 = vsub.f32 %v3324, %v3622
    %v3624 = vand.u32 %v3623, 4294901760
    %3625 = vmatmul.mubr.f32.gmra.mrb[0].mxu0 %v3624
    %v3626 = vpop.f32.mrb[0].mxu0
    %v3627 = vadd.f32 %v3553, %v3626
    %v3628 = vpop.f32.mrb[0].mxu0
    %3629 = vdwg.mxu0
    %3630 = vmatprep.subr.mxu0 0.0
    %v3631 = vand.u32 %v3328, 4294901760
    %v3632 = vsub.f32 %v3328, %v3631
    %v3633 = vand.u32 %v3632, 4294901760
    %3634 = vmatpush1.msra.mxu0 %v3633
    %3635 = vmatprep.subr.mxu0 0.0
    %3636 = vmatpush1.msra.mxu0 0.0
    %3637 = vmatprep.subr.mxu0 0.0
    %3638 = vmatpush1.msra.mxu0 0.0
    %3639 = vmatprep.subr.mxu0 0.0
    %3640 = vmatpush1.msra.mxu0 0.0
    %3641 = vmatprep.subr.mxu0 0.0
    %3642 = vmatpush1.msra.mxu0 0.0
    %3643 = vmatprep.subr.mxu0 0.0
    %3644 = vmatpush1.msra.mxu0 0.0
    %3645 = vmatprep.subr.mxu0 0.0
    %3646 = vmatpush1.msra.mxu0 0.0
    %3647 = vmatprep.subr.mxu0 0.0
    %3648 = vmatpush1.msra.mxu0 0.0
    %3649 = vmatprep.subr.mxu0 0.0
    %3650 = vmatpush1.msra.mxu0 0.0
    %3651 = vmatprep.subr.mxu0 0.0
    %3652 = vmatpush1.msra.mxu0 0.0
    %3653 = vmatprep.subr.mxu0 0.0
    %3654 = vmatpush1.msra.mxu0 0.0
    %3655 = vmatprep.subr.mxu0 0.0
    %3656 = vmatpush1.msra.mxu0 0.0
    %3657 = vmatprep.subr.mxu0 0.0
    %3658 = vmatpush1.msra.mxu0 0.0
    %3659 = vmatprep.subr.mxu0 0.0
    %3660 = vmatpush1.msra.mxu0 0.0
    %3661 = vmatprep.subr.mxu0 0.0
    %3662 = vmatpush1.msra.mxu0 0.0
    %3663 = vmatprep.subr.mxu0 0.0
    %3664 = vmatpush1.msra.mxu0 0.0
    %3665 = vmatprep.subr.mxu0 0.0
    %3666 = vmatpush1.msra.mxu0 0.0
    %3667 = vmatprep.subr.mxu0 0.0
    %3668 = vmatpush1.msra.mxu0 0.0
    %3669 = vmatprep.subr.mxu0 0.0
    %3670 = vmatpush1.msra.mxu0 0.0
    %3671 = vmatprep.subr.mxu0 0.0
    %3672 = vmatpush1.msra.mxu0 0.0
    %3673 = vmatprep.subr.mxu0 0.0
    %3674 = vmatpush1.msra.mxu0 0.0
    %3675 = vmatprep.subr.mxu0 0.0
    %3676 = vmatpush1.msra.mxu0 0.0
    %3677 = vmatprep.subr.mxu0 0.0
    %3678 = vmatpush1.msra.mxu0 0.0
    %3679 = vmatprep.subr.mxu0 0.0
    %3680 = vmatpush1.msra.mxu0 0.0
    %3681 = vmatprep.subr.mxu0 0.0
    %3682 = vmatpush1.msra.mxu0 0.0
    %3683 = vmatprep.subr.mxu0 0.0
    %3684 = vmatpush1.msra.mxu0 0.0
    %3685 = vmatprep.subr.mxu0 0.0
    %3686 = vmatpush1.msra.mxu0 0.0
    %3687 = vmatprep.subr.mxu0 0.0
    %3688 = vmatpush1.msra.mxu0 0.0
    %3689 = vmatprep.subr.mxu0 0.0
    %3690 = vmatpush1.msra.mxu0 0.0
    %3691 = vmatprep.subr.mxu0 0.0
    %3692 = vmatpush1.msra.mxu0 0.0
    %3693 = vmatprep.subr.mxu0 0.0
    %3694 = vmatpush1.msra.mxu0 0.0
    %3695 = vmatprep.subr.mxu0 0.0
    %3696 = vmatpush1.msra.mxu0 0.0
    %3697 = vmatprep.mubr.f32.mxu0 0.0
    %v3698 = vand.u32 %v3324, 4294901760
    %3699 = vmatmul.mubr.f32.gmra.mrb[0].mxu0 %v3698
    %v3700 = vpop.f32.mrb[0].mxu0
    %v3701 = vadd.f32 %v3627, %v3700
    %v3702 = vpop.f32.mrb[0].mxu0
    %3703 = vdwg.mxu0
    %3704 = vmatprep.subr.mxu0 0.0
    %v3705 = vand.u32 %v3328, 4294901760
    %3706 = vmatpush1.msra.mxu0 %v3705
    %3707 = vmatprep.subr.mxu0 0.0
    %3708 = vmatpush1.msra.mxu0 0.0
    %3709 = vmatprep.subr.mxu0 0.0
    %3710 = vmatpush1.msra.mxu0 0.0
    %3711 = vmatprep.subr.mxu0 0.0
    %3712 = vmatpush1.msra.mxu0 0.0
    %3713 = vmatprep.subr.mxu0 0.0
    %3714 = vmatpush1.msra.mxu0 0.0
    %3715 = vmatprep.subr.mxu0 0.0
    %3716 = vmatpush1.msra.mxu0 0.0
    %3717 = vmatprep.subr.mxu0 0.0
    %3718 = vmatpush1.msra.mxu0 0.0
    %3719 = vmatprep.subr.mxu0 0.0
    %3720 = vmatpush1.msra.mxu0 0.0
    %3721 = vmatprep.subr.mxu0 0.0
    %3722 = vmatpush1.msra.mxu0 0.0
    %3723 = vmatprep.subr.mxu0 0.0
    %3724 = vmatpush1.msra.mxu0 0.0
    %3725 = vmatprep.subr.mxu0 0.0
    %3726 = vmatpush1.msra.mxu0 0.0
    %3727 = vmatprep.subr.mxu0 0.0
    %3728 = vmatpush1.msra.mxu0 0.0
    %3729 = vmatprep.subr.mxu0 0.0
    %3730 = vmatpush1.msra.mxu0 0.0
    %3731 = vmatprep.subr.mxu0 0.0
    %3732 = vmatpush1.msra.mxu0 0.0
    %3733 = vmatprep.subr.mxu0 0.0
    %3734 = vmatpush1.msra.mxu0 0.0
    %3735 = vmatprep.subr.mxu0 0.0
    %3736 = vmatpush1.msra.mxu0 0.0
    %3737 = vmatprep.subr.mxu0 0.0
    %3738 = vmatpush1.msra.mxu0 0.0
    %3739 = vmatprep.subr.mxu0 0.0
    %3740 = vmatpush1.msra.mxu0 0.0
    %3741 = vmatprep.subr.mxu0 0.0
    %3742 = vmatpush1.msra.mxu0 0.0
    %3743 = vmatprep.subr.mxu0 0.0
    %3744 = vmatpush1.msra.mxu0 0.0
    %3745 = vmatprep.subr.mxu0 0.0
    %3746 = vmatpush1.msra.mxu0 0.0
    %3747 = vmatprep.subr.mxu0 0.0
    %3748 = vmatpush1.msra.mxu0 0.0
    %3749 = vmatprep.subr.mxu0 0.0
    %3750 = vmatpush1.msra.mxu0 0.0
    %3751 = vmatprep.subr.mxu0 0.0
    %3752 = vmatpush1.msra.mxu0 0.0
    %3753 = vmatprep.subr.mxu0 0.0
    %3754 = vmatpush1.msra.mxu0 0.0
    %3755 = vmatprep.subr.mxu0 0.0
    %3756 = vmatpush1.msra.mxu0 0.0
    %3757 = vmatprep.subr.mxu0 0.0
    %3758 = vmatpush1.msra.mxu0 0.0
    %3759 = vmatprep.subr.mxu0 0.0
    %3760 = vmatpush1.msra.mxu0 0.0
    %3761 = vmatprep.subr.mxu0 0.0
    %3762 = vmatpush1.msra.mxu0 0.0
    %3763 = vmatprep.subr.mxu0 0.0
    %3764 = vmatpush1.msra.mxu0 0.0
    %3765 = vmatprep.subr.mxu0 0.0
    %3766 = vmatpush1.msra.mxu0 0.0
    %3767 = vmatprep.subr.mxu0 0.0
    %3768 = vmatpush1.msra.mxu0 0.0
    %3769 = vmatprep.mubr.f32.mxu0 0.0
    %v3770 = vand.u32 %v3324, 4294901760
    %3771 = vmatmul.mubr.f32.gmra.mrb[0].mxu0 %v3770
    %v3772 = vpop.f32.mrb[0].mxu0
    %v3773 = vadd.f32 %v3701, %v3772
    %v3774 = vpop.f32.mrb[0].mxu0
    %3775 = vdwg.mxu0
    %v3776 = vxor.u32 %v3773, 2147483648
    %v3777 = vmul.f32 %v3776, 1.442695
    %v3778 = vpow.pop %v3777
    %v3779 = vadd.f32 %v3778, 1.0
    %v3780 = vrcp.pop %v3779
    %v3781 = vmul.f32 1.0, %v3780
    %v3782 = vmul.f32 %v2754, %v3781
    %v3783 = vld [vmem:[%s7] sm:$0xff]
    %v3784 = vld [vmem:[%s7 + $0x8] sm:$0xff]
    %v3785 = vld [vmem:[%s7 + $0x10] sm:$0xff]
    %v3786 = vld [vmem:[%s7 + $0x18] sm:$0xff]
    %v3787 = vld [vmem:[%s7 + $0x20] sm:$0xff]
    %v3788 = vld [vmem:[%s7 + $0x28] sm:$0xff]
    %v3789 = vld [vmem:[%s7 + $0x30] sm:$0xff]
    %v3790 = vld [vmem:[%s7 + $0x38] sm:$0xff]
    %v3791 = vld [vmem:[%s8] sm:$0x1]
    %v3793 = vlaneseq
    %v3794 = vshrl.u32 %v3793, 7
    %v3795 = vsub.s32 0, %v3794
    %v3796 = vrot.slane %v3791, %v3795
    %v3799 = vsel %vm2772, %v3782, 0
    %3801 = vmatprep.subr.mxu0 0.0
    %v3802 = vand.u32 %v3783, 4294901760
    %3803 = vmatpush1.msra.mxu0 %v3802
    %3804 = vmatprep.subr.mxu0 0.0
    %v3805 = vand.u32 %v3784, 4294901760
    %3806 = vmatpush1.msra.mxu0 %v3805
    %3807 = vmatprep.subr.mxu0 0.0
    %v3808 = vand.u32 %v3785, 4294901760
    %3809 = vmatpush1.msra.mxu0 %v3808
    %3810 = vmatprep.subr.mxu0 0.0
    %v3811 = vand.u32 %v3786, 4294901760
    %3812 = vmatpush1.msra.mxu0 %v3811
    %3813 = vmatprep.subr.mxu0 0.0
    %v3814 = vand.u32 %v3787, 4294901760
    %3815 = vmatpush1.msra.mxu0 %v3814
    %3816 = vmatprep.subr.mxu0 0.0
    %v3817 = vand.u32 %v3788, 4294901760
    %3818 = vmatpush1.msra.mxu0 %v3817
    %3819 = vmatprep.subr.mxu0 0.0
    %v3820 = vand.u32 %v3789, 4294901760
    %3821 = vmatpush1.msra.mxu0 %v3820
    %3822 = vmatprep.subr.mxu0 0.0
    %v3823 = vand.u32 %v3790, 4294901760
    %3824 = vmatpush1.msra.mxu0 %v3823
    %3825 = vmatprep.subr.mxu0 0.0
    %3826 = vmatpush1.msra.mxu0 0.0
    %3827 = vmatprep.subr.mxu0 0.0
    %3828 = vmatpush1.msra.mxu0 0.0
    %3829 = vmatprep.subr.mxu0 0.0
    %3830 = vmatpush1.msra.mxu0 0.0
    %3831 = vmatprep.subr.mxu0 0.0
    %3832 = vmatpush1.msra.mxu0 0.0
    %3833 = vmatprep.subr.mxu0 0.0
    %3834 = vmatpush1.msra.mxu0 0.0
    %3835 = vmatprep.subr.mxu0 0.0
    %3836 = vmatpush1.msra.mxu0 0.0
    %3837 = vmatprep.subr.mxu0 0.0
    %3838 = vmatpush1.msra.mxu0 0.0
    %3839 = vmatprep.subr.mxu0 0.0
    %3840 = vmatpush1.msra.mxu0 0.0
    %3841 = vmatprep.subr.mxu0 0.0
    %3842 = vmatpush1.msra.mxu0 0.0
    %3843 = vmatprep.subr.mxu0 0.0
    %3844 = vmatpush1.msra.mxu0 0.0
    %3845 = vmatprep.subr.mxu0 0.0
    %3846 = vmatpush1.msra.mxu0 0.0
    %3847 = vmatprep.subr.mxu0 0.0
    %3848 = vmatpush1.msra.mxu0 0.0
    %3849 = vmatprep.subr.mxu0 0.0
    %3850 = vmatpush1.msra.mxu0 0.0
    %3851 = vmatprep.subr.mxu0 0.0
    %3852 = vmatpush1.msra.mxu0 0.0
    %3853 = vmatprep.subr.mxu0 0.0
    %3854 = vmatpush1.msra.mxu0 0.0
    %3855 = vmatprep.subr.mxu0 0.0
    %3856 = vmatpush1.msra.mxu0 0.0
    %3857 = vmatprep.subr.mxu0 0.0
    %3858 = vmatpush1.msra.mxu0 0.0
    %3859 = vmatprep.subr.mxu0 0.0
    %3860 = vmatpush1.msra.mxu0 0.0
    %3861 = vmatprep.subr.mxu0 0.0
    %3862 = vmatpush1.msra.mxu0 0.0
    %3863 = vmatprep.subr.mxu0 0.0
    %3864 = vmatpush1.msra.mxu0 0.0
    %3865 = vmatprep.subr.mxu0 0.0
    %3866 = vmatpush1.msra.mxu0 0.0
    %3867 = vmatprep.subr.mxu0 0.0
    %3868 = vmatpush1.msra.mxu0 0.0
    %3869 = vmatprep.subr.mxu0 0.0
    %3870 = vmatpush1.msra.mxu0 0.0
    %3871 = vmatprep.subr.mxu0 0.0
    %3872 = vmatpush1.msra.mxu0 0.0
    %3873 = vmatprep.mubr.f32.mxu0 0.0
    %v3874 = vand.u32 %v3799, 4294901760
    %v3875 = vsub.f32 %v3799, %v3874
    %v3876 = vand.u32 %v3875, 4294901760
    %v3877 = vsub.f32 %v3875, %v3876
    %v3878 = vand.u32 %v3877, 4294901760
    %3879 = vmatmul.mubr.f32.gmra.mrb[0].mxu0 %v3878
    %v3880 = vpop.f32.mrb[0].mxu0
    %v3881 = vadd.f32 %v3796, %v3880
    %v3882 = vpop.f32.mrb[0].mxu0
    %3883 = vdwg.mxu0
    %3884 = vmatprep.subr.mxu0 0.0
    %v3885 = vand.u32 %v3783, 4294901760
    %v3886 = vsub.f32 %v3783, %v3885
    %v3887 = vand.u32 %v3886, 4294901760
    %v3888 = vsub.f32 %v3886, %v3887
    %v3889 = vand.u32 %v3888, 4294901760
    %3890 = vmatpush1.msra.mxu0 %v3889
    %3891 = vmatprep.subr.mxu0 0.0
    %v3892 = vand.u32 %v3784, 4294901760
    %v3893 = vsub.f32 %v3784, %v3892
    %v3894 = vand.u32 %v3893, 4294901760
    %v3895 = vsub.f32 %v3893, %v3894
    %v3896 = vand.u32 %v3895, 4294901760
    %3897 = vmatpush1.msra.mxu0 %v3896
    %3898 = vmatprep.subr.mxu0 0.0
    %v3899 = vand.u32 %v3785, 4294901760
    %v3900 = vsub.f32 %v3785, %v3899
    %v3901 = vand.u32 %v3900, 4294901760
    %v3902 = vsub.f32 %v3900, %v3901
    %v3903 = vand.u32 %v3902, 4294901760
    %3904 = vmatpush1.msra.mxu0 %v3903
    %3905 = vmatprep.subr.mxu0 0.0
    %v3906 = vand.u32 %v3786, 4294901760
    %v3907 = vsub.f32 %v3786, %v3906
    %v3908 = vand.u32 %v3907, 4294901760
    %v3909 = vsub.f32 %v3907, %v3908
    %v3910 = vand.u32 %v3909, 4294901760
    %3911 = vmatpush1.msra.mxu0 %v3910
    %3912 = vmatprep.subr.mxu0 0.0
    %v3913 = vand.u32 %v3787, 4294901760
    %v3914 = vsub.f32 %v3787, %v3913
    %v3915 = vand.u32 %v3914, 4294901760
    %v3916 = vsub.f32 %v3914, %v3915
    %v3917 = vand.u32 %v3916, 4294901760
    %3918 = vmatpush1.msra.mxu0 %v3917
    %3919 = vmatprep.subr.mxu0 0.0
    %v3920 = vand.u32 %v3788, 4294901760
    %v3921 = vsub.f32 %v3788, %v3920
    %v3922 = vand.u32 %v3921, 4294901760
    %v3923 = vsub.f32 %v3921, %v3922
    %v3924 = vand.u32 %v3923, 4294901760
    %3925 = vmatpush1.msra.mxu0 %v3924
    %3926 = vmatprep.subr.mxu0 0.0
    %v3927 = vand.u32 %v3789, 4294901760
    %v3928 = vsub.f32 %v3789, %v3927
    %v3929 = vand.u32 %v3928, 4294901760
    %v3930 = vsub.f32 %v3928, %v3929
    %v3931 = vand.u32 %v3930, 4294901760
    %3932 = vmatpush1.msra.mxu0 %v3931
    %3933 = vmatprep.subr.mxu0 0.0
    %v3934 = vand.u32 %v3790, 4294901760
    %v3935 = vsub.f32 %v3790, %v3934
    %v3936 = vand.u32 %v3935, 4294901760
    %v3937 = vsub.f32 %v3935, %v3936
    %v3938 = vand.u32 %v3937, 4294901760
    %3939 = vmatpush1.msra.mxu0 %v3938
    %3940 = vmatprep.subr.mxu0 0.0
    %3941 = vmatpush1.msra.mxu0 0.0
    %3942 = vmatprep.subr.mxu0 0.0
    %3943 = vmatpush1.msra.mxu0 0.0
    %3944 = vmatprep.subr.mxu0 0.0
    %3945 = vmatpush1.msra.mxu0 0.0
    %3946 = vmatprep.subr.mxu0 0.0
    %3947 = vmatpush1.msra.mxu0 0.0
    %3948 = vmatprep.subr.mxu0 0.0
    %3949 = vmatpush1.msra.mxu0 0.0
    %3950 = vmatprep.subr.mxu0 0.0
    %3951 = vmatpush1.msra.mxu0 0.0
    %3952 = vmatprep.subr.mxu0 0.0
    %3953 = vmatpush1.msra.mxu0 0.0
    %3954 = vmatprep.subr.mxu0 0.0
    %3955 = vmatpush1.msra.mxu0 0.0
    %3956 = vmatprep.subr.mxu0 0.0
    %3957 = vmatpush1.msra.mxu0 0.0
    %3958 = vmatprep.subr.mxu0 0.0
    %3959 = vmatpush1.msra.mxu0 0.0
    %3960 = vmatprep.subr.mxu0 0.0
    %3961 = vmatpush1.msra.mxu0 0.0
    %3962 = vmatprep.subr.mxu0 0.0
    %3963 = vmatpush1.msra.mxu0 0.0
    %3964 = vmatprep.subr.mxu0 0.0
    %3965 = vmatpush1.msra.mxu0 0.0
    %3966 = vmatprep.subr.mxu0 0.0
    %3967 = vmatpush1.msra.mxu0 0.0
    %3968 = vmatprep.subr.mxu0 0.0
    %3969 = vmatpush1.msra.mxu0 0.0
    %3970 = vmatprep.subr.mxu0 0.0
    %3971 = vmatpush1.msra.mxu0 0.0
    %3972 = vmatprep.subr.mxu0 0.0
    %3973 = vmatpush1.msra.mxu0 0.0
    %3974 = vmatprep.subr.mxu0 0.0
    %3975 = vmatpush1.msra.mxu0 0.0
    %3976 = vmatprep.subr.mxu0 0.0
    %3977 = vmatpush1.msra.mxu0 0.0
    %3978 = vmatprep.subr.mxu0 0.0
    %3979 = vmatpush1.msra.mxu0 0.0
    %3980 = vmatprep.subr.mxu0 0.0
    %3981 = vmatpush1.msra.mxu0 0.0
    %3982 = vmatprep.subr.mxu0 0.0
    %3983 = vmatpush1.msra.mxu0 0.0
    %3984 = vmatprep.subr.mxu0 0.0
    %3985 = vmatpush1.msra.mxu0 0.0
    %3986 = vmatprep.subr.mxu0 0.0
    %3987 = vmatpush1.msra.mxu0 0.0
    %3988 = vmatprep.mubr.f32.mxu0 0.0
    %v3989 = vand.u32 %v3799, 4294901760
    %3990 = vmatmul.mubr.f32.gmra.mrb[0].mxu0 %v3989
    %v3991 = vpop.f32.mrb[0].mxu0
    %v3992 = vadd.f32 %v3881, %v3991
    %v3993 = vpop.f32.mrb[0].mxu0
    %3994 = vdwg.mxu0
    %3995 = vmatprep.subr.mxu0 0.0
    %v3996 = vand.u32 %v3783, 4294901760
    %v3997 = vsub.f32 %v3783, %v3996
    %3998 = vmatpush1.msra.mxu0 %v3997
    %3999 = vmatprep.subr.mxu0 0.0
    %v4000 = vand.u32 %v3784, 4294901760
    %v4001 = vsub.f32 %v3784, %v4000
    %4002 = vmatpush1.msra.mxu0 %v4001
    %4003 = vmatprep.subr.mxu0 0.0
    %v4004 = vand.u32 %v3785, 4294901760
    %v4005 = vsub.f32 %v3785, %v4004
    %4006 = vmatpush1.msra.mxu0 %v4005
    %4007 = vmatprep.subr.mxu0 0.0
    %v4008 = vand.u32 %v3786, 4294901760
    %v4009 = vsub.f32 %v3786, %v4008
    %4010 = vmatpush1.msra.mxu0 %v4009
    %4011 = vmatprep.subr.mxu0 0.0
    %v4012 = vand.u32 %v3787, 4294901760
    %v4013 = vsub.f32 %v3787, %v4012
    %4014 = vmatpush1.msra.mxu0 %v4013
    %4015 = vmatprep.subr.mxu0 0.0
    %v4016 = vand.u32 %v3788, 4294901760
    %v4017 = vsub.f32 %v3788, %v4016
    %4018 = vmatpush1.msra.mxu0 %v4017
    %4019 = vmatprep.subr.mxu0 0.0
    %v4020 = vand.u32 %v3789, 4294901760
    %v4021 = vsub.f32 %v3789, %v4020
    %4022 = vmatpush1.msra.mxu0 %v4021
    %4023 = vmatprep.subr.mxu0 0.0
    %v4024 = vand.u32 %v3790, 4294901760
    %v4025 = vsub.f32 %v3790, %v4024
    %4026 = vmatpush1.msra.mxu0 %v4025
    %4027 = vmatprep.subr.mxu0 0.0
    %4028 = vmatpush1.msra.mxu0 0.0
    %4029 = vmatprep.subr.mxu0 0.0
    %4030 = vmatpush1.msra.mxu0 0.0
    %4031 = vmatprep.subr.mxu0 0.0
    %4032 = vmatpush1.msra.mxu0 0.0
    %4033 = vmatprep.subr.mxu0 0.0
    %4034 = vmatpush1.msra.mxu0 0.0
    %4035 = vmatprep.subr.mxu0 0.0
    %4036 = vmatpush1.msra.mxu0 0.0
    %4037 = vmatprep.subr.mxu0 0.0
    %4038 = vmatpush1.msra.mxu0 0.0
    %4039 = vmatprep.subr.mxu0 0.0
    %4040 = vmatpush1.msra.mxu0 0.0
    %4041 = vmatprep.subr.mxu0 0.0
    %4042 = vmatpush1.msra.mxu0 0.0
    %4043 = vmatprep.subr.mxu0 0.0
    %4044 = vmatpush1.msra.mxu0 0.0
    %4045 = vmatprep.subr.mxu0 0.0
    %4046 = vmatpush1.msra.mxu0 0.0
    %4047 = vmatprep.subr.mxu0 0.0
    %4048 = vmatpush1.msra.mxu0 0.0
    %4049 = vmatprep.subr.mxu0 0.0
    %4050 = vmatpush1.msra.mxu0 0.0
    %4051 = vmatprep.subr.mxu0 0.0
    %4052 = vmatpush1.msra.mxu0 0.0
    %4053 = vmatprep.subr.mxu0 0.0
    %4054 = vmatpush1.msra.mxu0 0.0
    %4055 = vmatprep.subr.mxu0 0.0
    %4056 = vmatpush1.msra.mxu0 0.0
    %4057 = vmatprep.subr.mxu0 0.0
    %4058 = vmatpush1.msra.mxu0 0.0
    %4059 = vmatprep.subr.mxu0 0.0
    %4060 = vmatpush1.msra.mxu0 0.0
    %4061 = vmatprep.subr.mxu0 0.0
    %4062 = vmatpush1.msra.mxu0 0.0
    %4063 = vmatprep.subr.mxu0 0.0
    %4064 = vmatpush1.msra.mxu0 0.0
    %4065 = vmatprep.subr.mxu0 0.0
    %4066 = vmatpush1.msra.mxu0 0.0
    %4067 = vmatprep.subr.mxu0 0.0
    %4068 = vmatpush1.msra.mxu0 0.0
    %4069 = vmatprep.subr.mxu0 0.0
    %4070 = vmatpush1.msra.mxu0 0.0
    %4071 = vmatprep.subr.mxu0 0.0
    %4072 = vmatpush1.msra.mxu0 0.0
    %4073 = vmatprep.subr.mxu0 0.0
    %4074 = vmatpush1.msra.mxu0 0.0
    %4075 = vmatprep.mubr.f32.mxu0 0.0
    %v4076 = vand.u32 %v3799, 4294901760
    %v4077 = vsub.f32 %v3799, %v4076
    %4078 = vmatmul.mubr.f32.gmra.mrb[0].mxu0 %v4077
    %v4079 = vpop.f32.mrb[0].mxu0
    %v4080 = vadd.f32 %v3992, %v4079
    %v4081 = vpop.f32.mrb[0].mxu0
    %4082 = vdwg.mxu0
    %4083 = vmatprep.subr.mxu0 0.0
    %v4084 = vand.u32 %v3783, 4294901760
    %4085 = vmatpush1.msra.mxu0 %v4084
    %4086 = vmatprep.subr.mxu0 0.0
    %v4087 = vand.u32 %v3784, 4294901760
    %4088 = vmatpush1.msra.mxu0 %v4087
    %4089 = vmatprep.subr.mxu0 0.0
    %v4090 = vand.u32 %v3785, 4294901760
    %4091 = vmatpush1.msra.mxu0 %v4090
    %4092 = vmatprep.subr.mxu0 0.0
    %v4093 = vand.u32 %v3786, 4294901760
    %4094 = vmatpush1.msra.mxu0 %v4093
    %4095 = vmatprep.subr.mxu0 0.0
    %v4096 = vand.u32 %v3787, 4294901760
    %4097 = vmatpush1.msra.mxu0 %v4096
    %4098 = vmatprep.subr.mxu0 0.0
    %v4099 = vand.u32 %v3788, 4294901760
    %4100 = vmatpush1.msra.mxu0 %v4099
    %4101 = vmatprep.subr.mxu0 0.0
    %v4102 = vand.u32 %v3789, 4294901760
    %4103 = vmatpush1.msra.mxu0 %v4102
    %4104 = vmatprep.subr.mxu0 0.0
    %v4105 = vand.u32 %v3790, 4294901760
    %4106 = vmatpush1.msra.mxu0 %v4105
    %4107 = vmatprep.subr.mxu0 0.0
    %4108 = vmatpush1.msra.mxu0 0.0
    %4109 = vmatprep.subr.mxu0 0.0
    %4110 = vmatpush1.msra.mxu0 0.0
    %4111 = vmatprep.subr.mxu0 0.0
    %4112 = vmatpush1.msra.mxu0 0.0
    %4113 = vmatprep.subr.mxu0 0.0
    %4114 = vmatpush1.msra.mxu0 0.0
    %4115 = vmatprep.subr.mxu0 0.0
    %4116 = vmatpush1.msra.mxu0 0.0
    %4117 = vmatprep.subr.mxu0 0.0
    %4118 = vmatpush1.msra.mxu0 0.0
    %4119 = vmatprep.subr.mxu0 0.0
    %4120 = vmatpush1.msra.mxu0 0.0
    %4121 = vmatprep.subr.mxu0 0.0
    %4122 = vmatpush1.msra.mxu0 0.0
    %4123 = vmatprep.subr.mxu0 0.0
    %4124 = vmatpush1.msra.mxu0 0.0
    %4125 = vmatprep.subr.mxu0 0.0
    %4126 = vmatpush1.msra.mxu0 0.0
    %4127 = vmatprep.subr.mxu0 0.0
    %4128 = vmatpush1.msra.mxu0 0.0
    %4129 = vmatprep.subr.mxu0 0.0
    %4130 = vmatpush1.msra.mxu0 0.0
    %4131 = vmatprep.subr.mxu0 0.0
    %4132 = vmatpush1.msra.mxu0 0.0
    %4133 = vmatprep.subr.mxu0 0.0
    %4134 = vmatpush1.msra.mxu0 0.0
    %4135 = vmatprep.subr.mxu0 0.0
    %4136 = vmatpush1.msra.mxu0 0.0
    %4137 = vmatprep.subr.mxu0 0.0
    %4138 = vmatpush1.msra.mxu0 0.0
    %4139 = vmatprep.subr.mxu0 0.0
    %4140 = vmatpush1.msra.mxu0 0.0
    %4141 = vmatprep.subr.mxu0 0.0
    %4142 = vmatpush1.msra.mxu0 0.0
    %4143 = vmatprep.subr.mxu0 0.0
    %4144 = vmatpush1.msra.mxu0 0.0
    %4145 = vmatprep.subr.mxu0 0.0
    %4146 = vmatpush1.msra.mxu0 0.0
    %4147 = vmatprep.subr.mxu0 0.0
    %4148 = vmatpush1.msra.mxu0 0.0
    %4149 = vmatprep.subr.mxu0 0.0
    %4150 = vmatpush1.msra.mxu0 0.0
    %4151 = vmatprep.subr.mxu0 0.0
    %4152 = vmatpush1.msra.mxu0 0.0
    %4153 = vmatprep.subr.mxu0 0.0
    %4154 = vmatpush1.msra.mxu0 0.0
    %4155 = vmatprep.mubr.f32.mxu0 0.0
    %v4156 = vand.u32 %v3799, 4294901760
    %v4157 = vsub.f32 %v3799, %v4156
    %v4158 = vand.u32 %v4157, 4294901760
    %4159 = vmatmul.mubr.f32.gmra.mrb[0].mxu0 %v4158
    %v4160 = vpop.f32.mrb[0].mxu0
    %v4161 = vadd.f32 %v4080, %v4160
    %v4162 = vpop.f32.mrb[0].mxu0
    %4163 = vdwg.mxu0
    %4164 = vmatprep.subr.mxu0 0.0
    %v4165 = vand.u32 %v3783, 4294901760
    %v4166 = vsub.f32 %v3783, %v4165
    %v4167 = vand.u32 %v4166, 4294901760
    %4168 = vmatpush1.msra.mxu0 %v4167
    %4169 = vmatprep.subr.mxu0 0.0
    %v4170 = vand.u32 %v3784, 4294901760
    %v4171 = vsub.f32 %v3784, %v4170
    %v4172 = vand.u32 %v4171, 4294901760
    %4173 = vmatpush1.msra.mxu0 %v4172
    %4174 = vmatprep.subr.mxu0 0.0
    %v4175 = vand.u32 %v3785, 4294901760
    %v4176 = vsub.f32 %v3785, %v4175
    %v4177 = vand.u32 %v4176, 4294901760
    %4178 = vmatpush1.msra.mxu0 %v4177
    %4179 = vmatprep.subr.mxu0 0.0
    %v4180 = vand.u32 %v3786, 4294901760
    %v4181 = vsub.f32 %v3786, %v4180
    %v4182 = vand.u32 %v4181, 4294901760
    %4183 = vmatpush1.msra.mxu0 %v4182
    %4184 = vmatprep.subr.mxu0 0.0
    %v4185 = vand.u32 %v3787, 4294901760
    %v4186 = vsub.f32 %v3787, %v4185
    %v4187 = vand.u32 %v4186, 4294901760
    %4188 = vmatpush1.msra.mxu0 %v4187
    %4189 = vmatprep.subr.mxu0 0.0
    %v4190 = vand.u32 %v3788, 4294901760
    %v4191 = vsub.f32 %v3788, %v4190
    %v4192 = vand.u32 %v4191, 4294901760
    %4193 = vmatpush1.msra.mxu0 %v4192
    %4194 = vmatprep.subr.mxu0 0.0
    %v4195 = vand.u32 %v3789, 4294901760
    %v4196 = vsub.f32 %v3789, %v4195
    %v4197 = vand.u32 %v4196, 4294901760
    %4198 = vmatpush1.msra.mxu0 %v4197
    %4199 = vmatprep.subr.mxu0 0.0
    %v4200 = vand.u32 %v3790, 4294901760
    %v4201 = vsub.f32 %v3790, %v4200
    %v4202 = vand.u32 %v4201, 4294901760
    %4203 = vmatpush1.msra.mxu0 %v4202
    %4204 = vmatprep.subr.mxu0 0.0
    %4205 = vmatpush1.msra.mxu0 0.0
    %4206 = vmatprep.subr.mxu0 0.0
    %4207 = vmatpush1.msra.mxu0 0.0
    %4208 = vmatprep.subr.mxu0 0.0
    %4209 = vmatpush1.msra.mxu0 0.0
    %4210 = vmatprep.subr.mxu0 0.0
    %4211 = vmatpush1.msra.mxu0 0.0
    %4212 = vmatprep.subr.mxu0 0.0
    %4213 = vmatpush1.msra.mxu0 0.0
    %4214 = vmatprep.subr.mxu0 0.0
    %4215 = vmatpush1.msra.mxu0 0.0
    %4216 = vmatprep.subr.mxu0 0.0
    %4217 = vmatpush1.msra.mxu0 0.0
    %4218 = vmatprep.subr.mxu0 0.0
    %4219 = vmatpush1.msra.mxu0 0.0
    %4220 = vmatprep.subr.mxu0 0.0
    %4221 = vmatpush1.msra.mxu0 0.0
    %4222 = vmatprep.subr.mxu0 0.0
    %4223 = vmatpush1.msra.mxu0 0.0
    %4224 = vmatprep.subr.mxu0 0.0
    %4225 = vmatpush1.msra.mxu0 0.0
    %4226 = vmatprep.subr.mxu0 0.0
    %4227 = vmatpush1.msra.mxu0 0.0
    %4228 = vmatprep.subr.mxu0 0.0
    %4229 = vmatpush1.msra.mxu0 0.0
    %4230 = vmatprep.subr.mxu0 0.0
    %4231 = vmatpush1.msra.mxu0 0.0
    %4232 = vmatprep.subr.mxu0 0.0
    %4233 = vmatpush1.msra.mxu0 0.0
    %4234 = vmatprep.subr.mxu0 0.0
    %4235 = vmatpush1.msra.mxu0 0.0
    %4236 = vmatprep.subr.mxu0 0.0
    %4237 = vmatpush1.msra.mxu0 0.0
    %4238 = vmatprep.subr.mxu0 0.0
    %4239 = vmatpush1.msra.mxu0 0.0
    %4240 = vmatprep.subr.mxu0 0.0
    %4241 = vmatpush1.msra.mxu0 0.0
    %4242 = vmatprep.subr.mxu0 0.0
    %4243 = vmatpush1.msra.mxu0 0.0
    %4244 = vmatprep.subr.mxu0 0.0
    %4245 = vmatpush1.msra.mxu0 0.0
    %4246 = vmatprep.subr.mxu0 0.0
    %4247 = vmatpush1.msra.mxu0 0.0
    %4248 = vmatprep.subr.mxu0 0.0
    %4249 = vmatpush1.msra.mxu0 0.0
    %4250 = vmatprep.subr.mxu0 0.0
    %4251 = vmatpush1.msra.mxu0 0.0
    %4252 = vmatprep.mubr.f32.mxu0 0.0
    %v4253 = vand.u32 %v3799, 4294901760
    %4254 = vmatmul.mubr.f32.gmra.mrb[0].mxu0 %v4253
    %v4255 = vpop.f32.mrb[0].mxu0
    %v4256 = vadd.f32 %v4161, %v4255
    %v4257 = vpop.f32.mrb[0].mxu0
    %4258 = vdwg.mxu0
    %4259 = vmatprep.subr.mxu0 0.0
    %v4260 = vand.u32 %v3783, 4294901760
    %4261 = vmatpush1.msra.mxu0 %v4260
    %4262 = vmatprep.subr.mxu0 0.0
    %v4263 = vand.u32 %v3784, 4294901760
    %4264 = vmatpush1.msra.mxu0 %v4263
    %4265 = vmatprep.subr.mxu0 0.0
    %v4266 = vand.u32 %v3785, 4294901760
    %4267 = vmatpush1.msra.mxu0 %v4266
    %4268 = vmatprep.subr.mxu0 0.0
    %v4269 = vand.u32 %v3786, 4294901760
    %4270 = vmatpush1.msra.mxu0 %v4269
    %4271 = vmatprep.subr.mxu0 0.0
    %v4272 = vand.u32 %v3787, 4294901760
    %4273 = vmatpush1.msra.mxu0 %v4272
    %4274 = vmatprep.subr.mxu0 0.0
    %v4275 = vand.u32 %v3788, 4294901760
    %4276 = vmatpush1.msra.mxu0 %v4275
    %4277 = vmatprep.subr.mxu0 0.0
    %v4278 = vand.u32 %v3789, 4294901760
    %4279 = vmatpush1.msra.mxu0 %v4278
    %4280 = vmatprep.subr.mxu0 0.0
    %v4281 = vand.u32 %v3790, 4294901760
    %4282 = vmatpush1.msra.mxu0 %v4281
    %4283 = vmatprep.subr.mxu0 0.0
    %4284 = vmatpush1.msra.mxu0 0.0
    %4285 = vmatprep.subr.mxu0 0.0
    %4286 = vmatpush1.msra.mxu0 0.0
    %4287 = vmatprep.subr.mxu0 0.0
    %4288 = vmatpush1.msra.mxu0 0.0
    %4289 = vmatprep.subr.mxu0 0.0
    %4290 = vmatpush1.msra.mxu0 0.0
    %4291 = vmatprep.subr.mxu0 0.0
    %4292 = vmatpush1.msra.mxu0 0.0
    %4293 = vmatprep.subr.mxu0 0.0
    %4294 = vmatpush1.msra.mxu0 0.0
    %4295 = vmatprep.subr.mxu0 0.0
    %4296 = vmatpush1.msra.mxu0 0.0
    %4297 = vmatprep.subr.mxu0 0.0
    %4298 = vmatpush1.msra.mxu0 0.0
    %4299 = vmatprep.subr.mxu0 0.0
    %4300 = vmatpush1.msra.mxu0 0.0
    %4301 = vmatprep.subr.mxu0 0.0
    %4302 = vmatpush1.msra.mxu0 0.0
    %4303 = vmatprep.subr.mxu0 0.0
    %4304 = vmatpush1.msra.mxu0 0.0
    %4305 = vmatprep.subr.mxu0 0.0
    %4306 = vmatpush1.msra.mxu0 0.0
    %4307 = vmatprep.subr.mxu0 0.0
    %4308 = vmatpush1.msra.mxu0 0.0
    %4309 = vmatprep.subr.mxu0 0.0
    %4310 = vmatpush1.msra.mxu0 0.0
    %4311 = vmatprep.subr.mxu0 0.0
    %4312 = vmatpush1.msra.mxu0 0.0
    %4313 = vmatprep.subr.mxu0 0.0
    %4314 = vmatpush1.msra.mxu0 0.0
    %4315 = vmatprep.subr.mxu0 0.0
    %4316 = vmatpush1.msra.mxu0 0.0
    %4317 = vmatprep.subr.mxu0 0.0
    %4318 = vmatpush1.msra.mxu0 0.0
    %4319 = vmatprep.subr.mxu0 0.0
    %4320 = vmatpush1.msra.mxu0 0.0
    %4321 = vmatprep.subr.mxu0 0.0
    %4322 = vmatpush1.msra.mxu0 0.0
    %4323 = vmatprep.subr.mxu0 0.0
    %4324 = vmatpush1.msra.mxu0 0.0
    %4325 = vmatprep.subr.mxu0 0.0
    %4326 = vmatpush1.msra.mxu0 0.0
    %4327 = vmatprep.subr.mxu0 0.0
    %4328 = vmatpush1.msra.mxu0 0.0
    %4329 = vmatprep.subr.mxu0 0.0
    %4330 = vmatpush1.msra.mxu0 0.0
    %4331 = vmatprep.mubr.f32.mxu0 0.0
    %v4332 = vand.u32 %v3799, 4294901760
    %4333 = vmatmul.mubr.f32.gmra.mrb[0].mxu0 %v4332
    %v4334 = vpop.f32.mrb[0].mxu0
    %v4335 = vadd.f32 %v4256, %v4334
    %v4336 = vpop.f32.mrb[0].mxu0
    %4337 = vdwg.mxu0
    %4338 = vst [vmem:[#allocation2] sm:$0x3] %v4335
    // Predicated region
    $region38: #{tpu_custom_call.1} parent=1 // pred_check
      _
    $region39: #{tpu_custom_call.1} parent=1 // pred_check_branch
      %4340 = sbr.rel (0) target = $region41
    $region40: #{tpu_custom_call.1} parent=1 // pred_region
      %s4342 = ssub.s32 32, 32
      %4343 = vsyncadd [#allocation3], %s4342
      %s4345 = sshll.u32 [#allocation2], 4
      %s4346 = int_to_ptr.vmem [resolvable:$true] %s4345
      %4348 = dma.vmem_to_hbm [thread:$0]  %s4346, 32, %s9, [#allocation3]
    $region41: #{tpu_custom_call.1} parent=1 // pred_fallthru
      _
    // Predicated region
    $region42: #{tpu_custom_call.1} parent=1 // pred_check
      _
    $region43: #{tpu_custom_call.1} parent=1 // pred_check_branch
      %4350 = sbr.rel (0) target = $region45
    $region44: #{tpu_custom_call.1} parent=1 // pred_region
      %4351 = dma.done [#allocation3], 32
    $region45: #{tpu_custom_call.1} parent=1 // pred_fallthru
      _
    %4352 = vsyncpa [#allocation3], 1

</llo_original>
